<compile_context>
chip_gen: v5e
topology: v5e:2x2
jax: 0.10.0
libtpu: 0.0.40
codegen_flags: <defaults>
</compile_context>

<pallas_src>
import jax
import jax.numpy as jnp
from jax.experimental import pallas as pl
from jax.experimental.pallas import tpu as pltpu


_W_IMG = 16                     # image width = row stride of the flat layout
_H_IMG = 16                     # image height
_H_PAD = 18                     # bottom zero-pad so all taps are in-bounds slices
_CIN_PAD = 8                    # first-layer Cin zero-padded 1 -> 8 (math-neutral)
_COUT_PAD = 128                 # last-layer Cout zero-padded 64 -> 128 (lane-dense)
_OUT_HW = 8                     # spatial size after four VALID 3x3 convs (16 - 4*2)
_SLAB = _H_PAD * _W_IMG         # 288 flat rows per image (fixed for every layer)
_ROWS_OUT = _OUT_HW * _W_IMG    # 128 flat rows stored per image (h < 8, all w)
_SHRINK = 40                    # computed rows lost per layer (>= max shift 34, mult of 8)
_MAX_IMGS_PER_STEP = 8          # VMEM cap for the per-step transients
_VMEM_LIMIT = 32 * 1024 * 1024  # safe on v5e/v6e (128 MiB) and v7x (64 MiB physical)


def _conv3x3_relu(a, w2d, b2d, m_out):
    """One VALID 3x3 conv + bias + ReLU on flat batched activations.

    a:    (m_in, cin)   rows = img*288 + h*16 + w, with m_in >= m_out + 34
    w2d:  (9*cin, cout) weight rows ordered (kw, kh, cin)
    b2d:  (1, cout)
    Returns (m_out, cout).  Rows whose (h, w) fall outside the layer's valid
    region (or bleed across an image slab) are garbage but finite; valid rows
    never read them.
    """
    taps = []
    for kw in range(3):
        # One sublane slice per kw (only kw = 1, 2 are misaligned); the three
        # kh taps are then 8-sublane-aligned sub-slices of it.
        col = a[kw:kw + m_out + 2 * _W_IMG, :]
        for kh in range(3):
            taps.append(col[kh * _W_IMG:kh * _W_IMG + m_out, :])
    lhs = jnp.concatenate(taps, axis=-1)                  # im2col (m_out, 9*cin)
    y = jnp.dot(lhs, w2d, preferred_element_type=jnp.float32)
    return jnp.maximum(y + b2d, 0.0)


def _encoder_kernel(x_ref, w1, b1, w2, b2, w3, b3, w4, b4, o_ref):
    n_img = x_ref.shape[0]                                # images in this grid step
    m0 = n_img * _SLAB
    # (B, 288, 8) -> (B*288, 8): layout-preserving merge of leading dims.
    a = x_ref[...].reshape(m0, _CIN_PAD)
    a = _conv3x3_relu(a, w1[...], b1[...], m0 - 1 * _SHRINK)   # (., 32)
    a = _conv3x3_relu(a, w2[...], b2[...], m0 - 2 * _SHRINK)   # (., 32)
    a = _conv3x3_relu(a, w3[...], b3[...], m0 - 3 * _SHRINK)   # (., 64)
    a = _conv3x3_relu(a, w4[...], b4[...], m0 - 4 * _SHRINK)   # (., 128)
    # Per image, flat rows [0, 128) cover h < 8 (all w).  Store the full
    # lane-dense slab; the wrapper crops w < 8 and cout < 64.
    for i in range(n_img):
        o_ref[i] = a[i * _SLAB:i * _SLAB + _ROWS_OUT, :].astype(o_ref.dtype)


def _prep_params(params):
    """HWIO conv params -> ((9*Cin, Cout) matmul weights, (1, Cout) biases).

    Weight rows are permuted to (kw, kh, cin) to match the kernel's tap order.
    """
    packed = []
    n_layers = len(params)
    for li, (w, b) in enumerate(params):
        kh, kw, cin, cout = w.shape
        if li == 0 and cin < _CIN_PAD:                    # zero-pad Cin 1 -> 8
            w = jnp.pad(w, ((0, 0), (0, 0), (0, _CIN_PAD - cin), (0, 0)))
            cin = _CIN_PAD
        w2d = jnp.transpose(w, (1, 0, 2, 3)).reshape(kh * kw * cin, cout)
        b2d = b.reshape(1, cout)
        if li == n_layers - 1 and cout < _COUT_PAD:       # zero-pad Cout 64 -> 128
            w2d = jnp.pad(w2d, ((0, 0), (0, _COUT_PAD - cout)))
            b2d = jnp.pad(b2d, ((0, 0), (0, _COUT_PAD - cout)))
        packed.append((w2d, b2d))
    return packed


def _full_spec(arr):
    nd = arr.ndim
    return pl.BlockSpec(arr.shape, lambda g, _nd=nd: (0,) * _nd)


def _imgs_per_step(n):
    """Images per grid step: cap for VMEM, keep >= 2 steps for v7x's 2 TCs."""
    b = min(_MAX_IMGS_PER_STEP, n)
    if n >= 2:
        b = min(b, -(-n // 2))
    return max(b, 1)


@jax.jit
def encoder_forward(x_nchw, params):
    """x_nchw: (N, 1, 16, 16) f32 -> (N, 64, 8, 8), matching the PyTorch module."""
    N, C, H, W = x_nchw.shape
    assert C == 1 and H == _H_IMG and W == _W_IMG, (N, C, H, W)
    cout_final = params[-1][1].shape[0]

    B = _imgs_per_step(N)
    n_steps = -(-N // B)
    n_pad = n_steps * B

    x = jnp.transpose(x_nchw, (0, 2, 3, 1))               # NCHW -> NHWC
    x = jnp.pad(x, ((0, n_pad - N), (0, _H_PAD - H), (0, 0), (0, _CIN_PAD - C)))
    x = x.reshape(n_pad, _SLAB, _CIN_PAD)                 # flat rows per image
    (w1, b1), (w2, b2), (w3, b3), (w4, b4) = _prep_params(params)

    out = pl.pallas_call(
        _encoder_kernel,
        out_shape=jax.ShapeDtypeStruct((n_pad, _ROWS_OUT, _COUT_PAD), jnp.float32),
        grid=(n_steps,),
        in_specs=[
            pl.BlockSpec((B, _SLAB, _CIN_PAD), lambda g: (g, 0, 0)),
            _full_spec(w1), _full_spec(b1),
            _full_spec(w2), _full_spec(b2),
            _full_spec(w3), _full_spec(b3),
            _full_spec(w4), _full_spec(b4),
        ],
        out_specs=pl.BlockSpec((B, _ROWS_OUT, _COUT_PAD), lambda g: (g, 0, 0)),
        compiler_params=pltpu.CompilerParams(
            dimension_semantics=("parallel",),
            vmem_limit_bytes=_VMEM_LIMIT),
    )(x, w1, b1, w2, b2, w3, b3, w4, b4)

    out = out.reshape(n_pad, _OUT_HW, _W_IMG, _COUT_PAD)  # rows -> (h, w)
    out = out[:N, :, :_OUT_HW, :cout_final]               # crop batch/w/cout padding
    return jnp.transpose(out, (0, 3, 1, 2))               # NHWC -> NCHW


def init_encoder_params(key):
    """Deterministic params for 3x3 convs: (1->32, 32->32, 32->64, 64->64)."""
    shapes = [(1, 32), (32, 32), (32, 64), (64, 64)]
    params = []
    for cin, cout in shapes:
        key, kw, kb = jax.random.split(key, 3)
        fan_in = cin * 3 * 3
        bound = 1.0 / float(jnp.sqrt(fan_in))
        w = jax.random.uniform(kw, (3, 3, cin, cout), jnp.float32, -bound, bound)
        b = jax.random.uniform(kb, (cout,), jnp.float32, -bound, bound)
        params.append((w, b))
    return params


def encoder_reference(x_nchw, params):
    """Pure-JAX reference (matches PyTorch Conv2d + relu semantics)."""
    x = jnp.transpose(x_nchw, (0, 2, 3, 1))
    for w, b in params:
        x = jax.lax.conv_general_dilated(
            x, w, window_strides=(1, 1), padding="VALID",
            dimension_numbers=("NHWC", "HWIO", "NHWC"))
        x = jax.nn.relu(x + b)
    return jnp.transpose(x, (0, 3, 1, 2))


if __name__ == "__main__":
    key = jax.random.PRNGKey(0)
    kx, kp = jax.random.split(key)
    params = init_encoder_params(kp)

    # Small batch: 2 grid steps of 1 image each (keeps both v7x TCs busy).
    x_small = jax.random.normal(kx, (2, 1, 16, 16), jnp.float32)   # NCHW like PyTorch
    out_small = jax.block_until_ready(encoder_forward(x_small, params))
    assert out_small.shape == (2, 64, 8, 8), out_small.shape
    ref_small = encoder_reference(x_small, params)
    err_small = float(jnp.max(jnp.abs(out_small - ref_small)))
    assert jnp.allclose(out_small, ref_small, rtol=1e-4, atol=1e-4), err_small

    # Larger batch exercises the batched path (8 images folded per grid step).
    x_big = jax.random.normal(kx, (16, 1, 16, 16), jnp.float32)
    out_big = jax.block_until_ready(encoder_forward(x_big, params))
    assert out_big.shape == (16, 64, 8, 8), out_big.shape
    ref_big = encoder_reference(x_big, params)
    err_big = float(jnp.max(jnp.abs(out_big - ref_big)))
    assert jnp.allclose(out_big, ref_big, rtol=1e-4, atol=1e-4), err_big

    print("KERNEL_OK")
</pallas_src>

<mosaic_0001>
module attributes {stable_mosaic.version = 11 : i64} {
  func.func @_encoder_kernel(%arg0: i32, %arg1: memref<1x288x8xf32, #tpu.memory_space<vmem>>, %arg2: memref<72x32xf32, #tpu.memory_space<vmem>>, %arg3: memref<1x32xf32, #tpu.memory_space<vmem>>, %arg4: memref<288x32xf32, #tpu.memory_space<vmem>>, %arg5: memref<1x32xf32, #tpu.memory_space<vmem>>, %arg6: memref<288x64xf32, #tpu.memory_space<vmem>>, %arg7: memref<1x64xf32, #tpu.memory_space<vmem>>, %arg8: memref<576x128xf32, #tpu.memory_space<vmem>>, %arg9: memref<1x128xf32, #tpu.memory_space<vmem>>, %arg10: memref<1x128x128xf32, #tpu.memory_space<vmem>>) attributes {dimension_semantics = [#tpu.dimension_semantics<parallel>], iteration_bounds = array<i64: 2>, scalar_prefetch = 0 : i64, scratch_operands = 0 : i64, tpu.core_type = #tpu.core_type<tc>, window_params = [{transform_indices = @transform_0, window_bounds = array<i64: 1, 288, 8>}, {pipeline_mode = #tpu.pipeline_mode<synchronous>, transform_indices = @transform_1, window_bounds = array<i64: 72, 32>}, {pipeline_mode = #tpu.pipeline_mode<synchronous>, transform_indices = @transform_2, window_bounds = array<i64: 1, 32>}, {pipeline_mode = #tpu.pipeline_mode<synchronous>, transform_indices = @transform_3, window_bounds = array<i64: 288, 32>}, {pipeline_mode = #tpu.pipeline_mode<synchronous>, transform_indices = @transform_4, window_bounds = array<i64: 1, 32>}, {pipeline_mode = #tpu.pipeline_mode<synchronous>, transform_indices = @transform_5, window_bounds = array<i64: 288, 64>}, {pipeline_mode = #tpu.pipeline_mode<synchronous>, transform_indices = @transform_6, window_bounds = array<i64: 1, 64>}, {pipeline_mode = #tpu.pipeline_mode<synchronous>, transform_indices = @transform_7, window_bounds = array<i64: 576, 128>}, {pipeline_mode = #tpu.pipeline_mode<synchronous>, transform_indices = @transform_8, window_bounds = array<i64: 1, 128>}, {transform_indices = @transform_9, window_bounds = array<i64: 1, 128, 128>}]} {
    %c0 = arith.constant 0 : index
    %c0_0 = arith.constant 0 : index
    %c0_1 = arith.constant 0 : index
    %0 = vector.load %arg1[%c0, %c0_0, %c0_1] : memref<1x288x8xf32, #tpu.memory_space<vmem>>, vector<1x288x8xf32>
    %1 = vector.shape_cast %0 : vector<1x288x8xf32> to vector<288x8xf32>
    %c0_2 = arith.constant 0 : index
    %c0_3 = arith.constant 0 : index
    %2 = vector.load %arg2[%c0_2, %c0_3] : memref<72x32xf32, #tpu.memory_space<vmem>>, vector<72x32xf32>
    %c0_4 = arith.constant 0 : index
    %c0_5 = arith.constant 0 : index
    %3 = vector.load %arg3[%c0_4, %c0_5] : memref<1x32xf32, #tpu.memory_space<vmem>>, vector<1x32xf32>
    %4 = vector.extract_strided_slice %1 {offsets = [0, 0], sizes = [280, 8], strides = [1, 1]} : vector<288x8xf32> to vector<280x8xf32>
    %5 = vector.extract_strided_slice %4 {offsets = [0, 0], sizes = [248, 8], strides = [1, 1]} : vector<280x8xf32> to vector<248x8xf32>
    %6 = vector.extract_strided_slice %4 {offsets = [16, 0], sizes = [248, 8], strides = [1, 1]} : vector<280x8xf32> to vector<248x8xf32>
    %7 = vector.extract_strided_slice %4 {offsets = [32, 0], sizes = [248, 8], strides = [1, 1]} : vector<280x8xf32> to vector<248x8xf32>
    %8 = vector.extract_strided_slice %1 {offsets = [1, 0], sizes = [280, 8], strides = [1, 1]} : vector<288x8xf32> to vector<280x8xf32>
    %9 = vector.extract_strided_slice %8 {offsets = [0, 0], sizes = [248, 8], strides = [1, 1]} : vector<280x8xf32> to vector<248x8xf32>
    %10 = vector.extract_strided_slice %8 {offsets = [16, 0], sizes = [248, 8], strides = [1, 1]} : vector<280x8xf32> to vector<248x8xf32>
    %11 = vector.extract_strided_slice %8 {offsets = [32, 0], sizes = [248, 8], strides = [1, 1]} : vector<280x8xf32> to vector<248x8xf32>
    %12 = vector.extract_strided_slice %1 {offsets = [2, 0], sizes = [280, 8], strides = [1, 1]} : vector<288x8xf32> to vector<280x8xf32>
    %13 = vector.extract_strided_slice %12 {offsets = [0, 0], sizes = [248, 8], strides = [1, 1]} : vector<280x8xf32> to vector<248x8xf32>
    %14 = vector.extract_strided_slice %12 {offsets = [16, 0], sizes = [248, 8], strides = [1, 1]} : vector<280x8xf32> to vector<248x8xf32>
    %15 = vector.extract_strided_slice %12 {offsets = [32, 0], sizes = [248, 8], strides = [1, 1]} : vector<280x8xf32> to vector<248x8xf32>
    %16 = tpu.concatenate %5, %6, %7, %9, %10, %11, %13, %14, %15 in 1 : vector<248x8xf32>, vector<248x8xf32>, vector<248x8xf32>, vector<248x8xf32>, vector<248x8xf32>, vector<248x8xf32>, vector<248x8xf32>, vector<248x8xf32>, vector<248x8xf32> -> vector<248x72xf32>
    %cst = arith.constant dense<0.000000e+00> : vector<248x32xf32>
    %17 = tpu.matmul %16, %2, %cst {dimension_numbers = #tpu.dot_dimension_numbers<[1], [0], [0], [1], [0, 0, 1, 1], [], []>} : vector<248x72xf32>, vector<72x32xf32>, vector<248x32xf32> -> vector<248x32xf32>
    %18 = vector.broadcast %3 : vector<1x32xf32> to vector<248x32xf32>
    %19 = arith.addf %17, %18 : vector<248x32xf32>
    %cst_6 = arith.constant 0.000000e+00 : f32
    %20 = vector.broadcast %cst_6 : f32 to vector<248x32xf32>
    %21 = arith.maximumf %19, %20 : vector<248x32xf32>
    %c0_7 = arith.constant 0 : index
    %c0_8 = arith.constant 0 : index
    %22 = vector.load %arg4[%c0_7, %c0_8] : memref<288x32xf32, #tpu.memory_space<vmem>>, vector<288x32xf32>
    %c0_9 = arith.constant 0 : index
    %c0_10 = arith.constant 0 : index
    %23 = vector.load %arg5[%c0_9, %c0_10] : memref<1x32xf32, #tpu.memory_space<vmem>>, vector<1x32xf32>
    %24 = vector.extract_strided_slice %21 {offsets = [0, 0], sizes = [240, 32], strides = [1, 1]} : vector<248x32xf32> to vector<240x32xf32>
    %25 = vector.extract_strided_slice %24 {offsets = [0, 0], sizes = [208, 32], strides = [1, 1]} : vector<240x32xf32> to vector<208x32xf32>
    %26 = vector.extract_strided_slice %24 {offsets = [16, 0], sizes = [208, 32], strides = [1, 1]} : vector<240x32xf32> to vector<208x32xf32>
    %27 = vector.extract_strided_slice %24 {offsets = [32, 0], sizes = [208, 32], strides = [1, 1]} : vector<240x32xf32> to vector<208x32xf32>
    %28 = vector.extract_strided_slice %21 {offsets = [1, 0], sizes = [240, 32], strides = [1, 1]} : vector<248x32xf32> to vector<240x32xf32>
    %29 = vector.extract_strided_slice %28 {offsets = [0, 0], sizes = [208, 32], strides = [1, 1]} : vector<240x32xf32> to vector<208x32xf32>
    %30 = vector.extract_strided_slice %28 {offsets = [16, 0], sizes = [208, 32], strides = [1, 1]} : vector<240x32xf32> to vector<208x32xf32>
    %31 = vector.extract_strided_slice %28 {offsets = [32, 0], sizes = [208, 32], strides = [1, 1]} : vector<240x32xf32> to vector<208x32xf32>
    %32 = vector.extract_strided_slice %21 {offsets = [2, 0], sizes = [240, 32], strides = [1, 1]} : vector<248x32xf32> to vector<240x32xf32>
    %33 = vector.extract_strided_slice %32 {offsets = [0, 0], sizes = [208, 32], strides = [1, 1]} : vector<240x32xf32> to vector<208x32xf32>
    %34 = vector.extract_strided_slice %32 {offsets = [16, 0], sizes = [208, 32], strides = [1, 1]} : vector<240x32xf32> to vector<208x32xf32>
    %35 = vector.extract_strided_slice %32 {offsets = [32, 0], sizes = [208, 32], strides = [1, 1]} : vector<240x32xf32> to vector<208x32xf32>
    %36 = tpu.concatenate %25, %26, %27, %29, %30, %31, %33, %34, %35 in 1 : vector<208x32xf32>, vector<208x32xf32>, vector<208x32xf32>, vector<208x32xf32>, vector<208x32xf32>, vector<208x32xf32>, vector<208x32xf32>, vector<208x32xf32>, vector<208x32xf32> -> vector<208x288xf32>
    %cst_11 = arith.constant dense<0.000000e+00> : vector<208x32xf32>
    %37 = tpu.matmul %36, %22, %cst_11 {dimension_numbers = #tpu.dot_dimension_numbers<[1], [0], [0], [1], [0, 0, 1, 1], [], []>} : vector<208x288xf32>, vector<288x32xf32>, vector<208x32xf32> -> vector<208x32xf32>
    %38 = vector.broadcast %23 : vector<1x32xf32> to vector<208x32xf32>
    %39 = arith.addf %37, %38 : vector<208x32xf32>
    %cst_12 = arith.constant 0.000000e+00 : f32
    %40 = vector.broadcast %cst_12 : f32 to vector<208x32xf32>
    %41 = arith.maximumf %39, %40 : vector<208x32xf32>
    %c0_13 = arith.constant 0 : index
    %c0_14 = arith.constant 0 : index
    %42 = vector.load %arg6[%c0_13, %c0_14] : memref<288x64xf32, #tpu.memory_space<vmem>>, vector<288x64xf32>
    %c0_15 = arith.constant 0 : index
    %c0_16 = arith.constant 0 : index
    %43 = vector.load %arg7[%c0_15, %c0_16] : memref<1x64xf32, #tpu.memory_space<vmem>>, vector<1x64xf32>
    %44 = vector.extract_strided_slice %41 {offsets = [0, 0], sizes = [200, 32], strides = [1, 1]} : vector<208x32xf32> to vector<200x32xf32>
    %45 = vector.extract_strided_slice %44 {offsets = [0, 0], sizes = [168, 32], strides = [1, 1]} : vector<200x32xf32> to vector<168x32xf32>
    %46 = vector.extract_strided_slice %44 {offsets = [16, 0], sizes = [168, 32], strides = [1, 1]} : vector<200x32xf32> to vector<168x32xf32>
    %47 = vector.extract_strided_slice %44 {offsets = [32, 0], sizes = [168, 32], strides = [1, 1]} : vector<200x32xf32> to vector<168x32xf32>
    %48 = vector.extract_strided_slice %41 {offsets = [1, 0], sizes = [200, 32], strides = [1, 1]} : vector<208x32xf32> to vector<200x32xf32>
    %49 = vector.extract_strided_slice %48 {offsets = [0, 0], sizes = [168, 32], strides = [1, 1]} : vector<200x32xf32> to vector<168x32xf32>
    %50 = vector.extract_strided_slice %48 {offsets = [16, 0], sizes = [168, 32], strides = [1, 1]} : vector<200x32xf32> to vector<168x32xf32>
    %51 = vector.extract_strided_slice %48 {offsets = [32, 0], sizes = [168, 32], strides = [1, 1]} : vector<200x32xf32> to vector<168x32xf32>
    %52 = vector.extract_strided_slice %41 {offsets = [2, 0], sizes = [200, 32], strides = [1, 1]} : vector<208x32xf32> to vector<200x32xf32>
    %53 = vector.extract_strided_slice %52 {offsets = [0, 0], sizes = [168, 32], strides = [1, 1]} : vector<200x32xf32> to vector<168x32xf32>
    %54 = vector.extract_strided_slice %52 {offsets = [16, 0], sizes = [168, 32], strides = [1, 1]} : vector<200x32xf32> to vector<168x32xf32>
    %55 = vector.extract_strided_slice %52 {offsets = [32, 0], sizes = [168, 32], strides = [1, 1]} : vector<200x32xf32> to vector<168x32xf32>
    %56 = tpu.concatenate %45, %46, %47, %49, %50, %51, %53, %54, %55 in 1 : vector<168x32xf32>, vector<168x32xf32>, vector<168x32xf32>, vector<168x32xf32>, vector<168x32xf32>, vector<168x32xf32>, vector<168x32xf32>, vector<168x32xf32>, vector<168x32xf32> -> vector<168x288xf32>
    %cst_17 = arith.constant dense<0.000000e+00> : vector<168x64xf32>
    %57 = tpu.matmul %56, %42, %cst_17 {dimension_numbers = #tpu.dot_dimension_numbers<[1], [0], [0], [1], [0, 0, 1, 1], [], []>} : vector<168x288xf32>, vector<288x64xf32>, vector<168x64xf32> -> vector<168x64xf32>
    %58 = vector.broadcast %43 : vector<1x64xf32> to vector<168x64xf32>
    %59 = arith.addf %57, %58 : vector<168x64xf32>
    %cst_18 = arith.constant 0.000000e+00 : f32
    %60 = vector.broadcast %cst_18 : f32 to vector<168x64xf32>
    %61 = arith.maximumf %59, %60 : vector<168x64xf32>
    %c0_19 = arith.constant 0 : index
    %c0_20 = arith.constant 0 : index
    %62 = vector.load %arg8[%c0_19, %c0_20] : memref<576x128xf32, #tpu.memory_space<vmem>>, vector<576x128xf32>
    %c0_21 = arith.constant 0 : index
    %c0_22 = arith.constant 0 : index
    %63 = vector.load %arg9[%c0_21, %c0_22] : memref<1x128xf32, #tpu.memory_space<vmem>>, vector<1x128xf32>
    %64 = vector.extract_strided_slice %61 {offsets = [0, 0], sizes = [160, 64], strides = [1, 1]} : vector<168x64xf32> to vector<160x64xf32>
    %65 = vector.extract_strided_slice %64 {offsets = [0, 0], sizes = [128, 64], strides = [1, 1]} : vector<160x64xf32> to vector<128x64xf32>
    %66 = vector.extract_strided_slice %64 {offsets = [16, 0], sizes = [128, 64], strides = [1, 1]} : vector<160x64xf32> to vector<128x64xf32>
    %67 = vector.extract_strided_slice %64 {offsets = [32, 0], sizes = [128, 64], strides = [1, 1]} : vector<160x64xf32> to vector<128x64xf32>
    %68 = vector.extract_strided_slice %61 {offsets = [1, 0], sizes = [160, 64], strides = [1, 1]} : vector<168x64xf32> to vector<160x64xf32>
    %69 = vector.extract_strided_slice %68 {offsets = [0, 0], sizes = [128, 64], strides = [1, 1]} : vector<160x64xf32> to vector<128x64xf32>
    %70 = vector.extract_strided_slice %68 {offsets = [16, 0], sizes = [128, 64], strides = [1, 1]} : vector<160x64xf32> to vector<128x64xf32>
    %71 = vector.extract_strided_slice %68 {offsets = [32, 0], sizes = [128, 64], strides = [1, 1]} : vector<160x64xf32> to vector<128x64xf32>
    %72 = vector.extract_strided_slice %61 {offsets = [2, 0], sizes = [160, 64], strides = [1, 1]} : vector<168x64xf32> to vector<160x64xf32>
    %73 = vector.extract_strided_slice %72 {offsets = [0, 0], sizes = [128, 64], strides = [1, 1]} : vector<160x64xf32> to vector<128x64xf32>
    %74 = vector.extract_strided_slice %72 {offsets = [16, 0], sizes = [128, 64], strides = [1, 1]} : vector<160x64xf32> to vector<128x64xf32>
    %75 = vector.extract_strided_slice %72 {offsets = [32, 0], sizes = [128, 64], strides = [1, 1]} : vector<160x64xf32> to vector<128x64xf32>
    %76 = tpu.concatenate %65, %66, %67, %69, %70, %71, %73, %74, %75 in 1 : vector<128x64xf32>, vector<128x64xf32>, vector<128x64xf32>, vector<128x64xf32>, vector<128x64xf32>, vector<128x64xf32>, vector<128x64xf32>, vector<128x64xf32>, vector<128x64xf32> -> vector<128x576xf32>
    %cst_23 = arith.constant dense<0.000000e+00> : vector<128x128xf32>
    %77 = tpu.matmul %76, %62, %cst_23 {dimension_numbers = #tpu.dot_dimension_numbers<[1], [0], [0], [1], [0, 0, 1, 1], [], []>} : vector<128x576xf32>, vector<576x128xf32>, vector<128x128xf32> -> vector<128x128xf32>
    %78 = vector.broadcast %63 : vector<1x128xf32> to vector<128x128xf32>
    %79 = arith.addf %77, %78 : vector<128x128xf32>
    %cst_24 = arith.constant 0.000000e+00 : f32
    %80 = vector.broadcast %cst_24 : f32 to vector<128x128xf32>
    %81 = arith.maximumf %79, %80 : vector<128x128xf32>
    %c0_25 = arith.constant 0 : index
    %c0_26 = arith.constant 0 : index
    %c0_27 = arith.constant 0 : index
    %82 = vector.load %arg10[%c0_25, %c0_26, %c0_27] : memref<1x128x128xf32, #tpu.memory_space<vmem>>, vector<1x128x128xf32>
    %83 = vector.shape_cast %82 : vector<1x128x128xf32> to vector<128x128xf32>
    %84 = vector.shape_cast %81 : vector<128x128xf32> to vector<1x128x128xf32>
    tpu.vector_store %arg10[%c0_25, %c0_26, %c0_27], %84 {strides = array<i32>} : memref<1x128x128xf32, #tpu.memory_space<vmem>>, vector<1x128x128xf32>,
    return
  }
  func.func @transform_0(%arg0: i32) -> (i32, i32, i32) {
    %c0_i32 = arith.constant 0 : i32
    %c0_i32_0 = arith.constant 0 : i32
    %c0_i32_1 = arith.constant 0 : i32
    return %arg0, %c0_i32, %c0_i32_0 : i32, i32, i32
  }
  func.func @transform_1(%arg0: i32) -> (i32, i32) {
    %c0_i32 = arith.constant 0 : i32
    %c0_i32_0 = arith.constant 0 : i32
    %c0_i32_1 = arith.constant 0 : i32
    return %c0_i32, %c0_i32_0 : i32, i32
  }
  func.func @transform_2(%arg0: i32) -> (i32, i32) {
    %c0_i32 = arith.constant 0 : i32
    %c0_i32_0 = arith.constant 0 : i32
    %c0_i32_1 = arith.constant 0 : i32
    return %c0_i32, %c0_i32_0 : i32, i32
  }
  func.func @transform_3(%arg0: i32) -> (i32, i32) {
    %c0_i32 = arith.constant 0 : i32
    %c0_i32_0 = arith.constant 0 : i32
    %c0_i32_1 = arith.constant 0 : i32
    return %c0_i32, %c0_i32_0 : i32, i32
  }
  func.func @transform_4(%arg0: i32) -> (i32, i32) {
    %c0_i32 = arith.constant 0 : i32
    %c0_i32_0 = arith.constant 0 : i32
    %c0_i32_1 = arith.constant 0 : i32
    return %c0_i32, %c0_i32_0 : i32, i32
  }
  func.func @transform_5(%arg0: i32) -> (i32, i32) {
    %c0_i32 = arith.constant 0 : i32
    %c0_i32_0 = arith.constant 0 : i32
    %c0_i32_1 = arith.constant 0 : i32
    return %c0_i32, %c0_i32_0 : i32, i32
  }
  func.func @transform_6(%arg0: i32) -> (i32, i32) {
    %c0_i32 = arith.constant 0 : i32
    %c0_i32_0 = arith.constant 0 : i32
    %c0_i32_1 = arith.constant 0 : i32
    return %c0_i32, %c0_i32_0 : i32, i32
  }
  func.func @transform_7(%arg0: i32) -> (i32, i32) {
    %c0_i32 = arith.constant 0 : i32
    %c0_i32_0 = arith.constant 0 : i32
    %c0_i32_1 = arith.constant 0 : i32
    return %c0_i32, %c0_i32_0 : i32, i32
  }
  func.func @transform_8(%arg0: i32) -> (i32, i32) {
    %c0_i32 = arith.constant 0 : i32
    %c0_i32_0 = arith.constant 0 : i32
    %c0_i32_1 = arith.constant 0 : i32
    return %c0_i32, %c0_i32_0 : i32, i32
  }
  func.func @transform_9(%arg0: i32) -> (i32, i32, i32) {
    %c0_i32 = arith.constant 0 : i32
    %c0_i32_0 = arith.constant 0 : i32
    %c0_i32_1 = arith.constant 0 : i32
    return %arg0, %c0_i32, %c0_i32_0 : i32, i32, i32
  }
}

</mosaic_0001>

<llo_original>
// kernel: encoder_forward.1
$region0: #{encoder_forward.1}
  #allocation0 [shape = 'u32[]', space=smem, size = 0x4, offset = 0x4, fixed_abs, tag = 'smem constant byte address 0x4 - core index']
  #allocation1 [shape = 'u32[72,128]{1,0:T(1,128)}', space=vmem, size = 0x9000, scoped, tag = 'internal scratch']
  %s0 = inlined_call_operand.vmem [shape: f32[2,288,8], index: 0, kind: input, shape index: {}]
  %s1 = inlined_call_operand.vmem [shape: f32[72,32], index: 1, kind: input, shape index: {}]
  %s2 = inlined_call_operand.vmem [shape: f32[1,32], index: 2, kind: input, shape index: {}]
  %s3 = inlined_call_operand.vmem [shape: f32[288,32], index: 3, kind: input, shape index: {}]
  %s4 = inlined_call_operand.vmem [shape: f32[1,32], index: 4, kind: input, shape index: {}]
  %s5 = inlined_call_operand.vmem [shape: f32[288,64], index: 5, kind: input, shape index: {}]
  %s6 = inlined_call_operand.vmem [shape: f32[1,64], index: 6, kind: input, shape index: {}]
  %s7 = inlined_call_operand.vmem [shape: f32[576,128], index: 7, kind: input, shape index: {}]
  %s8 = inlined_call_operand.vmem [shape: f32[1,128], index: 8, kind: input, shape index: {}]
  %s9 = inlined_call_operand.vmem [shape: f32[2,128,128], index: 9, kind: output, shape index: {}]
  %s10 = sld [smem:[#allocation0]]
  $region69: #{encoder_forward.1} parent=0
    _
  %s12 = ssub.s32 1, %s10
  %s13 = scalar_select 0, %s12, %s10
  loop: start=0, step=1, limit=4
  $region2: #{encoder_forward.1} parent=0 // loop_pre_header
    _
  $region3: #{encoder_forward.1} parent=0 // loop_header
    %s15 = sphi 0, %s19
    %p16 = scmp.ge.s32.totalorder %s15, 4
    %s25 = sphi 0, %s27
    %s28 = sphi 0, %s25
    %s29 = sphi 0, %s28
    %s45 = sphi 0, %s29
    %s49 = sphi 0, %s49
    %s51 = sphi 0, %s49
    %s52 = sphi 0, %s51
    %s66 = sphi 0, %s52
    %s70 = sphi 0, %s70
    %s72 = sphi 0, %s70
    %s73 = sphi 0, %s72
    %s87 = sphi 0, %s73
    %s91 = sphi 0, %s91
    %s93 = sphi 0, %s91
    %s94 = sphi 0, %s93
    %s108 = sphi 0, %s94
    %s112 = sphi 0, %s112
    %s114 = sphi 0, %s112
    %s115 = sphi 0, %s114
    %s129 = sphi 0, %s115
    %s133 = sphi 0, %s133
    %s135 = sphi 0, %s133
    %s136 = sphi 0, %s135
    %s150 = sphi 0, %s136
    %s154 = sphi 0, %s154
    %s156 = sphi 0, %s154
    %s157 = sphi 0, %s156
    %s171 = sphi 0, %s157
    %s175 = sphi 0, %s175
    %s177 = sphi 0, %s175
    %s178 = sphi 0, %s177
    %s192 = sphi 0, %s178
    %s196 = sphi 0, %s196
    %s198 = sphi 0, %s196
    %s199 = sphi 0, %s198
    %s213 = sphi 0, %s199
    %s219 = sphi 0, %s221
    %s222 = sphi 0, %s219
    %s223 = sphi 0, %s222
    %s239 = sphi 0, %s223
  $region4: #{encoder_forward.1} parent=0 // loop_header_branch
    %18 = sbr.rel (%p16) target = $region8
  $region5: #{encoder_forward.1} parent=0 // loop_body
    %s20 = ssub.s32 %s15, 1
    %s21 = ssub.s32 %s15, 2
    %s22 = sadd.s32 %s15, 1
    %s23 = ssub.s32 %s15, %s22
    %p24 = scmp.eq.s32.totalorder %s23, 0
    %s26 = sadd.s32 %s25, 1
    %s27 = scalar_select %p24, %s25, %s26
    %p30 = pneg %p24
    %p31 = scmp.eq.s32.totalorder %s15, 1
    %p32 = por %p30, %p31
    %p33 = scmp.ne.s32.totalorder %s25, %s28
    %p34 = scmp.eq.s32.totalorder %s15, 0
    %p35 = por %p33, %p34
    %p36 = scmp.ne.s32.totalorder %s25, %s28
    %p37 = scmp.eq.s32.totalorder %s20, 1
    %p38 = por %p36, %p37
    %p39 = scmp.ne.s32.totalorder %s28, %s29
    %p40 = scmp.eq.s32.totalorder %s20, 0
    %p41 = por %p39, %p40
    %p42 = scmp.ne.s32.totalorder %s28, %s29
    %p43 = scmp.eq.s32.totalorder %s21, 1
    %p44 = por %p42, %p43
    %p46 = scmp.ne.s32.totalorder %s29, %s45
    %p47 = scmp.eq.s32.totalorder %s21, 0
    %p48 = por %p46, %p47
    %s50 = sadd.s32 %s49, 1
    %p53 = scmp.eq.s32.totalorder %s15, 1
    %p54 = scmp.ne.s32.totalorder %s49, %s51
    %p55 = scmp.eq.s32.totalorder %s15, 0
    %p56 = por %p54, %p55
    %p57 = scmp.ne.s32.totalorder %s49, %s51
    %p58 = scmp.eq.s32.totalorder %s20, 1
    %p59 = por %p57, %p58
    %p60 = scmp.ne.s32.totalorder %s51, %s52
    %p61 = scmp.eq.s32.totalorder %s20, 0
    %p62 = por %p60, %p61
    %p63 = scmp.ne.s32.totalorder %s51, %s52
    %p64 = scmp.eq.s32.totalorder %s21, 1
    %p65 = por %p63, %p64
    %p67 = scmp.ne.s32.totalorder %s52, %s66
    %p68 = scmp.eq.s32.totalorder %s21, 0
    %p69 = por %p67, %p68
    %s71 = sadd.s32 %s70, 1
    %p74 = scmp.eq.s32.totalorder %s15, 1
    %p75 = scmp.ne.s32.totalorder %s70, %s72
    %p76 = scmp.eq.s32.totalorder %s15, 0
    %p77 = por %p75, %p76
    %p78 = scmp.ne.s32.totalorder %s70, %s72
    %p79 = scmp.eq.s32.totalorder %s20, 1
    %p80 = por %p78, %p79
    %p81 = scmp.ne.s32.totalorder %s72, %s73
    %p82 = scmp.eq.s32.totalorder %s20, 0
    %p83 = por %p81, %p82
    %p84 = scmp.ne.s32.totalorder %s72, %s73
    %p85 = scmp.eq.s32.totalorder %s21, 1
    %p86 = por %p84, %p85
    %p88 = scmp.ne.s32.totalorder %s73, %s87
    %p89 = scmp.eq.s32.totalorder %s21, 0
    %p90 = por %p88, %p89
    %s92 = sadd.s32 %s91, 1
    %p95 = scmp.eq.s32.totalorder %s15, 1
    %p96 = scmp.ne.s32.totalorder %s91, %s93
    %p97 = scmp.eq.s32.totalorder %s15, 0
    %p98 = por %p96, %p97
    %p99 = scmp.ne.s32.totalorder %s91, %s93
    %p100 = scmp.eq.s32.totalorder %s20, 1
    %p101 = por %p99, %p100
    %p102 = scmp.ne.s32.totalorder %s93, %s94
    %p103 = scmp.eq.s32.totalorder %s20, 0
    %p104 = por %p102, %p103
    %p105 = scmp.ne.s32.totalorder %s93, %s94
    %p106 = scmp.eq.s32.totalorder %s21, 1
    %p107 = por %p105, %p106
    %p109 = scmp.ne.s32.totalorder %s94, %s108
    %p110 = scmp.eq.s32.totalorder %s21, 0
    %p111 = por %p109, %p110
    %s113 = sadd.s32 %s112, 1
    %p116 = scmp.eq.s32.totalorder %s15, 1
    %p117 = scmp.ne.s32.totalorder %s112, %s114
    %p118 = scmp.eq.s32.totalorder %s15, 0
    %p119 = por %p117, %p118
    %p120 = scmp.ne.s32.totalorder %s112, %s114
    %p121 = scmp.eq.s32.totalorder %s20, 1
    %p122 = por %p120, %p121
    %p123 = scmp.ne.s32.totalorder %s114, %s115
    %p124 = scmp.eq.s32.totalorder %s20, 0
    %p125 = por %p123, %p124
    %p126 = scmp.ne.s32.totalorder %s114, %s115
    %p127 = scmp.eq.s32.totalorder %s21, 1
    %p128 = por %p126, %p127
    %p130 = scmp.ne.s32.totalorder %s115, %s129
    %p131 = scmp.eq.s32.totalorder %s21, 0
    %p132 = por %p130, %p131
    %s134 = sadd.s32 %s133, 1
    %p137 = scmp.eq.s32.totalorder %s15, 1
    %p138 = scmp.ne.s32.totalorder %s133, %s135
    %p139 = scmp.eq.s32.totalorder %s15, 0
    %p140 = por %p138, %p139
    %p141 = scmp.ne.s32.totalorder %s133, %s135
    %p142 = scmp.eq.s32.totalorder %s20, 1
    %p143 = por %p141, %p142
    %p144 = scmp.ne.s32.totalorder %s135, %s136
    %p145 = scmp.eq.s32.totalorder %s20, 0
    %p146 = por %p144, %p145
    %p147 = scmp.ne.s32.totalorder %s135, %s136
    %p148 = scmp.eq.s32.totalorder %s21, 1
    %p149 = por %p147, %p148
    %p151 = scmp.ne.s32.totalorder %s136, %s150
    %p152 = scmp.eq.s32.totalorder %s21, 0
    %p153 = por %p151, %p152
    %s155 = sadd.s32 %s154, 1
    %p158 = scmp.eq.s32.totalorder %s15, 1
    %p159 = scmp.ne.s32.totalorder %s154, %s156
    %p160 = scmp.eq.s32.totalorder %s15, 0
    %p161 = por %p159, %p160
    %p162 = scmp.ne.s32.totalorder %s154, %s156
    %p163 = scmp.eq.s32.totalorder %s20, 1
    %p164 = por %p162, %p163
    %p165 = scmp.ne.s32.totalorder %s156, %s157
    %p166 = scmp.eq.s32.totalorder %s20, 0
    %p167 = por %p165, %p166
    %p168 = scmp.ne.s32.totalorder %s156, %s157
    %p169 = scmp.eq.s32.totalorder %s21, 1
    %p170 = por %p168, %p169
    %p172 = scmp.ne.s32.totalorder %s157, %s171
    %p173 = scmp.eq.s32.totalorder %s21, 0
    %p174 = por %p172, %p173
    %s176 = sadd.s32 %s175, 1
    %p179 = scmp.eq.s32.totalorder %s15, 1
    %p180 = scmp.ne.s32.totalorder %s175, %s177
    %p181 = scmp.eq.s32.totalorder %s15, 0
    %p182 = por %p180, %p181
    %p183 = scmp.ne.s32.totalorder %s175, %s177
    %p184 = scmp.eq.s32.totalorder %s20, 1
    %p185 = por %p183, %p184
    %p186 = scmp.ne.s32.totalorder %s177, %s178
    %p187 = scmp.eq.s32.totalorder %s20, 0
    %p188 = por %p186, %p187
    %p189 = scmp.ne.s32.totalorder %s177, %s178
    %p190 = scmp.eq.s32.totalorder %s21, 1
    %p191 = por %p189, %p190
    %p193 = scmp.ne.s32.totalorder %s178, %s192
    %p194 = scmp.eq.s32.totalorder %s21, 0
    %p195 = por %p193, %p194
    %s197 = sadd.s32 %s196, 1
    %p200 = scmp.eq.s32.totalorder %s15, 1
    %p201 = scmp.ne.s32.totalorder %s196, %s198
    %p202 = scmp.eq.s32.totalorder %s15, 0
    %p203 = por %p201, %p202
    %p204 = scmp.ne.s32.totalorder %s196, %s198
    %p205 = scmp.eq.s32.totalorder %s20, 1
    %p206 = por %p204, %p205
    %p207 = scmp.ne.s32.totalorder %s198, %s199
    %p208 = scmp.eq.s32.totalorder %s20, 0
    %p209 = por %p207, %p208
    %p210 = scmp.ne.s32.totalorder %s198, %s199
    %p211 = scmp.eq.s32.totalorder %s21, 1
    %p212 = por %p210, %p211
    %p214 = scmp.ne.s32.totalorder %s199, %s213
    %p215 = scmp.eq.s32.totalorder %s21, 0
    %p216 = por %p214, %p215
    %s217 = ssub.s32 %s15, %s22
    %p218 = scmp.eq.s32.totalorder %s217, 0
    %s220 = sadd.s32 %s219, 1
    %s221 = scalar_select %p218, %s219, %s220
    %p224 = pneg %p218
    %p225 = scmp.eq.s32.totalorder %s15, 1
    %p226 = por %p224, %p225
    %p227 = scmp.ne.s32.totalorder %s219, %s222
    %p228 = scmp.eq.s32.totalorder %s15, 0
    %p229 = por %p227, %p228
    %p230 = scmp.ne.s32.totalorder %s219, %s222
    %p231 = scmp.eq.s32.totalorder %s20, 1
    %p232 = por %p230, %p231
    %p233 = scmp.ne.s32.totalorder %s222, %s223
    %p234 = scmp.eq.s32.totalorder %s20, 0
    %p235 = por %p233, %p234
    %p236 = scmp.ne.s32.totalorder %s222, %s223
    %p237 = scmp.eq.s32.totalorder %s21, 1
    %p238 = por %p236, %p237
    %p240 = scmp.ne.s32.totalorder %s223, %s239
    %p241 = scmp.eq.s32.totalorder %s21, 0
    %p242 = por %p240, %p241
    %p243 = scmp.le.s32.totalorder 1, %s15
    %p244 = scmp.lt.s32.totalorder %s15, 3
    %p245 = pnand %p243, %p244
    %p246 = pneg %p245
    // Predicated region
    $region9: #{encoder_forward.1} parent=5 // pred_check
      _
    $region10: #{encoder_forward.1} parent=5 // pred_check_branch
      %248 = sbr.rel (%p245) target = $region12
    $region11: #{encoder_forward.1} parent=5 // pred_region
      %s249 = ssub.s32 %s15, 1
      // Predicated region
      $region13: #{encoder_forward.1} parent=11 // pred_check
        %p250 = pneg %p62
      $region14: #{encoder_forward.1} parent=11 // pred_check_branch
        %252 = sbr.rel (%p250) target = $region16
      $region15: #{encoder_forward.1} parent=11 // pred_region
        _
      $region16: #{encoder_forward.1} parent=11 // pred_fallthru
        _
      // Predicated region
      $region17: #{encoder_forward.1} parent=11 // pred_check
        %p253 = pneg %p83
      $region18: #{encoder_forward.1} parent=11 // pred_check_branch
        %255 = sbr.rel (%p253) target = $region20
      $region19: #{encoder_forward.1} parent=11 // pred_region
        _
      $region20: #{encoder_forward.1} parent=11 // pred_fallthru
        _
      // Predicated region
      $region21: #{encoder_forward.1} parent=11 // pred_check
        %p256 = pneg %p104
      $region22: #{encoder_forward.1} parent=11 // pred_check_branch
        %258 = sbr.rel (%p256) target = $region24
      $region23: #{encoder_forward.1} parent=11 // pred_region
        _
      $region24: #{encoder_forward.1} parent=11 // pred_fallthru
        _
      // Predicated region
      $region25: #{encoder_forward.1} parent=11 // pred_check
        %p259 = pneg %p125
      $region26: #{encoder_forward.1} parent=11 // pred_check_branch
        %261 = sbr.rel (%p259) target = $region28
      $region27: #{encoder_forward.1} parent=11 // pred_region
        _
      $region28: #{encoder_forward.1} parent=11 // pred_fallthru
        _
      // Predicated region
      $region29: #{encoder_forward.1} parent=11 // pred_check
        %p262 = pneg %p146
      $region30: #{encoder_forward.1} parent=11 // pred_check_branch
        %264 = sbr.rel (%p262) target = $region32
      $region31: #{encoder_forward.1} parent=11 // pred_region
        _
      $region32: #{encoder_forward.1} parent=11 // pred_fallthru
        _
      // Predicated region
      $region33: #{encoder_forward.1} parent=11 // pred_check
        %p265 = pneg %p167
      $region34: #{encoder_forward.1} parent=11 // pred_check_branch
        %267 = sbr.rel (%p265) target = $region36
      $region35: #{encoder_forward.1} parent=11 // pred_region
        _
      $region36: #{encoder_forward.1} parent=11 // pred_fallthru
        _
      // Predicated region
      $region37: #{encoder_forward.1} parent=11 // pred_check
        %p268 = pneg %p188
      $region38: #{encoder_forward.1} parent=11 // pred_check_branch
        %270 = sbr.rel (%p268) target = $region40
      $region39: #{encoder_forward.1} parent=11 // pred_region
        _
      $region40: #{encoder_forward.1} parent=11 // pred_fallthru
        _
      // Predicated region
      $region41: #{encoder_forward.1} parent=11 // pred_check
        %p271 = pneg %p209
      $region42: #{encoder_forward.1} parent=11 // pred_check_branch
        %273 = sbr.rel (%p271) target = $region44
      $region43: #{encoder_forward.1} parent=11 // pred_region
        _
      $region44: #{encoder_forward.1} parent=11 // pred_fallthru
        _
    $region12: #{encoder_forward.1} parent=5 // pred_fallthru
      _
    %p274 = scmp.lt.s32.totalorder %s15, 2
    // Predicated region
    $region45: #{encoder_forward.1} parent=5 // pred_check
      %p275 = pneg %p274
    $region46: #{encoder_forward.1} parent=5 // pred_check_branch
      %277 = sbr.rel (%p275) target = $region48
    $region47: #{encoder_forward.1} parent=5 // pred_region
      // Predicated region
      $region49: #{encoder_forward.1} parent=47 // pred_check
        %p278 = pneg %p35
      $region50: #{encoder_forward.1} parent=47 // pred_check_branch
        %280 = sbr.rel (%p278) target = $region52
      $region51: #{encoder_forward.1} parent=47 // pred_region
        %p281 = scmp.lt.s32.totalorder %s15, 1
        %s282 = scalar_select %p281, %s15, 1
        %s283 = smul.addr %s282, 36
        %s284 = smul.addr %s283, 8
        %s285 = scalar_lea.vmem %s0, %s284
      $region52: #{encoder_forward.1} parent=47 // pred_fallthru
        _
    $region48: #{encoder_forward.1} parent=5 // pred_fallthru
      _
    %p286 = scmp.le.s32.totalorder 1, %s15
    %p287 = scmp.lt.s32.totalorder %s15, 3
    %p288 = pnand %p286, %p287
    %p289 = pneg %p288
    // Predicated region
    $region53: #{encoder_forward.1} parent=5 // pred_check
      _
    $region54: #{encoder_forward.1} parent=5 // pred_check_branch
      %291 = sbr.rel (%p288) target = $region56
    $region55: #{encoder_forward.1} parent=5 // pred_region
      %s292 = ssub.s32 %s15, 1
      %p293 = scmp.lt.s32.totalorder %s20, 1
      %s294 = scalar_select %p293, %s20, 1
      %s295 = smul.addr %s294, 36
      %s296 = smul.addr %s295, 8
      %s297 = scalar_lea.vmem %s0, %s296
      %p298 = pneg %p41
      %p299 = pneg %p38
      %p300 = pneg %p62
      %p301 = pneg %p59
      %p302 = pneg %p83
      %p303 = pneg %p80
      %p304 = pneg %p104
      %p305 = pneg %p101
      %p306 = pneg %p125
      %p307 = pneg %p122
      %p308 = pneg %p146
      %p309 = pneg %p143
      %p310 = pneg %p167
      %p311 = pneg %p164
      %p312 = pneg %p188
      %p313 = pneg %p185
      %p314 = pneg %p209
      %p315 = pneg %p206
      %p316 = pneg %p235
      %p317 = pneg %p232
      %p318 = scmp.lt.s32.totalorder %s20, 1
      %s319 = scalar_select %p318, %s20, 1
      %s320 = smul.addr %s319, 16
      %s321 = smul.addr %s320, 8
      %s322 = scalar_lea.vmem %s9, %s321
      %p323 = scmp.lt.s32.totalorder %s20, 1
      %s324 = scalar_select %p323, %s20, 1
      %s325 = smul.addr %s324, 36
      %s326 = smul.addr %s325, 8
      %s327 = scalar_lea.vmem %s0, %s326
      %p328 = scmp.lt.s32.totalorder %s20, 1
      %s329 = scalar_select %p328, %s20, 1
      %s330 = smul.addr %s329, 16
      %s331 = smul.addr %s330, 8
      %s332 = scalar_lea.vmem %s9, %s331
      %v333 = vld [vmem:[%s327] sm:$0xff]
      %v334 = vld [vmem:[%s327 + $0x8] sm:$0xff]
      %v335 = vld [vmem:[%s327 + $0x10] sm:$0xff]
      %v336 = vld [vmem:[%s327 + $0x18] sm:$0xff]
      %v337 = vld [vmem:[%s327 + $0x20] sm:$0xff]
      %v338 = vld [vmem:[%s327 + $0x28] sm:$0xff]
      %v339 = vld [vmem:[%s327 + $0x30] sm:$0xff]
      %v340 = vld [vmem:[%s327 + $0x38] sm:$0xff]
      %v341 = vld [vmem:[%s327 + $0x40] sm:$0xff]
      %v342 = vld [vmem:[%s327 + $0x48] sm:$0xff]
      %v343 = vld [vmem:[%s327 + $0x50] sm:$0xff]
      %v344 = vld [vmem:[%s327 + $0x58] sm:$0xff]
      %v345 = vld [vmem:[%s327 + $0x60] sm:$0xff]
      %v346 = vld [vmem:[%s327 + $0x68] sm:$0xff]
      %v347 = vld [vmem:[%s327 + $0x70] sm:$0xff]
      %v348 = vld [vmem:[%s327 + $0x78] sm:$0xff]
      %v349 = vld [vmem:[%s327 + $0x80] sm:$0xff]
      %v350 = vld [vmem:[%s327 + $0x88] sm:$0xff]
      %v351 = vld [vmem:[%s327 + $0x90] sm:$0xff]
      %v352 = vld [vmem:[%s327 + $0x98] sm:$0xff]
      %v353 = vld [vmem:[%s327 + $0xa0] sm:$0xff]
      %v354 = vld [vmem:[%s327 + $0xa8] sm:$0xff]
      %v355 = vld [vmem:[%s327 + $0xb0] sm:$0xff]
      %v356 = vld [vmem:[%s327 + $0xb8] sm:$0xff]
      %v357 = vld [vmem:[%s327 + $0xc0] sm:$0xff]
      %v358 = vld [vmem:[%s327 + $0xc8] sm:$0xff]
      %v359 = vld [vmem:[%s327 + $0xd0] sm:$0xff]
      %v360 = vld [vmem:[%s327 + $0xd8] sm:$0xff]
      %v361 = vld [vmem:[%s327 + $0xe0] sm:$0xff]
      %v362 = vld [vmem:[%s327 + $0xe8] sm:$0xff]
      %v363 = vld [vmem:[%s327 + $0xf0] sm:$0xff]
      %v364 = vld [vmem:[%s327 + $0xf8] sm:$0xff]
      %v365 = vld [vmem:[%s327 + $0x100] sm:$0xff]
      %v366 = vld [vmem:[%s327 + $0x108] sm:$0xff]
      %v367 = vld [vmem:[%s327 + $0x110] sm:$0xff]
      %v368 = vld [vmem:[%s327 + $0x118] sm:$0xff]
      %v369 = vld [vmem:[%s1] sm:$0xff]
      %v370 = vld [vmem:[%s1 + $0x8] sm:$0xff]
      %v371 = vld [vmem:[%s1 + $0x10] sm:$0xff]
      %v372 = vld [vmem:[%s1 + $0x18] sm:$0xff]
      %v373 = vld [vmem:[%s1 + $0x20] sm:$0xff]
      %v374 = vld [vmem:[%s1 + $0x28] sm:$0xff]
      %v375 = vld [vmem:[%s1 + $0x30] sm:$0xff]
      %v376 = vld [vmem:[%s1 + $0x38] sm:$0xff]
      %v377 = vld [vmem:[%s1 + $0x40] sm:$0xff]
      %v378 = vld [vmem:[%s2] sm:$0x1]
      %410 = vrot.lane.b32.xlu0 %v335, 8
      %v411 = vpop.permute.xlu0 %410
      %412 = vrot.lane.b32.xlu0 %v336, 8
      %v413 = vpop.permute.xlu0 %412
      %414 = vrot.lane.b32.xlu0 %v337, 8
      %v415 = vpop.permute.xlu0 %414
      %416 = vrot.lane.b32.xlu0 %v338, 8
      %v417 = vpop.permute.xlu0 %416
      %418 = vrot.lane.b32.xlu0 %v339, 8
      %v419 = vpop.permute.xlu0 %418
      %420 = vrot.lane.b32.xlu0 %v340, 8
      %v421 = vpop.permute.xlu0 %420
      %422 = vrot.lane.b32.xlu0 %v341, 8
      %v423 = vpop.permute.xlu0 %422
      %424 = vrot.lane.b32.xlu0 %v342, 8
      %v425 = vpop.permute.xlu0 %424
      %426 = vrot.lane.b32.xlu0 %v343, 8
      %v427 = vpop.permute.xlu0 %426
      %428 = vrot.lane.b32.xlu0 %v344, 8
      %v429 = vpop.permute.xlu0 %428
      %430 = vrot.lane.b32.xlu0 %v345, 8
      %v431 = vpop.permute.xlu0 %430
      %432 = vrot.lane.b32.xlu0 %v346, 8
      %v433 = vpop.permute.xlu0 %432
      %434 = vrot.lane.b32.xlu0 %v347, 8
      %v435 = vpop.permute.xlu0 %434
      %436 = vrot.lane.b32.xlu0 %v348, 8
      %v437 = vpop.permute.xlu0 %436
      %438 = vrot.lane.b32.xlu0 %v349, 8
      %v439 = vpop.permute.xlu0 %438
      %440 = vrot.lane.b32.xlu0 %v350, 8
      %v441 = vpop.permute.xlu0 %440
      %442 = vrot.lane.b32.xlu0 %v351, 8
      %v443 = vpop.permute.xlu0 %442
      %444 = vrot.lane.b32.xlu0 %v352, 8
      %v445 = vpop.permute.xlu0 %444
      %446 = vrot.lane.b32.xlu0 %v353, 8
      %v447 = vpop.permute.xlu0 %446
      %448 = vrot.lane.b32.xlu0 %v354, 8
      %v449 = vpop.permute.xlu0 %448
      %450 = vrot.lane.b32.xlu0 %v355, 8
      %v451 = vpop.permute.xlu0 %450
      %452 = vrot.lane.b32.xlu0 %v356, 8
      %v453 = vpop.permute.xlu0 %452
      %454 = vrot.lane.b32.xlu0 %v357, 8
      %v455 = vpop.permute.xlu0 %454
      %456 = vrot.lane.b32.xlu0 %v358, 8
      %v457 = vpop.permute.xlu0 %456
      %458 = vrot.lane.b32.xlu0 %v359, 8
      %v459 = vpop.permute.xlu0 %458
      %460 = vrot.lane.b32.xlu0 %v360, 8
      %v461 = vpop.permute.xlu0 %460
      %462 = vrot.lane.b32.xlu0 %v361, 8
      %v463 = vpop.permute.xlu0 %462
      %464 = vrot.lane.b32.xlu0 %v362, 8
      %v465 = vpop.permute.xlu0 %464
      %466 = vrot.lane.b32.xlu0 %v363, 8
      %v467 = vpop.permute.xlu0 %466
      %468 = vrot.lane.b32.xlu0 %v364, 8
      %v469 = vpop.permute.xlu0 %468
      %470 = vrot.lane.b32.xlu0 %v365, 8
      %v471 = vpop.permute.xlu0 %470
      %505 = vrot.lane.b32.xlu0 %v337, 16
      %v506 = vpop.permute.xlu0 %505
      %507 = vrot.lane.b32.xlu0 %v338, 16
      %v508 = vpop.permute.xlu0 %507
      %509 = vrot.lane.b32.xlu0 %v339, 16
      %v510 = vpop.permute.xlu0 %509
      %511 = vrot.lane.b32.xlu0 %v340, 16
      %v512 = vpop.permute.xlu0 %511
      %513 = vrot.lane.b32.xlu0 %v341, 16
      %v514 = vpop.permute.xlu0 %513
      %515 = vrot.lane.b32.xlu0 %v342, 16
      %v516 = vpop.permute.xlu0 %515
      %517 = vrot.lane.b32.xlu0 %v343, 16
      %v518 = vpop.permute.xlu0 %517
      %519 = vrot.lane.b32.xlu0 %v344, 16
      %v520 = vpop.permute.xlu0 %519
      %521 = vrot.lane.b32.xlu0 %v345, 16
      %v522 = vpop.permute.xlu0 %521
      %523 = vrot.lane.b32.xlu0 %v346, 16
      %v524 = vpop.permute.xlu0 %523
      %525 = vrot.lane.b32.xlu0 %v347, 16
      %v526 = vpop.permute.xlu0 %525
      %527 = vrot.lane.b32.xlu0 %v348, 16
      %v528 = vpop.permute.xlu0 %527
      %529 = vrot.lane.b32.xlu0 %v349, 16
      %v530 = vpop.permute.xlu0 %529
      %531 = vrot.lane.b32.xlu0 %v350, 16
      %v532 = vpop.permute.xlu0 %531
      %533 = vrot.lane.b32.xlu0 %v351, 16
      %v534 = vpop.permute.xlu0 %533
      %535 = vrot.lane.b32.xlu0 %v352, 16
      %v536 = vpop.permute.xlu0 %535
      %537 = vrot.lane.b32.xlu0 %v353, 16
      %v538 = vpop.permute.xlu0 %537
      %539 = vrot.lane.b32.xlu0 %v354, 16
      %v540 = vpop.permute.xlu0 %539
      %541 = vrot.lane.b32.xlu0 %v355, 16
      %v542 = vpop.permute.xlu0 %541
      %543 = vrot.lane.b32.xlu0 %v356, 16
      %v544 = vpop.permute.xlu0 %543
      %545 = vrot.lane.b32.xlu0 %v357, 16
      %v546 = vpop.permute.xlu0 %545
      %547 = vrot.lane.b32.xlu0 %v358, 16
      %v548 = vpop.permute.xlu0 %547
      %549 = vrot.lane.b32.xlu0 %v359, 16
      %v550 = vpop.permute.xlu0 %549
      %551 = vrot.lane.b32.xlu0 %v360, 16
      %v552 = vpop.permute.xlu0 %551
      %553 = vrot.lane.b32.xlu0 %v361, 16
      %v554 = vpop.permute.xlu0 %553
      %555 = vrot.lane.b32.xlu0 %v362, 16
      %v556 = vpop.permute.xlu0 %555
      %557 = vrot.lane.b32.xlu0 %v363, 16
      %v558 = vpop.permute.xlu0 %557
      %559 = vrot.lane.b32.xlu0 %v364, 16
      %v560 = vpop.permute.xlu0 %559
      %561 = vrot.lane.b32.xlu0 %v365, 16
      %v562 = vpop.permute.xlu0 %561
      %563 = vrot.lane.b32.xlu0 %v366, 16
      %v564 = vpop.permute.xlu0 %563
      %565 = vrot.lane.b32.xlu0 %v367, 16
      %v566 = vpop.permute.xlu0 %565
      %vm600 = vcmask 1046528
      %v601 = vrot.slane %v333, 1
      %v602 = vrot.slane %v334, 1
      %v603 = vsel %vm600, %v601, %v602
      %v604 = vrot.slane %v335, 1
      %v605 = vsel %vm600, %v602, %v604
      %v606 = vrot.slane %v336, 1
      %v607 = vsel %vm600, %v604, %v606
      %v608 = vrot.slane %v337, 1
      %v609 = vsel %vm600, %v606, %v608
      %v610 = vrot.slane %v338, 1
      %v611 = vsel %vm600, %v608, %v610
      %v612 = vrot.slane %v339, 1
      %v613 = vsel %vm600, %v610, %v612
      %v614 = vrot.slane %v340, 1
      %v615 = vsel %vm600, %v612, %v614
      %v616 = vrot.slane %v341, 1
      %v617 = vsel %vm600, %v614, %v616
      %v618 = vrot.slane %v342, 1
      %v619 = vsel %vm600, %v616, %v618
      %v620 = vrot.slane %v343, 1
      %v621 = vsel %vm600, %v618, %v620
      %v622 = vrot.slane %v344, 1
      %v623 = vsel %vm600, %v620, %v622
      %v624 = vrot.slane %v345, 1
      %v625 = vsel %vm600, %v622, %v624
      %v626 = vrot.slane %v346, 1
      %v627 = vsel %vm600, %v624, %v626
      %v628 = vrot.slane %v347, 1
      %v629 = vsel %vm600, %v626, %v628
      %v630 = vrot.slane %v348, 1
      %v631 = vsel %vm600, %v628, %v630
      %v632 = vrot.slane %v349, 1
      %v633 = vsel %vm600, %v630, %v632
      %v634 = vrot.slane %v350, 1
      %v635 = vsel %vm600, %v632, %v634
      %v636 = vrot.slane %v351, 1
      %v637 = vsel %vm600, %v634, %v636
      %v638 = vrot.slane %v352, 1
      %v639 = vsel %vm600, %v636, %v638
      %v640 = vrot.slane %v353, 1
      %v641 = vsel %vm600, %v638, %v640
      %v642 = vrot.slane %v354, 1
      %v643 = vsel %vm600, %v640, %v642
      %v644 = vrot.slane %v355, 1
      %v645 = vsel %vm600, %v642, %v644
      %v646 = vrot.slane %v356, 1
      %v647 = vsel %vm600, %v644, %v646
      %v648 = vrot.slane %v357, 1
      %v649 = vsel %vm600, %v646, %v648
      %v650 = vrot.slane %v358, 1
      %v651 = vsel %vm600, %v648, %v650
      %v652 = vrot.slane %v359, 1
      %v653 = vsel %vm600, %v650, %v652
      %v654 = vrot.slane %v360, 1
      %v655 = vsel %vm600, %v652, %v654
      %v656 = vrot.slane %v361, 1
      %v657 = vsel %vm600, %v654, %v656
      %v658 = vrot.slane %v362, 1
      %v659 = vsel %vm600, %v656, %v658
      %v660 = vrot.slane %v363, 1
      %v661 = vsel %vm600, %v658, %v660
      %v662 = vrot.slane %v364, 1
      %v663 = vsel %vm600, %v660, %v662
      %664 = vrot.lane.b32.xlu0 %v603, 24
      %v665 = vpop.permute.xlu0 %664
      %666 = vrot.lane.b32.xlu0 %v605, 24
      %v667 = vpop.permute.xlu0 %666
      %668 = vrot.lane.b32.xlu0 %v607, 24
      %v669 = vpop.permute.xlu0 %668
      %670 = vrot.lane.b32.xlu0 %v609, 24
      %v671 = vpop.permute.xlu0 %670
      %672 = vrot.lane.b32.xlu0 %v611, 24
      %v673 = vpop.permute.xlu0 %672
      %674 = vrot.lane.b32.xlu0 %v613, 24
      %v675 = vpop.permute.xlu0 %674
      %676 = vrot.lane.b32.xlu0 %v615, 24
      %v677 = vpop.permute.xlu0 %676
      %678 = vrot.lane.b32.xlu0 %v617, 24
      %v679 = vpop.permute.xlu0 %678
      %680 = vrot.lane.b32.xlu0 %v619, 24
      %v681 = vpop.permute.xlu0 %680
      %682 = vrot.lane.b32.xlu0 %v621, 24
      %v683 = vpop.permute.xlu0 %682
      %684 = vrot.lane.b32.xlu0 %v623, 24
      %v685 = vpop.permute.xlu0 %684
      %686 = vrot.lane.b32.xlu0 %v625, 24
      %v687 = vpop.permute.xlu0 %686
      %688 = vrot.lane.b32.xlu0 %v627, 24
      %v689 = vpop.permute.xlu0 %688
      %690 = vrot.lane.b32.xlu0 %v629, 24
      %v691 = vpop.permute.xlu0 %690
      %692 = vrot.lane.b32.xlu0 %v631, 24
      %v693 = vpop.permute.xlu0 %692
      %694 = vrot.lane.b32.xlu0 %v633, 24
      %v695 = vpop.permute.xlu0 %694
      %696 = vrot.lane.b32.xlu0 %v635, 24
      %v697 = vpop.permute.xlu0 %696
      %698 = vrot.lane.b32.xlu0 %v637, 24
      %v699 = vpop.permute.xlu0 %698
      %700 = vrot.lane.b32.xlu0 %v639, 24
      %v701 = vpop.permute.xlu0 %700
      %702 = vrot.lane.b32.xlu0 %v641, 24
      %v703 = vpop.permute.xlu0 %702
      %704 = vrot.lane.b32.xlu0 %v643, 24
      %v705 = vpop.permute.xlu0 %704
      %706 = vrot.lane.b32.xlu0 %v645, 24
      %v707 = vpop.permute.xlu0 %706
      %708 = vrot.lane.b32.xlu0 %v647, 24
      %v709 = vpop.permute.xlu0 %708
      %710 = vrot.lane.b32.xlu0 %v649, 24
      %v711 = vpop.permute.xlu0 %710
      %712 = vrot.lane.b32.xlu0 %v651, 24
      %v713 = vpop.permute.xlu0 %712
      %714 = vrot.lane.b32.xlu0 %v653, 24
      %v715 = vpop.permute.xlu0 %714
      %716 = vrot.lane.b32.xlu0 %v655, 24
      %v717 = vpop.permute.xlu0 %716
      %718 = vrot.lane.b32.xlu0 %v657, 24
      %v719 = vpop.permute.xlu0 %718
      %720 = vrot.lane.b32.xlu0 %v659, 24
      %v721 = vpop.permute.xlu0 %720
      %722 = vrot.lane.b32.xlu0 %v661, 24
      %v723 = vpop.permute.xlu0 %722
      %724 = vrot.lane.b32.xlu0 %v663, 24
      %v725 = vpop.permute.xlu0 %724
      %v757 = vrot.slane %v365, 1
      %v758 = vsel %vm600, %v662, %v757
      %v759 = vrot.slane %v366, 1
      %v760 = vsel %vm600, %v757, %v759
      %761 = vrot.lane.b32.xlu0 %v607, 32
      %v762 = vpop.permute.xlu0 %761
      %763 = vrot.lane.b32.xlu0 %v609, 32
      %v764 = vpop.permute.xlu0 %763
      %765 = vrot.lane.b32.xlu0 %v611, 32
      %v766 = vpop.permute.xlu0 %765
      %767 = vrot.lane.b32.xlu0 %v613, 32
      %v768 = vpop.permute.xlu0 %767
      %769 = vrot.lane.b32.xlu0 %v615, 32
      %v770 = vpop.permute.xlu0 %769
      %771 = vrot.lane.b32.xlu0 %v617, 32
      %v772 = vpop.permute.xlu0 %771
      %773 = vrot.lane.b32.xlu0 %v619, 32
      %v774 = vpop.permute.xlu0 %773
      %775 = vrot.lane.b32.xlu0 %v621, 32
      %v776 = vpop.permute.xlu0 %775
      %777 = vrot.lane.b32.xlu0 %v623, 32
      %v778 = vpop.permute.xlu0 %777
      %779 = vrot.lane.b32.xlu0 %v625, 32
      %v780 = vpop.permute.xlu0 %779
      %781 = vrot.lane.b32.xlu0 %v627, 32
      %v782 = vpop.permute.xlu0 %781
      %783 = vrot.lane.b32.xlu0 %v629, 32
      %v784 = vpop.permute.xlu0 %783
      %785 = vrot.lane.b32.xlu0 %v631, 32
      %v786 = vpop.permute.xlu0 %785
      %787 = vrot.lane.b32.xlu0 %v633, 32
      %v788 = vpop.permute.xlu0 %787
      %789 = vrot.lane.b32.xlu0 %v635, 32
      %v790 = vpop.permute.xlu0 %789
      %791 = vrot.lane.b32.xlu0 %v637, 32
      %v792 = vpop.permute.xlu0 %791
      %793 = vrot.lane.b32.xlu0 %v639, 32
      %v794 = vpop.permute.xlu0 %793
      %795 = vrot.lane.b32.xlu0 %v641, 32
      %v796 = vpop.permute.xlu0 %795
      %797 = vrot.lane.b32.xlu0 %v643, 32
      %v798 = vpop.permute.xlu0 %797
      %799 = vrot.lane.b32.xlu0 %v645, 32
      %v800 = vpop.permute.xlu0 %799
      %801 = vrot.lane.b32.xlu0 %v647, 32
      %v802 = vpop.permute.xlu0 %801
      %803 = vrot.lane.b32.xlu0 %v649, 32
      %v804 = vpop.permute.xlu0 %803
      %805 = vrot.lane.b32.xlu0 %v651, 32
      %v806 = vpop.permute.xlu0 %805
      %807 = vrot.lane.b32.xlu0 %v653, 32
      %v808 = vpop.permute.xlu0 %807
      %809 = vrot.lane.b32.xlu0 %v655, 32
      %v810 = vpop.permute.xlu0 %809
      %811 = vrot.lane.b32.xlu0 %v657, 32
      %v812 = vpop.permute.xlu0 %811
      %813 = vrot.lane.b32.xlu0 %v659, 32
      %v814 = vpop.permute.xlu0 %813
      %815 = vrot.lane.b32.xlu0 %v661, 32
      %v816 = vpop.permute.xlu0 %815
      %817 = vrot.lane.b32.xlu0 %v663, 32
      %v818 = vpop.permute.xlu0 %817
      %819 = vrot.lane.b32.xlu0 %v758, 32
      %v820 = vpop.permute.xlu0 %819
      %821 = vrot.lane.b32.xlu0 %v760, 32
      %v822 = vpop.permute.xlu0 %821
      %v855 = vrot.slane %v367, 1
      %v856 = vsel %vm600, %v759, %v855
      %v857 = vrot.slane %v368, 1
      %v858 = vsel %vm600, %v855, %v857
      %859 = vrot.lane.b32.xlu0 %v611, 40
      %v860 = vpop.permute.xlu0 %859
      %861 = vrot.lane.b32.xlu0 %v613, 40
      %v862 = vpop.permute.xlu0 %861
      %863 = vrot.lane.b32.xlu0 %v615, 40
      %v864 = vpop.permute.xlu0 %863
      %865 = vrot.lane.b32.xlu0 %v617, 40
      %v866 = vpop.permute.xlu0 %865
      %867 = vrot.lane.b32.xlu0 %v619, 40
      %v868 = vpop.permute.xlu0 %867
      %869 = vrot.lane.b32.xlu0 %v621, 40
      %v870 = vpop.permute.xlu0 %869
      %871 = vrot.lane.b32.xlu0 %v623, 40
      %v872 = vpop.permute.xlu0 %871
      %873 = vrot.lane.b32.xlu0 %v625, 40
      %v874 = vpop.permute.xlu0 %873
      %875 = vrot.lane.b32.xlu0 %v627, 40
      %v876 = vpop.permute.xlu0 %875
      %877 = vrot.lane.b32.xlu0 %v629, 40
      %v878 = vpop.permute.xlu0 %877
      %879 = vrot.lane.b32.xlu0 %v631, 40
      %v880 = vpop.permute.xlu0 %879
      %881 = vrot.lane.b32.xlu0 %v633, 40
      %v882 = vpop.permute.xlu0 %881
      %883 = vrot.lane.b32.xlu0 %v635, 40
      %v884 = vpop.permute.xlu0 %883
      %885 = vrot.lane.b32.xlu0 %v637, 40
      %v886 = vpop.permute.xlu0 %885
      %887 = vrot.lane.b32.xlu0 %v639, 40
      %v888 = vpop.permute.xlu0 %887
      %889 = vrot.lane.b32.xlu0 %v641, 40
      %v890 = vpop.permute.xlu0 %889
      %891 = vrot.lane.b32.xlu0 %v643, 40
      %v892 = vpop.permute.xlu0 %891
      %893 = vrot.lane.b32.xlu0 %v645, 40
      %v894 = vpop.permute.xlu0 %893
      %895 = vrot.lane.b32.xlu0 %v647, 40
      %v896 = vpop.permute.xlu0 %895
      %897 = vrot.lane.b32.xlu0 %v649, 40
      %v898 = vpop.permute.xlu0 %897
      %899 = vrot.lane.b32.xlu0 %v651, 40
      %v900 = vpop.permute.xlu0 %899
      %901 = vrot.lane.b32.xlu0 %v653, 40
      %v902 = vpop.permute.xlu0 %901
      %903 = vrot.lane.b32.xlu0 %v655, 40
      %v904 = vpop.permute.xlu0 %903
      %905 = vrot.lane.b32.xlu0 %v657, 40
      %v906 = vpop.permute.xlu0 %905
      %907 = vrot.lane.b32.xlu0 %v659, 40
      %v908 = vpop.permute.xlu0 %907
      %909 = vrot.lane.b32.xlu0 %v661, 40
      %v910 = vpop.permute.xlu0 %909
      %911 = vrot.lane.b32.xlu0 %v663, 40
      %v912 = vpop.permute.xlu0 %911
      %913 = vrot.lane.b32.xlu0 %v758, 40
      %v914 = vpop.permute.xlu0 %913
      %915 = vrot.lane.b32.xlu0 %v760, 40
      %v916 = vpop.permute.xlu0 %915
      %917 = vrot.lane.b32.xlu0 %v856, 40
      %v918 = vpop.permute.xlu0 %917
      %919 = vrot.lane.b32.xlu0 %v858, 40
      %v920 = vpop.permute.xlu0 %919
      %vm952 = vcmask 1045504
      %v953 = vrot.slane %v333, 2
      %v954 = vrot.slane %v334, 2
      %v955 = vsel %vm952, %v953, %v954
      %v956 = vrot.slane %v335, 2
      %v957 = vsel %vm952, %v954, %v956
      %v958 = vrot.slane %v336, 2
      %v959 = vsel %vm952, %v956, %v958
      %v960 = vrot.slane %v337, 2
      %v961 = vsel %vm952, %v958, %v960
      %v962 = vrot.slane %v338, 2
      %v963 = vsel %vm952, %v960, %v962
      %v964 = vrot.slane %v339, 2
      %v965 = vsel %vm952, %v962, %v964
      %v966 = vrot.slane %v340, 2
      %v967 = vsel %vm952, %v964, %v966
      %v968 = vrot.slane %v341, 2
      %v969 = vsel %vm952, %v966, %v968
      %v970 = vrot.slane %v342, 2
      %v971 = vsel %vm952, %v968, %v970
      %v972 = vrot.slane %v343, 2
      %v973 = vsel %vm952, %v970, %v972
      %v974 = vrot.slane %v344, 2
      %v975 = vsel %vm952, %v972, %v974
      %v976 = vrot.slane %v345, 2
      %v977 = vsel %vm952, %v974, %v976
      %v978 = vrot.slane %v346, 2
      %v979 = vsel %vm952, %v976, %v978
      %v980 = vrot.slane %v347, 2
      %v981 = vsel %vm952, %v978, %v980
      %v982 = vrot.slane %v348, 2
      %v983 = vsel %vm952, %v980, %v982
      %v984 = vrot.slane %v349, 2
      %v985 = vsel %vm952, %v982, %v984
      %v986 = vrot.slane %v350, 2
      %v987 = vsel %vm952, %v984, %v986
      %v988 = vrot.slane %v351, 2
      %v989 = vsel %vm952, %v986, %v988
      %v990 = vrot.slane %v352, 2
      %v991 = vsel %vm952, %v988, %v990
      %v992 = vrot.slane %v353, 2
      %v993 = vsel %vm952, %v990, %v992
      %v994 = vrot.slane %v354, 2
      %v995 = vsel %vm952, %v992, %v994
      %v996 = vrot.slane %v355, 2
      %v997 = vsel %vm952, %v994, %v996
      %v998 = vrot.slane %v356, 2
      %v999 = vsel %vm952, %v996, %v998
      %v1000 = vrot.slane %v357, 2
      %v1001 = vsel %vm952, %v998, %v1000
      %v1002 = vrot.slane %v358, 2
      %v1003 = vsel %vm952, %v1000, %v1002
      %v1004 = vrot.slane %v359, 2
      %v1005 = vsel %vm952, %v1002, %v1004
      %v1006 = vrot.slane %v360, 2
      %v1007 = vsel %vm952, %v1004, %v1006
      %v1008 = vrot.slane %v361, 2
      %v1009 = vsel %vm952, %v1006, %v1008
      %v1010 = vrot.slane %v362, 2
      %v1011 = vsel %vm952, %v1008, %v1010
      %v1012 = vrot.slane %v363, 2
      %v1013 = vsel %vm952, %v1010, %v1012
      %v1014 = vrot.slane %v364, 2
      %v1015 = vsel %vm952, %v1012, %v1014
      %1016 = vrot.lane.b32.xlu0 %v955, 48
      %v1017 = vpop.permute.xlu0 %1016
      %1018 = vrot.lane.b32.xlu0 %v957, 48
      %v1019 = vpop.permute.xlu0 %1018
      %1020 = vrot.lane.b32.xlu0 %v959, 48
      %v1021 = vpop.permute.xlu0 %1020
      %1022 = vrot.lane.b32.xlu0 %v961, 48
      %v1023 = vpop.permute.xlu0 %1022
      %1024 = vrot.lane.b32.xlu0 %v963, 48
      %v1025 = vpop.permute.xlu0 %1024
      %1026 = vrot.lane.b32.xlu0 %v965, 48
      %v1027 = vpop.permute.xlu0 %1026
      %1028 = vrot.lane.b32.xlu0 %v967, 48
      %v1029 = vpop.permute.xlu0 %1028
      %1030 = vrot.lane.b32.xlu0 %v969, 48
      %v1031 = vpop.permute.xlu0 %1030
      %1032 = vrot.lane.b32.xlu0 %v971, 48
      %v1033 = vpop.permute.xlu0 %1032
      %1034 = vrot.lane.b32.xlu0 %v973, 48
      %v1035 = vpop.permute.xlu0 %1034
      %1036 = vrot.lane.b32.xlu0 %v975, 48
      %v1037 = vpop.permute.xlu0 %1036
      %1038 = vrot.lane.b32.xlu0 %v977, 48
      %v1039 = vpop.permute.xlu0 %1038
      %1040 = vrot.lane.b32.xlu0 %v979, 48
      %v1041 = vpop.permute.xlu0 %1040
      %1042 = vrot.lane.b32.xlu0 %v981, 48
      %v1043 = vpop.permute.xlu0 %1042
      %1044 = vrot.lane.b32.xlu0 %v983, 48
      %v1045 = vpop.permute.xlu0 %1044
      %1046 = vrot.lane.b32.xlu0 %v985, 48
      %v1047 = vpop.permute.xlu0 %1046
      %1048 = vrot.lane.b32.xlu0 %v987, 48
      %v1049 = vpop.permute.xlu0 %1048
      %1050 = vrot.lane.b32.xlu0 %v989, 48
      %v1051 = vpop.permute.xlu0 %1050
      %1052 = vrot.lane.b32.xlu0 %v991, 48
      %v1053 = vpop.permute.xlu0 %1052
      %1054 = vrot.lane.b32.xlu0 %v993, 48
      %v1055 = vpop.permute.xlu0 %1054
      %1056 = vrot.lane.b32.xlu0 %v995, 48
      %v1057 = vpop.permute.xlu0 %1056
      %1058 = vrot.lane.b32.xlu0 %v997, 48
      %v1059 = vpop.permute.xlu0 %1058
      %1060 = vrot.lane.b32.xlu0 %v999, 48
      %v1061 = vpop.permute.xlu0 %1060
      %1062 = vrot.lane.b32.xlu0 %v1001, 48
      %v1063 = vpop.permute.xlu0 %1062
      %1064 = vrot.lane.b32.xlu0 %v1003, 48
      %v1065 = vpop.permute.xlu0 %1064
      %1066 = vrot.lane.b32.xlu0 %v1005, 48
      %v1067 = vpop.permute.xlu0 %1066
      %1068 = vrot.lane.b32.xlu0 %v1007, 48
      %v1069 = vpop.permute.xlu0 %1068
      %1070 = vrot.lane.b32.xlu0 %v1009, 48
      %v1071 = vpop.permute.xlu0 %1070
      %1072 = vrot.lane.b32.xlu0 %v1011, 48
      %v1073 = vpop.permute.xlu0 %1072
      %1074 = vrot.lane.b32.xlu0 %v1013, 48
      %v1075 = vpop.permute.xlu0 %1074
      %1076 = vrot.lane.b32.xlu0 %v1015, 48
      %v1077 = vpop.permute.xlu0 %1076
      %v1109 = vrot.slane %v365, 2
      %v1110 = vsel %vm952, %v1014, %v1109
      %v1111 = vrot.slane %v366, 2
      %v1112 = vsel %vm952, %v1109, %v1111
      %1113 = vrot.lane.b32.xlu0 %v959, 56
      %v1114 = vpop.permute.xlu0 %1113
      %1115 = vrot.lane.b32.xlu0 %v961, 56
      %v1116 = vpop.permute.xlu0 %1115
      %1117 = vrot.lane.b32.xlu0 %v963, 56
      %v1118 = vpop.permute.xlu0 %1117
      %1119 = vrot.lane.b32.xlu0 %v965, 56
      %v1120 = vpop.permute.xlu0 %1119
      %1121 = vrot.lane.b32.xlu0 %v967, 56
      %v1122 = vpop.permute.xlu0 %1121
      %1123 = vrot.lane.b32.xlu0 %v969, 56
      %v1124 = vpop.permute.xlu0 %1123
      %1125 = vrot.lane.b32.xlu0 %v971, 56
      %v1126 = vpop.permute.xlu0 %1125
      %1127 = vrot.lane.b32.xlu0 %v973, 56
      %v1128 = vpop.permute.xlu0 %1127
      %1129 = vrot.lane.b32.xlu0 %v975, 56
      %v1130 = vpop.permute.xlu0 %1129
      %1131 = vrot.lane.b32.xlu0 %v977, 56
      %v1132 = vpop.permute.xlu0 %1131
      %1133 = vrot.lane.b32.xlu0 %v979, 56
      %v1134 = vpop.permute.xlu0 %1133
      %1135 = vrot.lane.b32.xlu0 %v981, 56
      %v1136 = vpop.permute.xlu0 %1135
      %1137 = vrot.lane.b32.xlu0 %v983, 56
      %v1138 = vpop.permute.xlu0 %1137
      %1139 = vrot.lane.b32.xlu0 %v985, 56
      %v1140 = vpop.permute.xlu0 %1139
      %1141 = vrot.lane.b32.xlu0 %v987, 56
      %v1142 = vpop.permute.xlu0 %1141
      %1143 = vrot.lane.b32.xlu0 %v989, 56
      %v1144 = vpop.permute.xlu0 %1143
      %1145 = vrot.lane.b32.xlu0 %v991, 56
      %v1146 = vpop.permute.xlu0 %1145
      %1147 = vrot.lane.b32.xlu0 %v993, 56
      %v1148 = vpop.permute.xlu0 %1147
      %1149 = vrot.lane.b32.xlu0 %v995, 56
      %v1150 = vpop.permute.xlu0 %1149
      %1151 = vrot.lane.b32.xlu0 %v997, 56
      %v1152 = vpop.permute.xlu0 %1151
      %1153 = vrot.lane.b32.xlu0 %v999, 56
      %v1154 = vpop.permute.xlu0 %1153
      %1155 = vrot.lane.b32.xlu0 %v1001, 56
      %v1156 = vpop.permute.xlu0 %1155
      %1157 = vrot.lane.b32.xlu0 %v1003, 56
      %v1158 = vpop.permute.xlu0 %1157
      %1159 = vrot.lane.b32.xlu0 %v1005, 56
      %v1160 = vpop.permute.xlu0 %1159
      %1161 = vrot.lane.b32.xlu0 %v1007, 56
      %v1162 = vpop.permute.xlu0 %1161
      %1163 = vrot.lane.b32.xlu0 %v1009, 56
      %v1164 = vpop.permute.xlu0 %1163
      %1165 = vrot.lane.b32.xlu0 %v1011, 56
      %v1166 = vpop.permute.xlu0 %1165
      %1167 = vrot.lane.b32.xlu0 %v1013, 56
      %v1168 = vpop.permute.xlu0 %1167
      %1169 = vrot.lane.b32.xlu0 %v1015, 56
      %v1170 = vpop.permute.xlu0 %1169
      %1171 = vrot.lane.b32.xlu0 %v1110, 56
      %v1172 = vpop.permute.xlu0 %1171
      %1173 = vrot.lane.b32.xlu0 %v1112, 56
      %v1174 = vpop.permute.xlu0 %1173
      %v1206 = vrot.slane %v367, 2
      %v1207 = vsel %vm952, %v1111, %v1206
      %v1208 = vrot.slane %v368, 2
      %v1209 = vsel %vm952, %v1206, %v1208
      %1210 = vrot.lane.b32.xlu0 %v963, 64
      %v1211 = vpop.permute.xlu0 %1210
      %1212 = vrot.lane.b32.xlu0 %v965, 64
      %v1213 = vpop.permute.xlu0 %1212
      %1214 = vrot.lane.b32.xlu0 %v967, 64
      %v1215 = vpop.permute.xlu0 %1214
      %1216 = vrot.lane.b32.xlu0 %v969, 64
      %v1217 = vpop.permute.xlu0 %1216
      %1218 = vrot.lane.b32.xlu0 %v971, 64
      %v1219 = vpop.permute.xlu0 %1218
      %1220 = vrot.lane.b32.xlu0 %v973, 64
      %v1221 = vpop.permute.xlu0 %1220
      %1222 = vrot.lane.b32.xlu0 %v975, 64
      %v1223 = vpop.permute.xlu0 %1222
      %1224 = vrot.lane.b32.xlu0 %v977, 64
      %v1225 = vpop.permute.xlu0 %1224
      %1226 = vrot.lane.b32.xlu0 %v979, 64
      %v1227 = vpop.permute.xlu0 %1226
      %1228 = vrot.lane.b32.xlu0 %v981, 64
      %v1229 = vpop.permute.xlu0 %1228
      %1230 = vrot.lane.b32.xlu0 %v983, 64
      %v1231 = vpop.permute.xlu0 %1230
      %1232 = vrot.lane.b32.xlu0 %v985, 64
      %v1233 = vpop.permute.xlu0 %1232
      %1234 = vrot.lane.b32.xlu0 %v987, 64
      %v1235 = vpop.permute.xlu0 %1234
      %1236 = vrot.lane.b32.xlu0 %v989, 64
      %v1237 = vpop.permute.xlu0 %1236
      %1238 = vrot.lane.b32.xlu0 %v991, 64
      %v1239 = vpop.permute.xlu0 %1238
      %1240 = vrot.lane.b32.xlu0 %v993, 64
      %v1241 = vpop.permute.xlu0 %1240
      %1242 = vrot.lane.b32.xlu0 %v995, 64
      %v1243 = vpop.permute.xlu0 %1242
      %1244 = vrot.lane.b32.xlu0 %v997, 64
      %v1245 = vpop.permute.xlu0 %1244
      %1246 = vrot.lane.b32.xlu0 %v999, 64
      %v1247 = vpop.permute.xlu0 %1246
      %1248 = vrot.lane.b32.xlu0 %v1001, 64
      %v1249 = vpop.permute.xlu0 %1248
      %1250 = vrot.lane.b32.xlu0 %v1003, 64
      %v1251 = vpop.permute.xlu0 %1250
      %1252 = vrot.lane.b32.xlu0 %v1005, 64
      %v1253 = vpop.permute.xlu0 %1252
      %1254 = vrot.lane.b32.xlu0 %v1007, 64
      %v1255 = vpop.permute.xlu0 %1254
      %1256 = vrot.lane.b32.xlu0 %v1009, 64
      %v1257 = vpop.permute.xlu0 %1256
      %1258 = vrot.lane.b32.xlu0 %v1011, 64
      %v1259 = vpop.permute.xlu0 %1258
      %1260 = vrot.lane.b32.xlu0 %v1013, 64
      %v1261 = vpop.permute.xlu0 %1260
      %1262 = vrot.lane.b32.xlu0 %v1015, 64
      %v1263 = vpop.permute.xlu0 %1262
      %1264 = vrot.lane.b32.xlu0 %v1110, 64
      %v1265 = vpop.permute.xlu0 %1264
      %1266 = vrot.lane.b32.xlu0 %v1112, 64
      %v1267 = vpop.permute.xlu0 %1266
      %1268 = vrot.lane.b32.xlu0 %v1207, 64
      %v1269 = vpop.permute.xlu0 %1268
      %1270 = vrot.lane.b32.xlu0 %v1209, 64
      %v1271 = vpop.permute.xlu0 %1270
      %vm1303 = vcmask 64512
      %v1304 = vsel %vm1303, %v333, %v411
      %v1305 = vsel %vm1303, %v334, %v413
      %v1306 = vsel %vm1303, %v335, %v415
      %v1307 = vsel %vm1303, %v336, %v417
      %v1308 = vsel %vm1303, %v337, %v419
      %v1309 = vsel %vm1303, %v338, %v421
      %v1310 = vsel %vm1303, %v339, %v423
      %v1311 = vsel %vm1303, %v340, %v425
      %v1312 = vsel %vm1303, %v341, %v427
      %v1313 = vsel %vm1303, %v342, %v429
      %v1314 = vsel %vm1303, %v343, %v431
      %v1315 = vsel %vm1303, %v344, %v433
      %v1316 = vsel %vm1303, %v345, %v435
      %v1317 = vsel %vm1303, %v346, %v437
      %v1318 = vsel %vm1303, %v347, %v439
      %v1319 = vsel %vm1303, %v348, %v441
      %v1320 = vsel %vm1303, %v349, %v443
      %v1321 = vsel %vm1303, %v350, %v445
      %v1322 = vsel %vm1303, %v351, %v447
      %v1323 = vsel %vm1303, %v352, %v449
      %v1324 = vsel %vm1303, %v353, %v451
      %v1325 = vsel %vm1303, %v354, %v453
      %v1326 = vsel %vm1303, %v355, %v455
      %v1327 = vsel %vm1303, %v356, %v457
      %v1328 = vsel %vm1303, %v357, %v459
      %v1329 = vsel %vm1303, %v358, %v461
      %v1330 = vsel %vm1303, %v359, %v463
      %v1331 = vsel %vm1303, %v360, %v465
      %v1332 = vsel %vm1303, %v361, %v467
      %v1333 = vsel %vm1303, %v362, %v469
      %v1334 = vsel %vm1303, %v363, %v471
      %vm1335 = vcmask 130048
      %v1336 = vsel %vm1335, %v1304, %v506
      %v1337 = vsel %vm1335, %v1305, %v508
      %v1338 = vsel %vm1335, %v1306, %v510
      %v1339 = vsel %vm1335, %v1307, %v512
      %v1340 = vsel %vm1335, %v1308, %v514
      %v1341 = vsel %vm1335, %v1309, %v516
      %v1342 = vsel %vm1335, %v1310, %v518
      %v1343 = vsel %vm1335, %v1311, %v520
      %v1344 = vsel %vm1335, %v1312, %v522
      %v1345 = vsel %vm1335, %v1313, %v524
      %v1346 = vsel %vm1335, %v1314, %v526
      %v1347 = vsel %vm1335, %v1315, %v528
      %v1348 = vsel %vm1335, %v1316, %v530
      %v1349 = vsel %vm1335, %v1317, %v532
      %v1350 = vsel %vm1335, %v1318, %v534
      %v1351 = vsel %vm1335, %v1319, %v536
      %v1352 = vsel %vm1335, %v1320, %v538
      %v1353 = vsel %vm1335, %v1321, %v540
      %v1354 = vsel %vm1335, %v1322, %v542
      %v1355 = vsel %vm1335, %v1323, %v544
      %v1356 = vsel %vm1335, %v1324, %v546
      %v1357 = vsel %vm1335, %v1325, %v548
      %v1358 = vsel %vm1335, %v1326, %v550
      %v1359 = vsel %vm1335, %v1327, %v552
      %v1360 = vsel %vm1335, %v1328, %v554
      %v1361 = vsel %vm1335, %v1329, %v556
      %v1362 = vsel %vm1335, %v1330, %v558
      %v1363 = vsel %vm1335, %v1331, %v560
      %v1364 = vsel %vm1335, %v1332, %v562
      %v1365 = vsel %vm1335, %v1333, %v564
      %v1366 = vsel %vm1335, %v1334, %v566
      %vm1367 = vcmask 195584
      %v1368 = vsel %vm1367, %v1336, %v665
      %v1369 = vsel %vm1367, %v1337, %v667
      %v1370 = vsel %vm1367, %v1338, %v669
      %v1371 = vsel %vm1367, %v1339, %v671
      %v1372 = vsel %vm1367, %v1340, %v673
      %v1373 = vsel %vm1367, %v1341, %v675
      %v1374 = vsel %vm1367, %v1342, %v677
      %v1375 = vsel %vm1367, %v1343, %v679
      %v1376 = vsel %vm1367, %v1344, %v681
      %v1377 = vsel %vm1367, %v1345, %v683
      %v1378 = vsel %vm1367, %v1346, %v685
      %v1379 = vsel %vm1367, %v1347, %v687
      %v1380 = vsel %vm1367, %v1348, %v689
      %v1381 = vsel %vm1367, %v1349, %v691
      %v1382 = vsel %vm1367, %v1350, %v693
      %v1383 = vsel %vm1367, %v1351, %v695
      %v1384 = vsel %vm1367, %v1352, %v697
      %v1385 = vsel %vm1367, %v1353, %v699
      %v1386 = vsel %vm1367, %v1354, %v701
      %v1387 = vsel %vm1367, %v1355, %v703
      %v1388 = vsel %vm1367, %v1356, %v705
      %v1389 = vsel %vm1367, %v1357, %v707
      %v1390 = vsel %vm1367, %v1358, %v709
      %v1391 = vsel %vm1367, %v1359, %v711
      %v1392 = vsel %vm1367, %v1360, %v713
      %v1393 = vsel %vm1367, %v1361, %v715
      %v1394 = vsel %vm1367, %v1362, %v717
      %v1395 = vsel %vm1367, %v1363, %v719
      %v1396 = vsel %vm1367, %v1364, %v721
      %v1397 = vsel %vm1367, %v1365, %v723
      %v1398 = vsel %vm1367, %v1366, %v725
      %vm1399 = vcmask 261120
      %v1400 = vsel %vm1399, %v1368, %v762
      %v1401 = vsel %vm1399, %v1369, %v764
      %v1402 = vsel %vm1399, %v1370, %v766
      %v1403 = vsel %vm1399, %v1371, %v768
      %v1404 = vsel %vm1399, %v1372, %v770
      %v1405 = vsel %vm1399, %v1373, %v772
      %v1406 = vsel %vm1399, %v1374, %v774
      %v1407 = vsel %vm1399, %v1375, %v776
      %v1408 = vsel %vm1399, %v1376, %v778
      %v1409 = vsel %vm1399, %v1377, %v780
      %v1410 = vsel %vm1399, %v1378, %v782
      %v1411 = vsel %vm1399, %v1379, %v784
      %v1412 = vsel %vm1399, %v1380, %v786
      %v1413 = vsel %vm1399, %v1381, %v788
      %v1414 = vsel %vm1399, %v1382, %v790
      %v1415 = vsel %vm1399, %v1383, %v792
      %v1416 = vsel %vm1399, %v1384, %v794
      %v1417 = vsel %vm1399, %v1385, %v796
      %v1418 = vsel %vm1399, %v1386, %v798
      %v1419 = vsel %vm1399, %v1387, %v800
      %v1420 = vsel %vm1399, %v1388, %v802
      %v1421 = vsel %vm1399, %v1389, %v804
      %v1422 = vsel %vm1399, %v1390, %v806
      %v1423 = vsel %vm1399, %v1391, %v808
      %v1424 = vsel %vm1399, %v1392, %v810
      %v1425 = vsel %vm1399, %v1393, %v812
      %v1426 = vsel %vm1399, %v1394, %v814
      %v1427 = vsel %vm1399, %v1395, %v816
      %v1428 = vsel %vm1399, %v1396, %v818
      %v1429 = vsel %vm1399, %v1397, %v820
      %v1430 = vsel %vm1399, %v1398, %v822
      %vm1431 = vcmask 326656
      %v1432 = vsel %vm1431, %v1400, %v860
      %v1433 = vsel %vm1431, %v1401, %v862
      %v1434 = vsel %vm1431, %v1402, %v864
      %v1435 = vsel %vm1431, %v1403, %v866
      %v1436 = vsel %vm1431, %v1404, %v868
      %v1437 = vsel %vm1431, %v1405, %v870
      %v1438 = vsel %vm1431, %v1406, %v872
      %v1439 = vsel %vm1431, %v1407, %v874
      %v1440 = vsel %vm1431, %v1408, %v876
      %v1441 = vsel %vm1431, %v1409, %v878
      %v1442 = vsel %vm1431, %v1410, %v880
      %v1443 = vsel %vm1431, %v1411, %v882
      %v1444 = vsel %vm1431, %v1412, %v884
      %v1445 = vsel %vm1431, %v1413, %v886
      %v1446 = vsel %vm1431, %v1414, %v888
      %v1447 = vsel %vm1431, %v1415, %v890
      %v1448 = vsel %vm1431, %v1416, %v892
      %v1449 = vsel %vm1431, %v1417, %v894
      %v1450 = vsel %vm1431, %v1418, %v896
      %v1451 = vsel %vm1431, %v1419, %v898
      %v1452 = vsel %vm1431, %v1420, %v900
      %v1453 = vsel %vm1431, %v1421, %v902
      %v1454 = vsel %vm1431, %v1422, %v904
      %v1455 = vsel %vm1431, %v1423, %v906
      %v1456 = vsel %vm1431, %v1424, %v908
      %v1457 = vsel %vm1431, %v1425, %v910
      %v1458 = vsel %vm1431, %v1426, %v912
      %v1459 = vsel %vm1431, %v1427, %v914
      %v1460 = vsel %vm1431, %v1428, %v916
      %v1461 = vsel %vm1431, %v1429, %v918
      %v1462 = vsel %vm1431, %v1430, %v920
      %vm1463 = vcmask 392192
      %v1464 = vsel %vm1463, %v1432, %v1017
      %v1465 = vsel %vm1463, %v1433, %v1019
      %v1466 = vsel %vm1463, %v1434, %v1021
      %v1467 = vsel %vm1463, %v1435, %v1023
      %v1468 = vsel %vm1463, %v1436, %v1025
      %v1469 = vsel %vm1463, %v1437, %v1027
      %v1470 = vsel %vm1463, %v1438, %v1029
      %v1471 = vsel %vm1463, %v1439, %v1031
      %v1472 = vsel %vm1463, %v1440, %v1033
      %v1473 = vsel %vm1463, %v1441, %v1035
      %v1474 = vsel %vm1463, %v1442, %v1037
      %v1475 = vsel %vm1463, %v1443, %v1039
      %v1476 = vsel %vm1463, %v1444, %v1041
      %v1477 = vsel %vm1463, %v1445, %v1043
      %v1478 = vsel %vm1463, %v1446, %v1045
      %v1479 = vsel %vm1463, %v1447, %v1047
      %v1480 = vsel %vm1463, %v1448, %v1049
      %v1481 = vsel %vm1463, %v1449, %v1051
      %v1482 = vsel %vm1463, %v1450, %v1053
      %v1483 = vsel %vm1463, %v1451, %v1055
      %v1484 = vsel %vm1463, %v1452, %v1057
      %v1485 = vsel %vm1463, %v1453, %v1059
      %v1486 = vsel %vm1463, %v1454, %v1061
      %v1487 = vsel %vm1463, %v1455, %v1063
      %v1488 = vsel %vm1463, %v1456, %v1065
      %v1489 = vsel %vm1463, %v1457, %v1067
      %v1490 = vsel %vm1463, %v1458, %v1069
      %v1491 = vsel %vm1463, %v1459, %v1071
      %v1492 = vsel %vm1463, %v1460, %v1073
      %v1493 = vsel %vm1463, %v1461, %v1075
      %v1494 = vsel %vm1463, %v1462, %v1077
      %vm1495 = vcmask 457728
      %v1496 = vsel %vm1495, %v1464, %v1114
      %v1497 = vsel %vm1495, %v1465, %v1116
      %v1498 = vsel %vm1495, %v1466, %v1118
      %v1499 = vsel %vm1495, %v1467, %v1120
      %v1500 = vsel %vm1495, %v1468, %v1122
      %v1501 = vsel %vm1495, %v1469, %v1124
      %v1502 = vsel %vm1495, %v1470, %v1126
      %v1503 = vsel %vm1495, %v1471, %v1128
      %v1504 = vsel %vm1495, %v1472, %v1130
      %v1505 = vsel %vm1495, %v1473, %v1132
      %v1506 = vsel %vm1495, %v1474, %v1134
      %v1507 = vsel %vm1495, %v1475, %v1136
      %v1508 = vsel %vm1495, %v1476, %v1138
      %v1509 = vsel %vm1495, %v1477, %v1140
      %v1510 = vsel %vm1495, %v1478, %v1142
      %v1511 = vsel %vm1495, %v1479, %v1144
      %v1512 = vsel %vm1495, %v1480, %v1146
      %v1513 = vsel %vm1495, %v1481, %v1148
      %v1514 = vsel %vm1495, %v1482, %v1150
      %v1515 = vsel %vm1495, %v1483, %v1152
      %v1516 = vsel %vm1495, %v1484, %v1154
      %v1517 = vsel %vm1495, %v1485, %v1156
      %v1518 = vsel %vm1495, %v1486, %v1158
      %v1519 = vsel %vm1495, %v1487, %v1160
      %v1520 = vsel %vm1495, %v1488, %v1162
      %v1521 = vsel %vm1495, %v1489, %v1164
      %v1522 = vsel %vm1495, %v1490, %v1166
      %v1523 = vsel %vm1495, %v1491, %v1168
      %v1524 = vsel %vm1495, %v1492, %v1170
      %v1525 = vsel %vm1495, %v1493, %v1172
      %v1526 = vsel %vm1495, %v1494, %v1174
      %vm1527 = vcmask 523264
      %v1528 = vsel %vm1527, %v1496, %v1211
      %v1529 = vsel %vm1527, %v1497, %v1213
      %v1530 = vsel %vm1527, %v1498, %v1215
      %v1531 = vsel %vm1527, %v1499, %v1217
      %v1532 = vsel %vm1527, %v1500, %v1219
      %v1533 = vsel %vm1527, %v1501, %v1221
      %v1534 = vsel %vm1527, %v1502, %v1223
      %v1535 = vsel %vm1527, %v1503, %v1225
      %v1536 = vsel %vm1527, %v1504, %v1227
      %v1537 = vsel %vm1527, %v1505, %v1229
      %v1538 = vsel %vm1527, %v1506, %v1231
      %v1539 = vsel %vm1527, %v1507, %v1233
      %v1540 = vsel %vm1527, %v1508, %v1235
      %v1541 = vsel %vm1527, %v1509, %v1237
      %v1542 = vsel %vm1527, %v1510, %v1239
      %v1543 = vsel %vm1527, %v1511, %v1241
      %v1544 = vsel %vm1527, %v1512, %v1243
      %v1545 = vsel %vm1527, %v1513, %v1245
      %v1546 = vsel %vm1527, %v1514, %v1247
      %v1547 = vsel %vm1527, %v1515, %v1249
      %v1548 = vsel %vm1527, %v1516, %v1251
      %v1549 = vsel %vm1527, %v1517, %v1253
      %v1550 = vsel %vm1527, %v1518, %v1255
      %v1551 = vsel %vm1527, %v1519, %v1257
      %v1552 = vsel %vm1527, %v1520, %v1259
      %v1553 = vsel %vm1527, %v1521, %v1261
      %v1554 = vsel %vm1527, %v1522, %v1263
      %v1555 = vsel %vm1527, %v1523, %v1265
      %v1556 = vsel %vm1527, %v1524, %v1267
      %v1557 = vsel %vm1527, %v1525, %v1269
      %v1558 = vsel %vm1527, %v1526, %v1271
      %v1560 = vperm.slane %v378, 0
      %vm1562 = vcmask 588800
      %v1564 = vsel %vm1562, %v1528, 0
      %v1567 = vsel %vm1562, %v1529, 0
      %v1570 = vsel %vm1562, %v1530, 0
      %v1573 = vsel %vm1562, %v1531, 0
      %v1576 = vsel %vm1562, %v1532, 0
      %v1579 = vsel %vm1562, %v1533, 0
      %v1582 = vsel %vm1562, %v1534, 0
      %v1585 = vsel %vm1562, %v1535, 0
      %v1588 = vsel %vm1562, %v1536, 0
      %v1591 = vsel %vm1562, %v1537, 0
      %v1594 = vsel %vm1562, %v1538, 0
      %v1597 = vsel %vm1562, %v1539, 0
      %v1600 = vsel %vm1562, %v1540, 0
      %v1603 = vsel %vm1562, %v1541, 0
      %v1606 = vsel %vm1562, %v1542, 0
      %v1609 = vsel %vm1562, %v1543, 0
      %v1612 = vsel %vm1562, %v1544, 0
      %v1615 = vsel %vm1562, %v1545, 0
      %v1618 = vsel %vm1562, %v1546, 0
      %v1621 = vsel %vm1562, %v1547, 0
      %v1624 = vsel %vm1562, %v1548, 0
      %v1627 = vsel %vm1562, %v1549, 0
      %v1630 = vsel %vm1562, %v1550, 0
      %v1633 = vsel %vm1562, %v1551, 0
      %v1636 = vsel %vm1562, %v1552, 0
      %v1639 = vsel %vm1562, %v1553, 0
      %v1642 = vsel %vm1562, %v1554, 0
      %v1645 = vsel %vm1562, %v1555, 0
      %v1648 = vsel %vm1562, %v1556, 0
      %v1651 = vsel %vm1562, %v1557, 0
      %v1654 = vsel %vm1562, %v1558, 0
      %1656 = vmatpush.msra.mxu0 0.0
      %1657 = vmatpush.msra.mxu0 0.0
      %1658 = vmatpush.msra.mxu0 0.0
      %1659 = vmatpush.msra.mxu0 0.0
      %1660 = vmatpush.msra.mxu0 0.0
      %1661 = vmatpush.msra.mxu0 0.0
      %1662 = vmatpush.msra.mxu0 0.0
      %1663 = vmatpush.msra.mxu0 %v377
      %1664 = vmatpush.msra.mxu0 %v376
      %1665 = vmatpush.msra.mxu0 %v375
      %1666 = vmatpush.msra.mxu0 %v374
      %1667 = vmatpush.msra.mxu0 %v373
      %1668 = vmatpush.msra.mxu0 %v372
      %1669 = vmatpush.msra.mxu0 %v371
      %1670 = vmatpush.msra.mxu0 %v370
      %1671 = vmatpush.msra.mxu0 %v369
      %1672 = vmatmul.f32.gmra.mxu0 %v1564
      %v1673 = vpop.f32.mrf.mxu0
      %v1674 = vadd.f32 %v1560, %v1673
      %1675 = vmatmul.f32.gmra.mxu0 %v1567
      %v1676 = vpop.f32.mrf.mxu0
      %v1677 = vadd.f32 %v1560, %v1676
      %1678 = vmatmul.f32.gmra.mxu0 %v1570
      %v1679 = vpop.f32.mrf.mxu0
      %v1680 = vadd.f32 %v1560, %v1679
      %1681 = vmatmul.f32.gmra.mxu0 %v1573
      %v1682 = vpop.f32.mrf.mxu0
      %v1683 = vadd.f32 %v1560, %v1682
      %1684 = vmatmul.f32.gmra.mxu0 %v1576
      %v1685 = vpop.f32.mrf.mxu0
      %v1686 = vadd.f32 %v1560, %v1685
      %1687 = vmatmul.f32.gmra.mxu0 %v1579
      %v1688 = vpop.f32.mrf.mxu0
      %v1689 = vadd.f32 %v1560, %v1688
      %1690 = vmatmul.f32.gmra.mxu0 %v1582
      %v1691 = vpop.f32.mrf.mxu0
      %v1692 = vadd.f32 %v1560, %v1691
      %1693 = vmatmul.f32.gmra.mxu0 %v1585
      %v1694 = vpop.f32.mrf.mxu0
      %v1695 = vadd.f32 %v1560, %v1694
      %1696 = vmatmul.f32.gmra.mxu0 %v1588
      %v1697 = vpop.f32.mrf.mxu0
      %v1698 = vadd.f32 %v1560, %v1697
      %1699 = vmatmul.f32.gmra.mxu0 %v1591
      %v1700 = vpop.f32.mrf.mxu0
      %v1701 = vadd.f32 %v1560, %v1700
      %1702 = vmatmul.f32.gmra.mxu0 %v1594
      %v1703 = vpop.f32.mrf.mxu0
      %v1704 = vadd.f32 %v1560, %v1703
      %1705 = vmatmul.f32.gmra.mxu0 %v1597
      %v1706 = vpop.f32.mrf.mxu0
      %v1707 = vadd.f32 %v1560, %v1706
      %1708 = vmatmul.f32.gmra.mxu0 %v1600
      %v1709 = vpop.f32.mrf.mxu0
      %v1710 = vadd.f32 %v1560, %v1709
      %1711 = vmatmul.f32.gmra.mxu0 %v1603
      %v1712 = vpop.f32.mrf.mxu0
      %v1713 = vadd.f32 %v1560, %v1712
      %1714 = vmatmul.f32.gmra.mxu0 %v1606
      %v1715 = vpop.f32.mrf.mxu0
      %v1716 = vadd.f32 %v1560, %v1715
      %1717 = vmatmul.f32.gmra.mxu0 %v1609
      %v1718 = vpop.f32.mrf.mxu0
      %v1719 = vadd.f32 %v1560, %v1718
      %1720 = vmatmul.f32.gmra.mxu0 %v1612
      %v1721 = vpop.f32.mrf.mxu0
      %v1722 = vadd.f32 %v1560, %v1721
      %1723 = vmatmul.f32.gmra.mxu0 %v1615
      %v1724 = vpop.f32.mrf.mxu0
      %v1725 = vadd.f32 %v1560, %v1724
      %1726 = vmatmul.f32.gmra.mxu0 %v1618
      %v1727 = vpop.f32.mrf.mxu0
      %v1728 = vadd.f32 %v1560, %v1727
      %1729 = vmatmul.f32.gmra.mxu0 %v1621
      %v1730 = vpop.f32.mrf.mxu0
      %v1731 = vadd.f32 %v1560, %v1730
      %1732 = vmatmul.f32.gmra.mxu0 %v1624
      %v1733 = vpop.f32.mrf.mxu0
      %v1734 = vadd.f32 %v1560, %v1733
      %1735 = vmatmul.f32.gmra.mxu0 %v1627
      %v1736 = vpop.f32.mrf.mxu0
      %v1737 = vadd.f32 %v1560, %v1736
      %1738 = vmatmul.f32.gmra.mxu0 %v1630
      %v1739 = vpop.f32.mrf.mxu0
      %v1740 = vadd.f32 %v1560, %v1739
      %1741 = vmatmul.f32.gmra.mxu0 %v1633
      %v1742 = vpop.f32.mrf.mxu0
      %v1743 = vadd.f32 %v1560, %v1742
      %1744 = vmatmul.f32.gmra.mxu0 %v1636
      %v1745 = vpop.f32.mrf.mxu0
      %v1746 = vadd.f32 %v1560, %v1745
      %1747 = vmatmul.f32.gmra.mxu0 %v1639
      %v1748 = vpop.f32.mrf.mxu0
      %v1749 = vadd.f32 %v1560, %v1748
      %1750 = vmatmul.f32.gmra.mxu0 %v1642
      %v1751 = vpop.f32.mrf.mxu0
      %v1752 = vadd.f32 %v1560, %v1751
      %1753 = vmatmul.f32.gmra.mxu0 %v1645
      %v1754 = vpop.f32.mrf.mxu0
      %v1755 = vadd.f32 %v1560, %v1754
      %1756 = vmatmul.f32.gmra.mxu0 %v1648
      %v1757 = vpop.f32.mrf.mxu0
      %v1758 = vadd.f32 %v1560, %v1757
      %1759 = vmatmul.f32.gmra.mxu0 %v1651
      %v1760 = vpop.f32.mrf.mxu0
      %v1761 = vadd.f32 %v1560, %v1760
      %1762 = vmatmul.f32.gmra.mxu0 %v1654
      %v1763 = vpop.f32.mrf.mxu0
      %v1764 = vadd.f32 %v1560, %v1763
      %1765 = vdwg.mxu0
      %v1766 = vmax.f32 %v1674, 0.0
      %v1767 = vmax.f32 %v1677, 0.0
      %v1768 = vmax.f32 %v1680, 0.0
      %v1769 = vmax.f32 %v1683, 0.0
      %v1770 = vmax.f32 %v1686, 0.0
      %v1771 = vmax.f32 %v1689, 0.0
      %v1772 = vmax.f32 %v1692, 0.0
      %v1773 = vmax.f32 %v1695, 0.0
      %v1774 = vmax.f32 %v1698, 0.0
      %v1775 = vmax.f32 %v1701, 0.0
      %v1776 = vmax.f32 %v1704, 0.0
      %v1777 = vmax.f32 %v1707, 0.0
      %v1778 = vmax.f32 %v1710, 0.0
      %v1779 = vmax.f32 %v1713, 0.0
      %v1780 = vmax.f32 %v1716, 0.0
      %v1781 = vmax.f32 %v1719, 0.0
      %v1782 = vmax.f32 %v1722, 0.0
      %v1783 = vmax.f32 %v1725, 0.0
      %v1784 = vmax.f32 %v1728, 0.0
      %v1785 = vmax.f32 %v1731, 0.0
      %v1786 = vmax.f32 %v1734, 0.0
      %v1787 = vmax.f32 %v1737, 0.0
      %v1788 = vmax.f32 %v1740, 0.0
      %v1789 = vmax.f32 %v1743, 0.0
      %v1790 = vmax.f32 %v1746, 0.0
      %v1791 = vmax.f32 %v1749, 0.0
      %v1792 = vmax.f32 %v1752, 0.0
      %v1793 = vmax.f32 %v1755, 0.0
      %v1794 = vmax.f32 %v1758, 0.0
      %v1795 = vmax.f32 %v1761, 0.0
      %v1796 = vmax.f32 %v1764, 0.0
      %v1797 = vld [vmem:[%s3] sm:$0xff]
      %v1798 = vld [vmem:[%s3 + $0x8] sm:$0xff]
      %v1799 = vld [vmem:[%s3 + $0x10] sm:$0xff]
      %v1800 = vld [vmem:[%s3 + $0x18] sm:$0xff]
      %v1801 = vld [vmem:[%s3 + $0x20] sm:$0xff]
      %v1802 = vld [vmem:[%s3 + $0x28] sm:$0xff]
      %v1803 = vld [vmem:[%s3 + $0x30] sm:$0xff]
      %v1804 = vld [vmem:[%s3 + $0x38] sm:$0xff]
      %v1805 = vld [vmem:[%s3 + $0x40] sm:$0xff]
      %v1806 = vld [vmem:[%s3 + $0x48] sm:$0xff]
      %v1807 = vld [vmem:[%s3 + $0x50] sm:$0xff]
      %v1808 = vld [vmem:[%s3 + $0x58] sm:$0xff]
      %v1809 = vld [vmem:[%s3 + $0x60] sm:$0xff]
      %v1810 = vld [vmem:[%s3 + $0x68] sm:$0xff]
      %v1811 = vld [vmem:[%s3 + $0x70] sm:$0xff]
      %v1812 = vld [vmem:[%s3 + $0x78] sm:$0xff]
      %v1813 = vld [vmem:[%s3 + $0x80] sm:$0xff]
      %v1814 = vld [vmem:[%s3 + $0x88] sm:$0xff]
      %v1815 = vld [vmem:[%s3 + $0x90] sm:$0xff]
      %v1816 = vld [vmem:[%s3 + $0x98] sm:$0xff]
      %v1817 = vld [vmem:[%s3 + $0xa0] sm:$0xff]
      %v1818 = vld [vmem:[%s3 + $0xa8] sm:$0xff]
      %v1819 = vld [vmem:[%s3 + $0xb0] sm:$0xff]
      %v1820 = vld [vmem:[%s3 + $0xb8] sm:$0xff]
      %v1821 = vld [vmem:[%s3 + $0xc0] sm:$0xff]
      %v1822 = vld [vmem:[%s3 + $0xc8] sm:$0xff]
      %v1823 = vld [vmem:[%s3 + $0xd0] sm:$0xff]
      %v1824 = vld [vmem:[%s3 + $0xd8] sm:$0xff]
      %v1825 = vld [vmem:[%s3 + $0xe0] sm:$0xff]
      %v1826 = vld [vmem:[%s3 + $0xe8] sm:$0xff]
      %v1827 = vld [vmem:[%s3 + $0xf0] sm:$0xff]
      %v1828 = vld [vmem:[%s3 + $0xf8] sm:$0xff]
      %v1829 = vld [vmem:[%s3 + $0x100] sm:$0xff]
      %v1830 = vld [vmem:[%s3 + $0x108] sm:$0xff]
      %v1831 = vld [vmem:[%s3 + $0x110] sm:$0xff]
      %v1832 = vld [vmem:[%s3 + $0x118] sm:$0xff]
      %v1833 = vld [vmem:[%s4] sm:$0x1]
      %1860 = vrot.lane.b32.xlu0 %v1768, 32
      %v1861 = vpop.permute.xlu0 %1860
      %1862 = vrot.lane.b32.xlu0 %v1769, 32
      %v1863 = vpop.permute.xlu0 %1862
      %1864 = vrot.lane.b32.xlu0 %v1770, 32
      %v1865 = vpop.permute.xlu0 %1864
      %1866 = vrot.lane.b32.xlu0 %v1771, 32
      %v1867 = vpop.permute.xlu0 %1866
      %1868 = vrot.lane.b32.xlu0 %v1772, 32
      %v1869 = vpop.permute.xlu0 %1868
      %1870 = vrot.lane.b32.xlu0 %v1773, 32
      %v1871 = vpop.permute.xlu0 %1870
      %1872 = vrot.lane.b32.xlu0 %v1774, 32
      %v1873 = vpop.permute.xlu0 %1872
      %1874 = vrot.lane.b32.xlu0 %v1775, 32
      %v1875 = vpop.permute.xlu0 %1874
      %1876 = vrot.lane.b32.xlu0 %v1776, 32
      %v1877 = vpop.permute.xlu0 %1876
      %1878 = vrot.lane.b32.xlu0 %v1777, 32
      %v1879 = vpop.permute.xlu0 %1878
      %1880 = vrot.lane.b32.xlu0 %v1778, 32
      %v1881 = vpop.permute.xlu0 %1880
      %1882 = vrot.lane.b32.xlu0 %v1779, 32
      %v1883 = vpop.permute.xlu0 %1882
      %1884 = vrot.lane.b32.xlu0 %v1780, 32
      %v1885 = vpop.permute.xlu0 %1884
      %1886 = vrot.lane.b32.xlu0 %v1781, 32
      %v1887 = vpop.permute.xlu0 %1886
      %1888 = vrot.lane.b32.xlu0 %v1782, 32
      %v1889 = vpop.permute.xlu0 %1888
      %1890 = vrot.lane.b32.xlu0 %v1783, 32
      %v1891 = vpop.permute.xlu0 %1890
      %1892 = vrot.lane.b32.xlu0 %v1784, 32
      %v1893 = vpop.permute.xlu0 %1892
      %1894 = vrot.lane.b32.xlu0 %v1785, 32
      %v1895 = vpop.permute.xlu0 %1894
      %1896 = vrot.lane.b32.xlu0 %v1786, 32
      %v1897 = vpop.permute.xlu0 %1896
      %1898 = vrot.lane.b32.xlu0 %v1787, 32
      %v1899 = vpop.permute.xlu0 %1898
      %1900 = vrot.lane.b32.xlu0 %v1788, 32
      %v1901 = vpop.permute.xlu0 %1900
      %1902 = vrot.lane.b32.xlu0 %v1789, 32
      %v1903 = vpop.permute.xlu0 %1902
      %1904 = vrot.lane.b32.xlu0 %v1790, 32
      %v1905 = vpop.permute.xlu0 %1904
      %1906 = vrot.lane.b32.xlu0 %v1791, 32
      %v1907 = vpop.permute.xlu0 %1906
      %1908 = vrot.lane.b32.xlu0 %v1792, 32
      %v1909 = vpop.permute.xlu0 %1908
      %1910 = vrot.lane.b32.xlu0 %v1793, 32
      %v1911 = vpop.permute.xlu0 %1910
      %1940 = vrot.lane.b32.xlu0 %v1770, 64
      %v1941 = vpop.permute.xlu0 %1940
      %1942 = vrot.lane.b32.xlu0 %v1771, 64
      %v1943 = vpop.permute.xlu0 %1942
      %1944 = vrot.lane.b32.xlu0 %v1772, 64
      %v1945 = vpop.permute.xlu0 %1944
      %1946 = vrot.lane.b32.xlu0 %v1773, 64
      %v1947 = vpop.permute.xlu0 %1946
      %1948 = vrot.lane.b32.xlu0 %v1774, 64
      %v1949 = vpop.permute.xlu0 %1948
      %1950 = vrot.lane.b32.xlu0 %v1775, 64
      %v1951 = vpop.permute.xlu0 %1950
      %1952 = vrot.lane.b32.xlu0 %v1776, 64
      %v1953 = vpop.permute.xlu0 %1952
      %1954 = vrot.lane.b32.xlu0 %v1777, 64
      %v1955 = vpop.permute.xlu0 %1954
      %1956 = vrot.lane.b32.xlu0 %v1778, 64
      %v1957 = vpop.permute.xlu0 %1956
      %1958 = vrot.lane.b32.xlu0 %v1779, 64
      %v1959 = vpop.permute.xlu0 %1958
      %1960 = vrot.lane.b32.xlu0 %v1780, 64
      %v1961 = vpop.permute.xlu0 %1960
      %1962 = vrot.lane.b32.xlu0 %v1781, 64
      %v1963 = vpop.permute.xlu0 %1962
      %1964 = vrot.lane.b32.xlu0 %v1782, 64
      %v1965 = vpop.permute.xlu0 %1964
      %1966 = vrot.lane.b32.xlu0 %v1783, 64
      %v1967 = vpop.permute.xlu0 %1966
      %1968 = vrot.lane.b32.xlu0 %v1784, 64
      %v1969 = vpop.permute.xlu0 %1968
      %1970 = vrot.lane.b32.xlu0 %v1785, 64
      %v1971 = vpop.permute.xlu0 %1970
      %1972 = vrot.lane.b32.xlu0 %v1786, 64
      %v1973 = vpop.permute.xlu0 %1972
      %1974 = vrot.lane.b32.xlu0 %v1787, 64
      %v1975 = vpop.permute.xlu0 %1974
      %1976 = vrot.lane.b32.xlu0 %v1788, 64
      %v1977 = vpop.permute.xlu0 %1976
      %1978 = vrot.lane.b32.xlu0 %v1789, 64
      %v1979 = vpop.permute.xlu0 %1978
      %1980 = vrot.lane.b32.xlu0 %v1790, 64
      %v1981 = vpop.permute.xlu0 %1980
      %1982 = vrot.lane.b32.xlu0 %v1791, 64
      %v1983 = vpop.permute.xlu0 %1982
      %1984 = vrot.lane.b32.xlu0 %v1792, 64
      %v1985 = vpop.permute.xlu0 %1984
      %1986 = vrot.lane.b32.xlu0 %v1793, 64
      %v1987 = vpop.permute.xlu0 %1986
      %1988 = vrot.lane.b32.xlu0 %v1794, 64
      %v1989 = vpop.permute.xlu0 %1988
      %1990 = vrot.lane.b32.xlu0 %v1795, 64
      %v1991 = vpop.permute.xlu0 %1990
      %v2020 = vrot.slane %v1766, 1
      %v2021 = vrot.slane %v1767, 1
      %v2022 = vsel %vm600, %v2020, %v2021
      %v2023 = vrot.slane %v1768, 1
      %v2024 = vsel %vm600, %v2021, %v2023
      %v2025 = vrot.slane %v1769, 1
      %v2026 = vsel %vm600, %v2023, %v2025
      %v2027 = vrot.slane %v1770, 1
      %v2028 = vsel %vm600, %v2025, %v2027
      %v2029 = vrot.slane %v1771, 1
      %v2030 = vsel %vm600, %v2027, %v2029
      %v2031 = vrot.slane %v1772, 1
      %v2032 = vsel %vm600, %v2029, %v2031
      %v2033 = vrot.slane %v1773, 1
      %v2034 = vsel %vm600, %v2031, %v2033
      %v2035 = vrot.slane %v1774, 1
      %v2036 = vsel %vm600, %v2033, %v2035
      %v2037 = vrot.slane %v1775, 1
      %v2038 = vsel %vm600, %v2035, %v2037
      %v2039 = vrot.slane %v1776, 1
      %v2040 = vsel %vm600, %v2037, %v2039
      %v2041 = vrot.slane %v1777, 1
      %v2042 = vsel %vm600, %v2039, %v2041
      %v2043 = vrot.slane %v1778, 1
      %v2044 = vsel %vm600, %v2041, %v2043
      %v2045 = vrot.slane %v1779, 1
      %v2046 = vsel %vm600, %v2043, %v2045
      %v2047 = vrot.slane %v1780, 1
      %v2048 = vsel %vm600, %v2045, %v2047
      %v2049 = vrot.slane %v1781, 1
      %v2050 = vsel %vm600, %v2047, %v2049
      %v2051 = vrot.slane %v1782, 1
      %v2052 = vsel %vm600, %v2049, %v2051
      %v2053 = vrot.slane %v1783, 1
      %v2054 = vsel %vm600, %v2051, %v2053
      %v2055 = vrot.slane %v1784, 1
      %v2056 = vsel %vm600, %v2053, %v2055
      %v2057 = vrot.slane %v1785, 1
      %v2058 = vsel %vm600, %v2055, %v2057
      %v2059 = vrot.slane %v1786, 1
      %v2060 = vsel %vm600, %v2057, %v2059
      %v2061 = vrot.slane %v1787, 1
      %v2062 = vsel %vm600, %v2059, %v2061
      %v2063 = vrot.slane %v1788, 1
      %v2064 = vsel %vm600, %v2061, %v2063
      %v2065 = vrot.slane %v1789, 1
      %v2066 = vsel %vm600, %v2063, %v2065
      %v2067 = vrot.slane %v1790, 1
      %v2068 = vsel %vm600, %v2065, %v2067
      %v2069 = vrot.slane %v1791, 1
      %v2070 = vsel %vm600, %v2067, %v2069
      %v2071 = vrot.slane %v1792, 1
      %v2072 = vsel %vm600, %v2069, %v2071
      %2073 = vrot.lane.b32.xlu0 %v2022, 96
      %v2074 = vpop.permute.xlu0 %2073
      %2075 = vrot.lane.b32.xlu0 %v2024, 96
      %v2076 = vpop.permute.xlu0 %2075
      %2077 = vrot.lane.b32.xlu0 %v2026, 96
      %v2078 = vpop.permute.xlu0 %2077
      %2079 = vrot.lane.b32.xlu0 %v2028, 96
      %v2080 = vpop.permute.xlu0 %2079
      %2081 = vrot.lane.b32.xlu0 %v2030, 96
      %v2082 = vpop.permute.xlu0 %2081
      %2083 = vrot.lane.b32.xlu0 %v2032, 96
      %v2084 = vpop.permute.xlu0 %2083
      %2085 = vrot.lane.b32.xlu0 %v2034, 96
      %v2086 = vpop.permute.xlu0 %2085
      %2087 = vrot.lane.b32.xlu0 %v2036, 96
      %v2088 = vpop.permute.xlu0 %2087
      %2089 = vrot.lane.b32.xlu0 %v2038, 96
      %v2090 = vpop.permute.xlu0 %2089
      %2091 = vrot.lane.b32.xlu0 %v2040, 96
      %v2092 = vpop.permute.xlu0 %2091
      %2093 = vrot.lane.b32.xlu0 %v2042, 96
      %v2094 = vpop.permute.xlu0 %2093
      %2095 = vrot.lane.b32.xlu0 %v2044, 96
      %v2096 = vpop.permute.xlu0 %2095
      %2097 = vrot.lane.b32.xlu0 %v2046, 96
      %v2098 = vpop.permute.xlu0 %2097
      %2099 = vrot.lane.b32.xlu0 %v2048, 96
      %v2100 = vpop.permute.xlu0 %2099
      %2101 = vrot.lane.b32.xlu0 %v2050, 96
      %v2102 = vpop.permute.xlu0 %2101
      %2103 = vrot.lane.b32.xlu0 %v2052, 96
      %v2104 = vpop.permute.xlu0 %2103
      %2105 = vrot.lane.b32.xlu0 %v2054, 96
      %v2106 = vpop.permute.xlu0 %2105
      %2107 = vrot.lane.b32.xlu0 %v2056, 96
      %v2108 = vpop.permute.xlu0 %2107
      %2109 = vrot.lane.b32.xlu0 %v2058, 96
      %v2110 = vpop.permute.xlu0 %2109
      %2111 = vrot.lane.b32.xlu0 %v2060, 96
      %v2112 = vpop.permute.xlu0 %2111
      %2113 = vrot.lane.b32.xlu0 %v2062, 96
      %v2114 = vpop.permute.xlu0 %2113
      %2115 = vrot.lane.b32.xlu0 %v2064, 96
      %v2116 = vpop.permute.xlu0 %2115
      %2117 = vrot.lane.b32.xlu0 %v2066, 96
      %v2118 = vpop.permute.xlu0 %2117
      %2119 = vrot.lane.b32.xlu0 %v2068, 96
      %v2120 = vpop.permute.xlu0 %2119
      %2121 = vrot.lane.b32.xlu0 %v2070, 96
      %v2122 = vpop.permute.xlu0 %2121
      %2123 = vrot.lane.b32.xlu0 %v2072, 96
      %v2124 = vpop.permute.xlu0 %2123
      %v2151 = vrot.slane %v1793, 1
      %v2152 = vsel %vm600, %v2071, %v2151
      %v2153 = vrot.slane %v1794, 1
      %v2154 = vsel %vm600, %v2151, %v2153
      %v2182 = vrot.slane %v1795, 1
      %v2183 = vsel %vm600, %v2153, %v2182
      %v2184 = vrot.slane %v1796, 1
      %v2185 = vsel %vm600, %v2182, %v2184
      %2186 = vrot.lane.b32.xlu0 %v2030, 32
      %v2187 = vpop.permute.xlu0 %2186
      %2188 = vrot.lane.b32.xlu0 %v2032, 32
      %v2189 = vpop.permute.xlu0 %2188
      %2190 = vrot.lane.b32.xlu0 %v2034, 32
      %v2191 = vpop.permute.xlu0 %2190
      %2192 = vrot.lane.b32.xlu0 %v2036, 32
      %v2193 = vpop.permute.xlu0 %2192
      %2194 = vrot.lane.b32.xlu0 %v2038, 32
      %v2195 = vpop.permute.xlu0 %2194
      %2196 = vrot.lane.b32.xlu0 %v2040, 32
      %v2197 = vpop.permute.xlu0 %2196
      %2198 = vrot.lane.b32.xlu0 %v2042, 32
      %v2199 = vpop.permute.xlu0 %2198
      %2200 = vrot.lane.b32.xlu0 %v2044, 32
      %v2201 = vpop.permute.xlu0 %2200
      %2202 = vrot.lane.b32.xlu0 %v2046, 32
      %v2203 = vpop.permute.xlu0 %2202
      %2204 = vrot.lane.b32.xlu0 %v2048, 32
      %v2205 = vpop.permute.xlu0 %2204
      %2206 = vrot.lane.b32.xlu0 %v2050, 32
      %v2207 = vpop.permute.xlu0 %2206
      %2208 = vrot.lane.b32.xlu0 %v2052, 32
      %v2209 = vpop.permute.xlu0 %2208
      %2210 = vrot.lane.b32.xlu0 %v2054, 32
      %v2211 = vpop.permute.xlu0 %2210
      %2212 = vrot.lane.b32.xlu0 %v2056, 32
      %v2213 = vpop.permute.xlu0 %2212
      %2214 = vrot.lane.b32.xlu0 %v2058, 32
      %v2215 = vpop.permute.xlu0 %2214
      %2216 = vrot.lane.b32.xlu0 %v2060, 32
      %v2217 = vpop.permute.xlu0 %2216
      %2218 = vrot.lane.b32.xlu0 %v2062, 32
      %v2219 = vpop.permute.xlu0 %2218
      %2220 = vrot.lane.b32.xlu0 %v2064, 32
      %v2221 = vpop.permute.xlu0 %2220
      %2222 = vrot.lane.b32.xlu0 %v2066, 32
      %v2223 = vpop.permute.xlu0 %2222
      %2224 = vrot.lane.b32.xlu0 %v2068, 32
      %v2225 = vpop.permute.xlu0 %2224
      %2226 = vrot.lane.b32.xlu0 %v2070, 32
      %v2227 = vpop.permute.xlu0 %2226
      %2228 = vrot.lane.b32.xlu0 %v2072, 32
      %v2229 = vpop.permute.xlu0 %2228
      %2230 = vrot.lane.b32.xlu0 %v2152, 32
      %v2231 = vpop.permute.xlu0 %2230
      %2232 = vrot.lane.b32.xlu0 %v2154, 32
      %v2233 = vpop.permute.xlu0 %2232
      %2234 = vrot.lane.b32.xlu0 %v2183, 32
      %v2235 = vpop.permute.xlu0 %2234
      %2236 = vrot.lane.b32.xlu0 %v2185, 32
      %v2237 = vpop.permute.xlu0 %2236
      %v2264 = vrot.slane %v1766, 2
      %v2265 = vrot.slane %v1767, 2
      %v2266 = vsel %vm952, %v2264, %v2265
      %v2267 = vrot.slane %v1768, 2
      %v2268 = vsel %vm952, %v2265, %v2267
      %v2269 = vrot.slane %v1769, 2
      %v2270 = vsel %vm952, %v2267, %v2269
      %v2271 = vrot.slane %v1770, 2
      %v2272 = vsel %vm952, %v2269, %v2271
      %v2273 = vrot.slane %v1771, 2
      %v2274 = vsel %vm952, %v2271, %v2273
      %v2275 = vrot.slane %v1772, 2
      %v2276 = vsel %vm952, %v2273, %v2275
      %v2277 = vrot.slane %v1773, 2
      %v2278 = vsel %vm952, %v2275, %v2277
      %v2279 = vrot.slane %v1774, 2
      %v2280 = vsel %vm952, %v2277, %v2279
      %v2281 = vrot.slane %v1775, 2
      %v2282 = vsel %vm952, %v2279, %v2281
      %v2283 = vrot.slane %v1776, 2
      %v2284 = vsel %vm952, %v2281, %v2283
      %v2285 = vrot.slane %v1777, 2
      %v2286 = vsel %vm952, %v2283, %v2285
      %v2287 = vrot.slane %v1778, 2
      %v2288 = vsel %vm952, %v2285, %v2287
      %v2289 = vrot.slane %v1779, 2
      %v2290 = vsel %vm952, %v2287, %v2289
      %v2291 = vrot.slane %v1780, 2
      %v2292 = vsel %vm952, %v2289, %v2291
      %v2293 = vrot.slane %v1781, 2
      %v2294 = vsel %vm952, %v2291, %v2293
      %v2295 = vrot.slane %v1782, 2
      %v2296 = vsel %vm952, %v2293, %v2295
      %v2297 = vrot.slane %v1783, 2
      %v2298 = vsel %vm952, %v2295, %v2297
      %v2299 = vrot.slane %v1784, 2
      %v2300 = vsel %vm952, %v2297, %v2299
      %v2301 = vrot.slane %v1785, 2
      %v2302 = vsel %vm952, %v2299, %v2301
      %v2303 = vrot.slane %v1786, 2
      %v2304 = vsel %vm952, %v2301, %v2303
      %v2305 = vrot.slane %v1787, 2
      %v2306 = vsel %vm952, %v2303, %v2305
      %v2307 = vrot.slane %v1788, 2
      %v2308 = vsel %vm952, %v2305, %v2307
      %v2309 = vrot.slane %v1789, 2
      %v2310 = vsel %vm952, %v2307, %v2309
      %v2311 = vrot.slane %v1790, 2
      %v2312 = vsel %vm952, %v2309, %v2311
      %v2313 = vrot.slane %v1791, 2
      %v2314 = vsel %vm952, %v2311, %v2313
      %v2315 = vrot.slane %v1792, 2
      %v2316 = vsel %vm952, %v2313, %v2315
      %2317 = vrot.lane.b32.xlu0 %v2266, 64
      %v2318 = vpop.permute.xlu0 %2317
      %2319 = vrot.lane.b32.xlu0 %v2268, 64
      %v2320 = vpop.permute.xlu0 %2319
      %2321 = vrot.lane.b32.xlu0 %v2270, 64
      %v2322 = vpop.permute.xlu0 %2321
      %2323 = vrot.lane.b32.xlu0 %v2272, 64
      %v2324 = vpop.permute.xlu0 %2323
      %2325 = vrot.lane.b32.xlu0 %v2274, 64
      %v2326 = vpop.permute.xlu0 %2325
      %2327 = vrot.lane.b32.xlu0 %v2276, 64
      %v2328 = vpop.permute.xlu0 %2327
      %2329 = vrot.lane.b32.xlu0 %v2278, 64
      %v2330 = vpop.permute.xlu0 %2329
      %2331 = vrot.lane.b32.xlu0 %v2280, 64
      %v2332 = vpop.permute.xlu0 %2331
      %2333 = vrot.lane.b32.xlu0 %v2282, 64
      %v2334 = vpop.permute.xlu0 %2333
      %2335 = vrot.lane.b32.xlu0 %v2284, 64
      %v2336 = vpop.permute.xlu0 %2335
      %2337 = vrot.lane.b32.xlu0 %v2286, 64
      %v2338 = vpop.permute.xlu0 %2337
      %2339 = vrot.lane.b32.xlu0 %v2288, 64
      %v2340 = vpop.permute.xlu0 %2339
      %2341 = vrot.lane.b32.xlu0 %v2290, 64
      %v2342 = vpop.permute.xlu0 %2341
      %2343 = vrot.lane.b32.xlu0 %v2292, 64
      %v2344 = vpop.permute.xlu0 %2343
      %2345 = vrot.lane.b32.xlu0 %v2294, 64
      %v2346 = vpop.permute.xlu0 %2345
      %2347 = vrot.lane.b32.xlu0 %v2296, 64
      %v2348 = vpop.permute.xlu0 %2347
      %2349 = vrot.lane.b32.xlu0 %v2298, 64
      %v2350 = vpop.permute.xlu0 %2349
      %2351 = vrot.lane.b32.xlu0 %v2300, 64
      %v2352 = vpop.permute.xlu0 %2351
      %2353 = vrot.lane.b32.xlu0 %v2302, 64
      %v2354 = vpop.permute.xlu0 %2353
      %2355 = vrot.lane.b32.xlu0 %v2304, 64
      %v2356 = vpop.permute.xlu0 %2355
      %2357 = vrot.lane.b32.xlu0 %v2306, 64
      %v2358 = vpop.permute.xlu0 %2357
      %2359 = vrot.lane.b32.xlu0 %v2308, 64
      %v2360 = vpop.permute.xlu0 %2359
      %2361 = vrot.lane.b32.xlu0 %v2310, 64
      %v2362 = vpop.permute.xlu0 %2361
      %2363 = vrot.lane.b32.xlu0 %v2312, 64
      %v2364 = vpop.permute.xlu0 %2363
      %2365 = vrot.lane.b32.xlu0 %v2314, 64
      %v2366 = vpop.permute.xlu0 %2365
      %2367 = vrot.lane.b32.xlu0 %v2316, 64
      %v2368 = vpop.permute.xlu0 %2367
      %v2395 = vrot.slane %v1793, 2
      %v2396 = vsel %vm952, %v2315, %v2395
      %v2397 = vrot.slane %v1794, 2
      %v2398 = vsel %vm952, %v2395, %v2397
      %2399 = vrot.lane.b32.xlu0 %v2270, 96
      %v2400 = vpop.permute.xlu0 %2399
      %2401 = vrot.lane.b32.xlu0 %v2272, 96
      %v2402 = vpop.permute.xlu0 %2401
      %2403 = vrot.lane.b32.xlu0 %v2274, 96
      %v2404 = vpop.permute.xlu0 %2403
      %2405 = vrot.lane.b32.xlu0 %v2276, 96
      %v2406 = vpop.permute.xlu0 %2405
      %2407 = vrot.lane.b32.xlu0 %v2278, 96
      %v2408 = vpop.permute.xlu0 %2407
      %2409 = vrot.lane.b32.xlu0 %v2280, 96
      %v2410 = vpop.permute.xlu0 %2409
      %2411 = vrot.lane.b32.xlu0 %v2282, 96
      %v2412 = vpop.permute.xlu0 %2411
      %2413 = vrot.lane.b32.xlu0 %v2284, 96
      %v2414 = vpop.permute.xlu0 %2413
      %2415 = vrot.lane.b32.xlu0 %v2286, 96
      %v2416 = vpop.permute.xlu0 %2415
      %2417 = vrot.lane.b32.xlu0 %v2288, 96
      %v2418 = vpop.permute.xlu0 %2417
      %2419 = vrot.lane.b32.xlu0 %v2290, 96
      %v2420 = vpop.permute.xlu0 %2419
      %2421 = vrot.lane.b32.xlu0 %v2292, 96
      %v2422 = vpop.permute.xlu0 %2421
      %2423 = vrot.lane.b32.xlu0 %v2294, 96
      %v2424 = vpop.permute.xlu0 %2423
      %2425 = vrot.lane.b32.xlu0 %v2296, 96
      %v2426 = vpop.permute.xlu0 %2425
      %2427 = vrot.lane.b32.xlu0 %v2298, 96
      %v2428 = vpop.permute.xlu0 %2427
      %2429 = vrot.lane.b32.xlu0 %v2300, 96
      %v2430 = vpop.permute.xlu0 %2429
      %2431 = vrot.lane.b32.xlu0 %v2302, 96
      %v2432 = vpop.permute.xlu0 %2431
      %2433 = vrot.lane.b32.xlu0 %v2304, 96
      %v2434 = vpop.permute.xlu0 %2433
      %2435 = vrot.lane.b32.xlu0 %v2306, 96
      %v2436 = vpop.permute.xlu0 %2435
      %2437 = vrot.lane.b32.xlu0 %v2308, 96
      %v2438 = vpop.permute.xlu0 %2437
      %2439 = vrot.lane.b32.xlu0 %v2310, 96
      %v2440 = vpop.permute.xlu0 %2439
      %2441 = vrot.lane.b32.xlu0 %v2312, 96
      %v2442 = vpop.permute.xlu0 %2441
      %2443 = vrot.lane.b32.xlu0 %v2314, 96
      %v2444 = vpop.permute.xlu0 %2443
      %2445 = vrot.lane.b32.xlu0 %v2316, 96
      %v2446 = vpop.permute.xlu0 %2445
      %2447 = vrot.lane.b32.xlu0 %v2396, 96
      %v2448 = vpop.permute.xlu0 %2447
      %2449 = vrot.lane.b32.xlu0 %v2398, 96
      %v2450 = vpop.permute.xlu0 %2449
      %v2477 = vrot.slane %v1795, 2
      %v2478 = vsel %vm952, %v2397, %v2477
      %v2479 = vrot.slane %v1796, 2
      %v2480 = vsel %vm952, %v2477, %v2479
      %v2481 = vsel %vm1399, %v1766, %v1861
      %v2482 = vsel %vm1399, %v1767, %v1863
      %v2483 = vsel %vm1399, %v1768, %v1865
      %v2484 = vsel %vm1399, %v1769, %v1867
      %v2485 = vsel %vm1399, %v1770, %v1869
      %v2486 = vsel %vm1399, %v1771, %v1871
      %v2487 = vsel %vm1399, %v1772, %v1873
      %v2488 = vsel %vm1399, %v1773, %v1875
      %v2489 = vsel %vm1399, %v1774, %v1877
      %v2490 = vsel %vm1399, %v1775, %v1879
      %v2491 = vsel %vm1399, %v1776, %v1881
      %v2492 = vsel %vm1399, %v1777, %v1883
      %v2493 = vsel %vm1399, %v1778, %v1885
      %v2494 = vsel %vm1399, %v1779, %v1887
      %v2495 = vsel %vm1399, %v1780, %v1889
      %v2496 = vsel %vm1399, %v1781, %v1891
      %v2497 = vsel %vm1399, %v1782, %v1893
      %v2498 = vsel %vm1399, %v1783, %v1895
      %v2499 = vsel %vm1399, %v1784, %v1897
      %v2500 = vsel %vm1399, %v1785, %v1899
      %v2501 = vsel %vm1399, %v1786, %v1901
      %v2502 = vsel %vm1399, %v1787, %v1903
      %v2503 = vsel %vm1399, %v1788, %v1905
      %v2504 = vsel %vm1399, %v1789, %v1907
      %v2505 = vsel %vm1399, %v1790, %v1909
      %v2506 = vsel %vm1399, %v1791, %v1911
      %v2507 = vsel %vm1527, %v2481, %v1941
      %v2508 = vsel %vm1527, %v2482, %v1943
      %v2509 = vsel %vm1527, %v2483, %v1945
      %v2510 = vsel %vm1527, %v2484, %v1947
      %v2511 = vsel %vm1527, %v2485, %v1949
      %v2512 = vsel %vm1527, %v2486, %v1951
      %v2513 = vsel %vm1527, %v2487, %v1953
      %v2514 = vsel %vm1527, %v2488, %v1955
      %v2515 = vsel %vm1527, %v2489, %v1957
      %v2516 = vsel %vm1527, %v2490, %v1959
      %v2517 = vsel %vm1527, %v2491, %v1961
      %v2518 = vsel %vm1527, %v2492, %v1963
      %v2519 = vsel %vm1527, %v2493, %v1965
      %v2520 = vsel %vm1527, %v2494, %v1967
      %v2521 = vsel %vm1527, %v2495, %v1969
      %v2522 = vsel %vm1527, %v2496, %v1971
      %v2523 = vsel %vm1527, %v2497, %v1973
      %v2524 = vsel %vm1527, %v2498, %v1975
      %v2525 = vsel %vm1527, %v2499, %v1977
      %v2526 = vsel %vm1527, %v2500, %v1979
      %v2527 = vsel %vm1527, %v2501, %v1981
      %v2528 = vsel %vm1527, %v2502, %v1983
      %v2529 = vsel %vm1527, %v2503, %v1985
      %v2530 = vsel %vm1527, %v2504, %v1987
      %v2531 = vsel %vm1527, %v2505, %v1989
      %v2532 = vsel %vm1527, %v2506, %v1991
      %vm2533 = vcmask 785408
      %v2534 = vsel %vm2533, %v2507, %v2074
      %v2535 = vsel %vm2533, %v2508, %v2076
      %v2536 = vsel %vm2533, %v2509, %v2078
      %v2537 = vsel %vm2533, %v2510, %v2080
      %v2538 = vsel %vm2533, %v2511, %v2082
      %v2539 = vsel %vm2533, %v2512, %v2084
      %v2540 = vsel %vm2533, %v2513, %v2086
      %v2541 = vsel %vm2533, %v2514, %v2088
      %v2542 = vsel %vm2533, %v2515, %v2090
      %v2543 = vsel %vm2533, %v2516, %v2092
      %v2544 = vsel %vm2533, %v2517, %v2094
      %v2545 = vsel %vm2533, %v2518, %v2096
      %v2546 = vsel %vm2533, %v2519, %v2098
      %v2547 = vsel %vm2533, %v2520, %v2100
      %v2548 = vsel %vm2533, %v2521, %v2102
      %v2549 = vsel %vm2533, %v2522, %v2104
      %v2550 = vsel %vm2533, %v2523, %v2106
      %v2551 = vsel %vm2533, %v2524, %v2108
      %v2552 = vsel %vm2533, %v2525, %v2110
      %v2553 = vsel %vm2533, %v2526, %v2112
      %v2554 = vsel %vm2533, %v2527, %v2114
      %v2555 = vsel %vm2533, %v2528, %v2116
      %v2556 = vsel %vm2533, %v2529, %v2118
      %v2557 = vsel %vm2533, %v2530, %v2120
      %v2558 = vsel %vm2533, %v2531, %v2122
      %v2559 = vsel %vm2533, %v2532, %v2124
      %v2560 = vsel %vm1399, %v2026, %v2187
      %v2561 = vsel %vm1399, %v2028, %v2189
      %v2562 = vsel %vm1399, %v2030, %v2191
      %v2563 = vsel %vm1399, %v2032, %v2193
      %v2564 = vsel %vm1399, %v2034, %v2195
      %v2565 = vsel %vm1399, %v2036, %v2197
      %v2566 = vsel %vm1399, %v2038, %v2199
      %v2567 = vsel %vm1399, %v2040, %v2201
      %v2568 = vsel %vm1399, %v2042, %v2203
      %v2569 = vsel %vm1399, %v2044, %v2205
      %v2570 = vsel %vm1399, %v2046, %v2207
      %v2571 = vsel %vm1399, %v2048, %v2209
      %v2572 = vsel %vm1399, %v2050, %v2211
      %v2573 = vsel %vm1399, %v2052, %v2213
      %v2574 = vsel %vm1399, %v2054, %v2215
      %v2575 = vsel %vm1399, %v2056, %v2217
      %v2576 = vsel %vm1399, %v2058, %v2219
      %v2577 = vsel %vm1399, %v2060, %v2221
      %v2578 = vsel %vm1399, %v2062, %v2223
      %v2579 = vsel %vm1399, %v2064, %v2225
      %v2580 = vsel %vm1399, %v2066, %v2227
      %v2581 = vsel %vm1399, %v2068, %v2229
      %v2582 = vsel %vm1399, %v2070, %v2231
      %v2583 = vsel %vm1399, %v2072, %v2233
      %v2584 = vsel %vm1399, %v2152, %v2235
      %v2585 = vsel %vm1399, %v2154, %v2237
      %v2586 = vsel %vm1527, %v2560, %v2318
      %v2587 = vsel %vm1527, %v2561, %v2320
      %v2588 = vsel %vm1527, %v2562, %v2322
      %v2589 = vsel %vm1527, %v2563, %v2324
      %v2590 = vsel %vm1527, %v2564, %v2326
      %v2591 = vsel %vm1527, %v2565, %v2328
      %v2592 = vsel %vm1527, %v2566, %v2330
      %v2593 = vsel %vm1527, %v2567, %v2332
      %v2594 = vsel %vm1527, %v2568, %v2334
      %v2595 = vsel %vm1527, %v2569, %v2336
      %v2596 = vsel %vm1527, %v2570, %v2338
      %v2597 = vsel %vm1527, %v2571, %v2340
      %v2598 = vsel %vm1527, %v2572, %v2342
      %v2599 = vsel %vm1527, %v2573, %v2344
      %v2600 = vsel %vm1527, %v2574, %v2346
      %v2601 = vsel %vm1527, %v2575, %v2348
      %v2602 = vsel %vm1527, %v2576, %v2350
      %v2603 = vsel %vm1527, %v2577, %v2352
      %v2604 = vsel %vm1527, %v2578, %v2354
      %v2605 = vsel %vm1527, %v2579, %v2356
      %v2606 = vsel %vm1527, %v2580, %v2358
      %v2607 = vsel %vm1527, %v2581, %v2360
      %v2608 = vsel %vm1527, %v2582, %v2362
      %v2609 = vsel %vm1527, %v2583, %v2364
      %v2610 = vsel %vm1527, %v2584, %v2366
      %v2611 = vsel %vm1527, %v2585, %v2368
      %v2612 = vsel %vm2533, %v2586, %v2400
      %v2613 = vsel %vm2533, %v2587, %v2402
      %v2614 = vsel %vm2533, %v2588, %v2404
      %v2615 = vsel %vm2533, %v2589, %v2406
      %v2616 = vsel %vm2533, %v2590, %v2408
      %v2617 = vsel %vm2533, %v2591, %v2410
      %v2618 = vsel %vm2533, %v2592, %v2412
      %v2619 = vsel %vm2533, %v2593, %v2414
      %v2620 = vsel %vm2533, %v2594, %v2416
      %v2621 = vsel %vm2533, %v2595, %v2418
      %v2622 = vsel %vm2533, %v2596, %v2420
      %v2623 = vsel %vm2533, %v2597, %v2422
      %v2624 = vsel %vm2533, %v2598, %v2424
      %v2625 = vsel %vm2533, %v2599, %v2426
      %v2626 = vsel %vm2533, %v2600, %v2428
      %v2627 = vsel %vm2533, %v2601, %v2430
      %v2628 = vsel %vm2533, %v2602, %v2432
      %v2629 = vsel %vm2533, %v2603, %v2434
      %v2630 = vsel %vm2533, %v2604, %v2436
      %v2631 = vsel %vm2533, %v2605, %v2438
      %v2632 = vsel %vm2533, %v2606, %v2440
      %v2633 = vsel %vm2533, %v2607, %v2442
      %v2634 = vsel %vm2533, %v2608, %v2444
      %v2635 = vsel %vm2533, %v2609, %v2446
      %v2636 = vsel %vm2533, %v2610, %v2448
      %v2637 = vsel %vm2533, %v2611, %v2450
      %v2639 = vperm.slane %v1833, 0
      %v2641 = vsel %vm1399, %v2274, 0
      %v2643 = vsel %vm1399, %v2276, 0
      %v2645 = vsel %vm1399, %v2278, 0
      %v2647 = vsel %vm1399, %v2280, 0
      %v2649 = vsel %vm1399, %v2282, 0
      %v2651 = vsel %vm1399, %v2284, 0
      %v2653 = vsel %vm1399, %v2286, 0
      %v2655 = vsel %vm1399, %v2288, 0
      %v2657 = vsel %vm1399, %v2290, 0
      %v2659 = vsel %vm1399, %v2292, 0
      %v2661 = vsel %vm1399, %v2294, 0
      %v2663 = vsel %vm1399, %v2296, 0
      %v2665 = vsel %vm1399, %v2298, 0
      %v2667 = vsel %vm1399, %v2300, 0
      %v2669 = vsel %vm1399, %v2302, 0
      %v2671 = vsel %vm1399, %v2304, 0
      %v2673 = vsel %vm1399, %v2306, 0
      %v2675 = vsel %vm1399, %v2308, 0
      %v2677 = vsel %vm1399, %v2310, 0
      %v2679 = vsel %vm1399, %v2312, 0
      %v2681 = vsel %vm1399, %v2314, 0
      %v2683 = vsel %vm1399, %v2316, 0
      %v2685 = vsel %vm1399, %v2396, 0
      %v2687 = vsel %vm1399, %v2398, 0
      %v2689 = vsel %vm1399, %v2478, 0
      %v2691 = vsel %vm1399, %v2480, 0
      %2693 = vmatpush.msra.mxu0 %v1812
      %2694 = vmatpush.msra.mxu0 %v1811
      %2695 = vmatpush.msra.mxu0 %v1810
      %2696 = vmatpush.msra.mxu0 %v1809
      %2697 = vmatpush.msra.mxu0 %v1808
      %2698 = vmatpush.msra.mxu0 %v1807
      %2699 = vmatpush.msra.mxu0 %v1806
      %2700 = vmatpush.msra.mxu0 %v1805
      %2701 = vmatpush.msra.mxu0 %v1804
      %2702 = vmatpush.msra.mxu0 %v1803
      %2703 = vmatpush.msra.mxu0 %v1802
      %2704 = vmatpush.msra.mxu0 %v1801
      %2705 = vmatpush.msra.mxu0 %v1800
      %2706 = vmatpush.msra.mxu0 %v1799
      %2707 = vmatpush.msra.mxu0 %v1798
      %2708 = vmatpush.msra.mxu0 %v1797
      %2709 = vmatmul.f32.gmra.mxu0 %v2534
      %v2710 = vpop.f32.mrf.mxu0
      %v2711 = vadd.f32 %v2639, %v2710
      %2712 = vmatmul.f32.gmra.mxu0 %v2535
      %v2713 = vpop.f32.mrf.mxu0
      %v2714 = vadd.f32 %v2639, %v2713
      %2715 = vmatmul.f32.gmra.mxu0 %v2536
      %v2716 = vpop.f32.mrf.mxu0
      %v2717 = vadd.f32 %v2639, %v2716
      %2718 = vmatmul.f32.gmra.mxu0 %v2537
      %v2719 = vpop.f32.mrf.mxu0
      %v2720 = vadd.f32 %v2639, %v2719
      %2721 = vmatmul.f32.gmra.mxu0 %v2538
      %v2722 = vpop.f32.mrf.mxu0
      %v2723 = vadd.f32 %v2639, %v2722
      %2724 = vmatmul.f32.gmra.mxu0 %v2539
      %v2725 = vpop.f32.mrf.mxu0
      %v2726 = vadd.f32 %v2639, %v2725
      %2727 = vmatmul.f32.gmra.mxu0 %v2540
      %v2728 = vpop.f32.mrf.mxu0
      %v2729 = vadd.f32 %v2639, %v2728
      %2730 = vmatmul.f32.gmra.mxu0 %v2541
      %v2731 = vpop.f32.mrf.mxu0
      %v2732 = vadd.f32 %v2639, %v2731
      %2733 = vmatmul.f32.gmra.mxu0 %v2542
      %v2734 = vpop.f32.mrf.mxu0
      %v2735 = vadd.f32 %v2639, %v2734
      %2736 = vmatmul.f32.gmra.mxu0 %v2543
      %v2737 = vpop.f32.mrf.mxu0
      %v2738 = vadd.f32 %v2639, %v2737
      %2739 = vmatmul.f32.gmra.mxu0 %v2544
      %v2740 = vpop.f32.mrf.mxu0
      %v2741 = vadd.f32 %v2639, %v2740
      %2742 = vmatmul.f32.gmra.mxu0 %v2545
      %v2743 = vpop.f32.mrf.mxu0
      %v2744 = vadd.f32 %v2639, %v2743
      %2745 = vmatmul.f32.gmra.mxu0 %v2546
      %v2746 = vpop.f32.mrf.mxu0
      %v2747 = vadd.f32 %v2639, %v2746
      %2748 = vmatmul.f32.gmra.mxu0 %v2547
      %v2749 = vpop.f32.mrf.mxu0
      %v2750 = vadd.f32 %v2639, %v2749
      %2751 = vmatmul.f32.gmra.mxu0 %v2548
      %v2752 = vpop.f32.mrf.mxu0
      %v2753 = vadd.f32 %v2639, %v2752
      %2754 = vmatmul.f32.gmra.mxu0 %v2549
      %v2755 = vpop.f32.mrf.mxu0
      %v2756 = vadd.f32 %v2639, %v2755
      %2757 = vmatmul.f32.gmra.mxu0 %v2550
      %v2758 = vpop.f32.mrf.mxu0
      %v2759 = vadd.f32 %v2639, %v2758
      %2760 = vmatmul.f32.gmra.mxu0 %v2551
      %v2761 = vpop.f32.mrf.mxu0
      %v2762 = vadd.f32 %v2639, %v2761
      %2763 = vmatmul.f32.gmra.mxu0 %v2552
      %v2764 = vpop.f32.mrf.mxu0
      %v2765 = vadd.f32 %v2639, %v2764
      %2766 = vmatmul.f32.gmra.mxu0 %v2553
      %v2767 = vpop.f32.mrf.mxu0
      %v2768 = vadd.f32 %v2639, %v2767
      %2769 = vmatmul.f32.gmra.mxu0 %v2554
      %v2770 = vpop.f32.mrf.mxu0
      %v2771 = vadd.f32 %v2639, %v2770
      %2772 = vmatmul.f32.gmra.mxu0 %v2555
      %v2773 = vpop.f32.mrf.mxu0
      %v2774 = vadd.f32 %v2639, %v2773
      %2775 = vmatmul.f32.gmra.mxu0 %v2556
      %v2776 = vpop.f32.mrf.mxu0
      %v2777 = vadd.f32 %v2639, %v2776
      %2778 = vmatmul.f32.gmra.mxu0 %v2557
      %v2779 = vpop.f32.mrf.mxu0
      %v2780 = vadd.f32 %v2639, %v2779
      %2781 = vmatmul.f32.gmra.mxu0 %v2558
      %v2782 = vpop.f32.mrf.mxu0
      %v2783 = vadd.f32 %v2639, %v2782
      %2784 = vmatmul.f32.gmra.mxu0 %v2559
      %v2785 = vpop.f32.mrf.mxu0
      %v2786 = vadd.f32 %v2639, %v2785
      %2787 = vdwg.mxu0
      %2788 = vmatpush.msra.mxu0 %v1828
      %2789 = vmatpush.msra.mxu0 %v1827
      %2790 = vmatpush.msra.mxu0 %v1826
      %2791 = vmatpush.msra.mxu0 %v1825
      %2792 = vmatpush.msra.mxu0 %v1824
      %2793 = vmatpush.msra.mxu0 %v1823
      %2794 = vmatpush.msra.mxu0 %v1822
      %2795 = vmatpush.msra.mxu0 %v1821
      %2796 = vmatpush.msra.mxu0 %v1820
      %2797 = vmatpush.msra.mxu0 %v1819
      %2798 = vmatpush.msra.mxu0 %v1818
      %2799 = vmatpush.msra.mxu0 %v1817
      %2800 = vmatpush.msra.mxu0 %v1816
      %2801 = vmatpush.msra.mxu0 %v1815
      %2802 = vmatpush.msra.mxu0 %v1814
      %2803 = vmatpush.msra.mxu0 %v1813
      %2804 = vmatmul.f32.gmra.mxu0 %v2612
      %v2805 = vpop.f32.mrf.mxu0
      %v2806 = vadd.f32 %v2711, %v2805
      %2807 = vmatmul.f32.gmra.mxu0 %v2613
      %v2808 = vpop.f32.mrf.mxu0
      %v2809 = vadd.f32 %v2714, %v2808
      %2810 = vmatmul.f32.gmra.mxu0 %v2614
      %v2811 = vpop.f32.mrf.mxu0
      %v2812 = vadd.f32 %v2717, %v2811
      %2813 = vmatmul.f32.gmra.mxu0 %v2615
      %v2814 = vpop.f32.mrf.mxu0
      %v2815 = vadd.f32 %v2720, %v2814
      %2816 = vmatmul.f32.gmra.mxu0 %v2616
      %v2817 = vpop.f32.mrf.mxu0
      %v2818 = vadd.f32 %v2723, %v2817
      %2819 = vmatmul.f32.gmra.mxu0 %v2617
      %v2820 = vpop.f32.mrf.mxu0
      %v2821 = vadd.f32 %v2726, %v2820
      %2822 = vmatmul.f32.gmra.mxu0 %v2618
      %v2823 = vpop.f32.mrf.mxu0
      %v2824 = vadd.f32 %v2729, %v2823
      %2825 = vmatmul.f32.gmra.mxu0 %v2619
      %v2826 = vpop.f32.mrf.mxu0
      %v2827 = vadd.f32 %v2732, %v2826
      %2828 = vmatmul.f32.gmra.mxu0 %v2620
      %v2829 = vpop.f32.mrf.mxu0
      %v2830 = vadd.f32 %v2735, %v2829
      %2831 = vmatmul.f32.gmra.mxu0 %v2621
      %v2832 = vpop.f32.mrf.mxu0
      %v2833 = vadd.f32 %v2738, %v2832
      %2834 = vmatmul.f32.gmra.mxu0 %v2622
      %v2835 = vpop.f32.mrf.mxu0
      %v2836 = vadd.f32 %v2741, %v2835
      %2837 = vmatmul.f32.gmra.mxu0 %v2623
      %v2838 = vpop.f32.mrf.mxu0
      %v2839 = vadd.f32 %v2744, %v2838
      %2840 = vmatmul.f32.gmra.mxu0 %v2624
      %v2841 = vpop.f32.mrf.mxu0
      %v2842 = vadd.f32 %v2747, %v2841
      %2843 = vmatmul.f32.gmra.mxu0 %v2625
      %v2844 = vpop.f32.mrf.mxu0
      %v2845 = vadd.f32 %v2750, %v2844
      %2846 = vmatmul.f32.gmra.mxu0 %v2626
      %v2847 = vpop.f32.mrf.mxu0
      %v2848 = vadd.f32 %v2753, %v2847
      %2849 = vmatmul.f32.gmra.mxu0 %v2627
      %v2850 = vpop.f32.mrf.mxu0
      %v2851 = vadd.f32 %v2756, %v2850
      %2852 = vmatmul.f32.gmra.mxu0 %v2628
      %v2853 = vpop.f32.mrf.mxu0
      %v2854 = vadd.f32 %v2759, %v2853
      %2855 = vmatmul.f32.gmra.mxu0 %v2629
      %v2856 = vpop.f32.mrf.mxu0
      %v2857 = vadd.f32 %v2762, %v2856
      %2858 = vmatmul.f32.gmra.mxu0 %v2630
      %v2859 = vpop.f32.mrf.mxu0
      %v2860 = vadd.f32 %v2765, %v2859
      %2861 = vmatmul.f32.gmra.mxu0 %v2631
      %v2862 = vpop.f32.mrf.mxu0
      %v2863 = vadd.f32 %v2768, %v2862
      %2864 = vmatmul.f32.gmra.mxu0 %v2632
      %v2865 = vpop.f32.mrf.mxu0
      %v2866 = vadd.f32 %v2771, %v2865
      %2867 = vmatmul.f32.gmra.mxu0 %v2633
      %v2868 = vpop.f32.mrf.mxu0
      %v2869 = vadd.f32 %v2774, %v2868
      %2870 = vmatmul.f32.gmra.mxu0 %v2634
      %v2871 = vpop.f32.mrf.mxu0
      %v2872 = vadd.f32 %v2777, %v2871
      %2873 = vmatmul.f32.gmra.mxu0 %v2635
      %v2874 = vpop.f32.mrf.mxu0
      %v2875 = vadd.f32 %v2780, %v2874
      %2876 = vmatmul.f32.gmra.mxu0 %v2636
      %v2877 = vpop.f32.mrf.mxu0
      %v2878 = vadd.f32 %v2783, %v2877
      %2879 = vmatmul.f32.gmra.mxu0 %v2637
      %v2880 = vpop.f32.mrf.mxu0
      %v2881 = vadd.f32 %v2786, %v2880
      %2882 = vdwg.mxu0
      %2883 = vmatpush.msra.mxu0 0.0
      %2884 = vmatpush.msra.mxu0 0.0
      %2885 = vmatpush.msra.mxu0 0.0
      %2886 = vmatpush.msra.mxu0 0.0
      %2887 = vmatpush.msra.mxu0 0.0
      %2888 = vmatpush.msra.mxu0 0.0
      %2889 = vmatpush.msra.mxu0 0.0
      %2890 = vmatpush.msra.mxu0 0.0
      %2891 = vmatpush.msra.mxu0 0.0
      %2892 = vmatpush.msra.mxu0 0.0
      %2893 = vmatpush.msra.mxu0 0.0
      %2894 = vmatpush.msra.mxu0 0.0
      %2895 = vmatpush.msra.mxu0 %v1832
      %2896 = vmatpush.msra.mxu0 %v1831
      %2897 = vmatpush.msra.mxu0 %v1830
      %2898 = vmatpush.msra.mxu0 %v1829
      %2899 = vmatmul.f32.gmra.mxu0 %v2641
      %v2900 = vpop.f32.mrf.mxu0
      %v2901 = vadd.f32 %v2806, %v2900
      %2902 = vmatmul.f32.gmra.mxu0 %v2643
      %v2903 = vpop.f32.mrf.mxu0
      %v2904 = vadd.f32 %v2809, %v2903
      %2905 = vmatmul.f32.gmra.mxu0 %v2645
      %v2906 = vpop.f32.mrf.mxu0
      %v2907 = vadd.f32 %v2812, %v2906
      %2908 = vmatmul.f32.gmra.mxu0 %v2647
      %v2909 = vpop.f32.mrf.mxu0
      %v2910 = vadd.f32 %v2815, %v2909
      %2911 = vmatmul.f32.gmra.mxu0 %v2649
      %v2912 = vpop.f32.mrf.mxu0
      %v2913 = vadd.f32 %v2818, %v2912
      %2914 = vmatmul.f32.gmra.mxu0 %v2651
      %v2915 = vpop.f32.mrf.mxu0
      %v2916 = vadd.f32 %v2821, %v2915
      %2917 = vmatmul.f32.gmra.mxu0 %v2653
      %v2918 = vpop.f32.mrf.mxu0
      %v2919 = vadd.f32 %v2824, %v2918
      %2920 = vmatmul.f32.gmra.mxu0 %v2655
      %v2921 = vpop.f32.mrf.mxu0
      %v2922 = vadd.f32 %v2827, %v2921
      %2923 = vmatmul.f32.gmra.mxu0 %v2657
      %v2924 = vpop.f32.mrf.mxu0
      %v2925 = vadd.f32 %v2830, %v2924
      %2926 = vmatmul.f32.gmra.mxu0 %v2659
      %v2927 = vpop.f32.mrf.mxu0
      %v2928 = vadd.f32 %v2833, %v2927
      %2929 = vmatmul.f32.gmra.mxu0 %v2661
      %v2930 = vpop.f32.mrf.mxu0
      %v2931 = vadd.f32 %v2836, %v2930
      %2932 = vmatmul.f32.gmra.mxu0 %v2663
      %v2933 = vpop.f32.mrf.mxu0
      %v2934 = vadd.f32 %v2839, %v2933
      %2935 = vmatmul.f32.gmra.mxu0 %v2665
      %v2936 = vpop.f32.mrf.mxu0
      %v2937 = vadd.f32 %v2842, %v2936
      %2938 = vmatmul.f32.gmra.mxu0 %v2667
      %v2939 = vpop.f32.mrf.mxu0
      %v2940 = vadd.f32 %v2845, %v2939
      %2941 = vmatmul.f32.gmra.mxu0 %v2669
      %v2942 = vpop.f32.mrf.mxu0
      %v2943 = vadd.f32 %v2848, %v2942
      %2944 = vmatmul.f32.gmra.mxu0 %v2671
      %v2945 = vpop.f32.mrf.mxu0
      %v2946 = vadd.f32 %v2851, %v2945
      %2947 = vmatmul.f32.gmra.mxu0 %v2673
      %v2948 = vpop.f32.mrf.mxu0
      %v2949 = vadd.f32 %v2854, %v2948
      %2950 = vmatmul.f32.gmra.mxu0 %v2675
      %v2951 = vpop.f32.mrf.mxu0
      %v2952 = vadd.f32 %v2857, %v2951
      %2953 = vmatmul.f32.gmra.mxu0 %v2677
      %v2954 = vpop.f32.mrf.mxu0
      %v2955 = vadd.f32 %v2860, %v2954
      %2956 = vmatmul.f32.gmra.mxu0 %v2679
      %v2957 = vpop.f32.mrf.mxu0
      %v2958 = vadd.f32 %v2863, %v2957
      %2959 = vmatmul.f32.gmra.mxu0 %v2681
      %v2960 = vpop.f32.mrf.mxu0
      %v2961 = vadd.f32 %v2866, %v2960
      %2962 = vmatmul.f32.gmra.mxu0 %v2683
      %v2963 = vpop.f32.mrf.mxu0
      %v2964 = vadd.f32 %v2869, %v2963
      %2965 = vmatmul.f32.gmra.mxu0 %v2685
      %v2966 = vpop.f32.mrf.mxu0
      %v2967 = vadd.f32 %v2872, %v2966
      %2968 = vmatmul.f32.gmra.mxu0 %v2687
      %v2969 = vpop.f32.mrf.mxu0
      %v2970 = vadd.f32 %v2875, %v2969
      %2971 = vmatmul.f32.gmra.mxu0 %v2689
      %v2972 = vpop.f32.mrf.mxu0
      %v2973 = vadd.f32 %v2878, %v2972
      %2974 = vmatmul.f32.gmra.mxu0 %v2691
      %v2975 = vpop.f32.mrf.mxu0
      %v2976 = vadd.f32 %v2881, %v2975
      %2977 = vdwg.mxu0
      %v2978 = vmax.f32 %v2901, 0.0
      %v2979 = vmax.f32 %v2904, 0.0
      %v2980 = vmax.f32 %v2907, 0.0
      %v2981 = vmax.f32 %v2910, 0.0
      %v2982 = vmax.f32 %v2913, 0.0
      %v2983 = vmax.f32 %v2916, 0.0
      %v2984 = vmax.f32 %v2919, 0.0
      %v2985 = vmax.f32 %v2922, 0.0
      %v2986 = vmax.f32 %v2925, 0.0
      %v2987 = vmax.f32 %v2928, 0.0
      %v2988 = vmax.f32 %v2931, 0.0
      %v2989 = vmax.f32 %v2934, 0.0
      %v2990 = vmax.f32 %v2937, 0.0
      %v2991 = vmax.f32 %v2940, 0.0
      %v2992 = vmax.f32 %v2943, 0.0
      %v2993 = vmax.f32 %v2946, 0.0
      %v2994 = vmax.f32 %v2949, 0.0
      %v2995 = vmax.f32 %v2952, 0.0
      %v2996 = vmax.f32 %v2955, 0.0
      %v2997 = vmax.f32 %v2958, 0.0
      %v2998 = vmax.f32 %v2961, 0.0
      %v2999 = vmax.f32 %v2964, 0.0
      %v3000 = vmax.f32 %v2967, 0.0
      %v3001 = vmax.f32 %v2970, 0.0
      %v3002 = vmax.f32 %v2973, 0.0
      %v3003 = vmax.f32 %v2976, 0.0
      %v3004 = vld [vmem:[%s5] sm:$0xff]
      %v3005 = vld [vmem:[%s5 + $0x8] sm:$0xff]
      %v3006 = vld [vmem:[%s5 + $0x10] sm:$0xff]
      %v3007 = vld [vmem:[%s5 + $0x18] sm:$0xff]
      %v3008 = vld [vmem:[%s5 + $0x20] sm:$0xff]
      %v3009 = vld [vmem:[%s5 + $0x28] sm:$0xff]
      %v3010 = vld [vmem:[%s5 + $0x30] sm:$0xff]
      %v3011 = vld [vmem:[%s5 + $0x38] sm:$0xff]
      %v3012 = vld [vmem:[%s5 + $0x40] sm:$0xff]
      %v3013 = vld [vmem:[%s5 + $0x48] sm:$0xff]
      %v3014 = vld [vmem:[%s5 + $0x50] sm:$0xff]
      %v3015 = vld [vmem:[%s5 + $0x58] sm:$0xff]
      %v3016 = vld [vmem:[%s5 + $0x60] sm:$0xff]
      %v3017 = vld [vmem:[%s5 + $0x68] sm:$0xff]
      %v3018 = vld [vmem:[%s5 + $0x70] sm:$0xff]
      %v3019 = vld [vmem:[%s5 + $0x78] sm:$0xff]
      %v3020 = vld [vmem:[%s5 + $0x80] sm:$0xff]
      %v3021 = vld [vmem:[%s5 + $0x88] sm:$0xff]
      %v3022 = vld [vmem:[%s5 + $0x90] sm:$0xff]
      %v3023 = vld [vmem:[%s5 + $0x98] sm:$0xff]
      %v3024 = vld [vmem:[%s5 + $0xa0] sm:$0xff]
      %v3025 = vld [vmem:[%s5 + $0xa8] sm:$0xff]
      %v3026 = vld [vmem:[%s5 + $0xb0] sm:$0xff]
      %v3027 = vld [vmem:[%s5 + $0xb8] sm:$0xff]
      %v3028 = vld [vmem:[%s5 + $0xc0] sm:$0xff]
      %v3029 = vld [vmem:[%s5 + $0xc8] sm:$0xff]
      %v3030 = vld [vmem:[%s5 + $0xd0] sm:$0xff]
      %v3031 = vld [vmem:[%s5 + $0xd8] sm:$0xff]
      %v3032 = vld [vmem:[%s5 + $0xe0] sm:$0xff]
      %v3033 = vld [vmem:[%s5 + $0xe8] sm:$0xff]
      %v3034 = vld [vmem:[%s5 + $0xf0] sm:$0xff]
      %v3035 = vld [vmem:[%s5 + $0xf8] sm:$0xff]
      %v3036 = vld [vmem:[%s5 + $0x100] sm:$0xff]
      %v3037 = vld [vmem:[%s5 + $0x108] sm:$0xff]
      %v3038 = vld [vmem:[%s5 + $0x110] sm:$0xff]
      %v3039 = vld [vmem:[%s5 + $0x118] sm:$0xff]
      %v3040 = vld [vmem:[%s6] sm:$0x1]
      %3062 = vrot.lane.b32.xlu0 %v2980, 32
      %v3063 = vpop.permute.xlu0 %3062
      %3064 = vrot.lane.b32.xlu0 %v2981, 32
      %v3065 = vpop.permute.xlu0 %3064
      %3066 = vrot.lane.b32.xlu0 %v2982, 32
      %v3067 = vpop.permute.xlu0 %3066
      %3068 = vrot.lane.b32.xlu0 %v2983, 32
      %v3069 = vpop.permute.xlu0 %3068
      %3070 = vrot.lane.b32.xlu0 %v2984, 32
      %v3071 = vpop.permute.xlu0 %3070
      %3072 = vrot.lane.b32.xlu0 %v2985, 32
      %v3073 = vpop.permute.xlu0 %3072
      %3074 = vrot.lane.b32.xlu0 %v2986, 32
      %v3075 = vpop.permute.xlu0 %3074
      %3076 = vrot.lane.b32.xlu0 %v2987, 32
      %v3077 = vpop.permute.xlu0 %3076
      %3078 = vrot.lane.b32.xlu0 %v2988, 32
      %v3079 = vpop.permute.xlu0 %3078
      %3080 = vrot.lane.b32.xlu0 %v2989, 32
      %v3081 = vpop.permute.xlu0 %3080
      %3082 = vrot.lane.b32.xlu0 %v2990, 32
      %v3083 = vpop.permute.xlu0 %3082
      %3084 = vrot.lane.b32.xlu0 %v2991, 32
      %v3085 = vpop.permute.xlu0 %3084
      %3086 = vrot.lane.b32.xlu0 %v2992, 32
      %v3087 = vpop.permute.xlu0 %3086
      %3088 = vrot.lane.b32.xlu0 %v2993, 32
      %v3089 = vpop.permute.xlu0 %3088
      %3090 = vrot.lane.b32.xlu0 %v2994, 32
      %v3091 = vpop.permute.xlu0 %3090
      %3092 = vrot.lane.b32.xlu0 %v2995, 32
      %v3093 = vpop.permute.xlu0 %3092
      %3094 = vrot.lane.b32.xlu0 %v2996, 32
      %v3095 = vpop.permute.xlu0 %3094
      %3096 = vrot.lane.b32.xlu0 %v2997, 32
      %v3097 = vpop.permute.xlu0 %3096
      %3098 = vrot.lane.b32.xlu0 %v2998, 32
      %v3099 = vpop.permute.xlu0 %3098
      %3100 = vrot.lane.b32.xlu0 %v2999, 32
      %v3101 = vpop.permute.xlu0 %3100
      %3102 = vrot.lane.b32.xlu0 %v3000, 32
      %v3103 = vpop.permute.xlu0 %3102
      %3127 = vrot.lane.b32.xlu0 %v2982, 64
      %v3128 = vpop.permute.xlu0 %3127
      %3129 = vrot.lane.b32.xlu0 %v2983, 64
      %v3130 = vpop.permute.xlu0 %3129
      %3131 = vrot.lane.b32.xlu0 %v2984, 64
      %v3132 = vpop.permute.xlu0 %3131
      %3133 = vrot.lane.b32.xlu0 %v2985, 64
      %v3134 = vpop.permute.xlu0 %3133
      %3135 = vrot.lane.b32.xlu0 %v2986, 64
      %v3136 = vpop.permute.xlu0 %3135
      %3137 = vrot.lane.b32.xlu0 %v2987, 64
      %v3138 = vpop.permute.xlu0 %3137
      %3139 = vrot.lane.b32.xlu0 %v2988, 64
      %v3140 = vpop.permute.xlu0 %3139
      %3141 = vrot.lane.b32.xlu0 %v2989, 64
      %v3142 = vpop.permute.xlu0 %3141
      %3143 = vrot.lane.b32.xlu0 %v2990, 64
      %v3144 = vpop.permute.xlu0 %3143
      %3145 = vrot.lane.b32.xlu0 %v2991, 64
      %v3146 = vpop.permute.xlu0 %3145
      %3147 = vrot.lane.b32.xlu0 %v2992, 64
      %v3148 = vpop.permute.xlu0 %3147
      %3149 = vrot.lane.b32.xlu0 %v2993, 64
      %v3150 = vpop.permute.xlu0 %3149
      %3151 = vrot.lane.b32.xlu0 %v2994, 64
      %v3152 = vpop.permute.xlu0 %3151
      %3153 = vrot.lane.b32.xlu0 %v2995, 64
      %v3154 = vpop.permute.xlu0 %3153
      %3155 = vrot.lane.b32.xlu0 %v2996, 64
      %v3156 = vpop.permute.xlu0 %3155
      %3157 = vrot.lane.b32.xlu0 %v2997, 64
      %v3158 = vpop.permute.xlu0 %3157
      %3159 = vrot.lane.b32.xlu0 %v2998, 64
      %v3160 = vpop.permute.xlu0 %3159
      %3161 = vrot.lane.b32.xlu0 %v2999, 64
      %v3162 = vpop.permute.xlu0 %3161
      %3163 = vrot.lane.b32.xlu0 %v3000, 64
      %v3164 = vpop.permute.xlu0 %3163
      %3165 = vrot.lane.b32.xlu0 %v3001, 64
      %v3166 = vpop.permute.xlu0 %3165
      %3167 = vrot.lane.b32.xlu0 %v3002, 64
      %v3168 = vpop.permute.xlu0 %3167
      %v3192 = vrot.slane %v2978, 1
      %v3193 = vrot.slane %v2979, 1
      %v3194 = vsel %vm600, %v3192, %v3193
      %v3195 = vrot.slane %v2980, 1
      %v3196 = vsel %vm600, %v3193, %v3195
      %v3197 = vrot.slane %v2981, 1
      %v3198 = vsel %vm600, %v3195, %v3197
      %v3199 = vrot.slane %v2982, 1
      %v3200 = vsel %vm600, %v3197, %v3199
      %v3201 = vrot.slane %v2983, 1
      %v3202 = vsel %vm600, %v3199, %v3201
      %v3203 = vrot.slane %v2984, 1
      %v3204 = vsel %vm600, %v3201, %v3203
      %v3205 = vrot.slane %v2985, 1
      %v3206 = vsel %vm600, %v3203, %v3205
      %v3207 = vrot.slane %v2986, 1
      %v3208 = vsel %vm600, %v3205, %v3207
      %v3209 = vrot.slane %v2987, 1
      %v3210 = vsel %vm600, %v3207, %v3209
      %v3211 = vrot.slane %v2988, 1
      %v3212 = vsel %vm600, %v3209, %v3211
      %v3213 = vrot.slane %v2989, 1
      %v3214 = vsel %vm600, %v3211, %v3213
      %v3215 = vrot.slane %v2990, 1
      %v3216 = vsel %vm600, %v3213, %v3215
      %v3217 = vrot.slane %v2991, 1
      %v3218 = vsel %vm600, %v3215, %v3217
      %v3219 = vrot.slane %v2992, 1
      %v3220 = vsel %vm600, %v3217, %v3219
      %v3221 = vrot.slane %v2993, 1
      %v3222 = vsel %vm600, %v3219, %v3221
      %v3223 = vrot.slane %v2994, 1
      %v3224 = vsel %vm600, %v3221, %v3223
      %v3225 = vrot.slane %v2995, 1
      %v3226 = vsel %vm600, %v3223, %v3225
      %v3227 = vrot.slane %v2996, 1
      %v3228 = vsel %vm600, %v3225, %v3227
      %v3229 = vrot.slane %v2997, 1
      %v3230 = vsel %vm600, %v3227, %v3229
      %v3231 = vrot.slane %v2998, 1
      %v3232 = vsel %vm600, %v3229, %v3231
      %v3233 = vrot.slane %v2999, 1
      %v3234 = vsel %vm600, %v3231, %v3233
      %3235 = vrot.lane.b32.xlu0 %v3194, 96
      %v3236 = vpop.permute.xlu0 %3235
      %3237 = vrot.lane.b32.xlu0 %v3196, 96
      %v3238 = vpop.permute.xlu0 %3237
      %3239 = vrot.lane.b32.xlu0 %v3198, 96
      %v3240 = vpop.permute.xlu0 %3239
      %3241 = vrot.lane.b32.xlu0 %v3200, 96
      %v3242 = vpop.permute.xlu0 %3241
      %3243 = vrot.lane.b32.xlu0 %v3202, 96
      %v3244 = vpop.permute.xlu0 %3243
      %3245 = vrot.lane.b32.xlu0 %v3204, 96
      %v3246 = vpop.permute.xlu0 %3245
      %3247 = vrot.lane.b32.xlu0 %v3206, 96
      %v3248 = vpop.permute.xlu0 %3247
      %3249 = vrot.lane.b32.xlu0 %v3208, 96
      %v3250 = vpop.permute.xlu0 %3249
      %3251 = vrot.lane.b32.xlu0 %v3210, 96
      %v3252 = vpop.permute.xlu0 %3251
      %3253 = vrot.lane.b32.xlu0 %v3212, 96
      %v3254 = vpop.permute.xlu0 %3253
      %3255 = vrot.lane.b32.xlu0 %v3214, 96
      %v3256 = vpop.permute.xlu0 %3255
      %3257 = vrot.lane.b32.xlu0 %v3216, 96
      %v3258 = vpop.permute.xlu0 %3257
      %3259 = vrot.lane.b32.xlu0 %v3218, 96
      %v3260 = vpop.permute.xlu0 %3259
      %3261 = vrot.lane.b32.xlu0 %v3220, 96
      %v3262 = vpop.permute.xlu0 %3261
      %3263 = vrot.lane.b32.xlu0 %v3222, 96
      %v3264 = vpop.permute.xlu0 %3263
      %3265 = vrot.lane.b32.xlu0 %v3224, 96
      %v3266 = vpop.permute.xlu0 %3265
      %3267 = vrot.lane.b32.xlu0 %v3226, 96
      %v3268 = vpop.permute.xlu0 %3267
      %3269 = vrot.lane.b32.xlu0 %v3228, 96
      %v3270 = vpop.permute.xlu0 %3269
      %3271 = vrot.lane.b32.xlu0 %v3230, 96
      %v3272 = vpop.permute.xlu0 %3271
      %3273 = vrot.lane.b32.xlu0 %v3232, 96
      %v3274 = vpop.permute.xlu0 %3273
      %3275 = vrot.lane.b32.xlu0 %v3234, 96
      %v3276 = vpop.permute.xlu0 %3275
      %v3298 = vrot.slane %v3000, 1
      %v3299 = vsel %vm600, %v3233, %v3298
      %v3300 = vrot.slane %v3001, 1
      %v3301 = vsel %vm600, %v3298, %v3300
      %v3324 = vrot.slane %v3002, 1
      %v3325 = vsel %vm600, %v3300, %v3324
      %v3326 = vrot.slane %v3003, 1
      %v3327 = vsel %vm600, %v3324, %v3326
      %3328 = vrot.lane.b32.xlu0 %v3202, 32
      %v3329 = vpop.permute.xlu0 %3328
      %3330 = vrot.lane.b32.xlu0 %v3204, 32
      %v3331 = vpop.permute.xlu0 %3330
      %3332 = vrot.lane.b32.xlu0 %v3206, 32
      %v3333 = vpop.permute.xlu0 %3332
      %3334 = vrot.lane.b32.xlu0 %v3208, 32
      %v3335 = vpop.permute.xlu0 %3334
      %3336 = vrot.lane.b32.xlu0 %v3210, 32
      %v3337 = vpop.permute.xlu0 %3336
      %3338 = vrot.lane.b32.xlu0 %v3212, 32
      %v3339 = vpop.permute.xlu0 %3338
      %3340 = vrot.lane.b32.xlu0 %v3214, 32
      %v3341 = vpop.permute.xlu0 %3340
      %3342 = vrot.lane.b32.xlu0 %v3216, 32
      %v3343 = vpop.permute.xlu0 %3342
      %3344 = vrot.lane.b32.xlu0 %v3218, 32
      %v3345 = vpop.permute.xlu0 %3344
      %3346 = vrot.lane.b32.xlu0 %v3220, 32
      %v3347 = vpop.permute.xlu0 %3346
      %3348 = vrot.lane.b32.xlu0 %v3222, 32
      %v3349 = vpop.permute.xlu0 %3348
      %3350 = vrot.lane.b32.xlu0 %v3224, 32
      %v3351 = vpop.permute.xlu0 %3350
      %3352 = vrot.lane.b32.xlu0 %v3226, 32
      %v3353 = vpop.permute.xlu0 %3352
      %3354 = vrot.lane.b32.xlu0 %v3228, 32
      %v3355 = vpop.permute.xlu0 %3354
      %3356 = vrot.lane.b32.xlu0 %v3230, 32
      %v3357 = vpop.permute.xlu0 %3356
      %3358 = vrot.lane.b32.xlu0 %v3232, 32
      %v3359 = vpop.permute.xlu0 %3358
      %3360 = vrot.lane.b32.xlu0 %v3234, 32
      %v3361 = vpop.permute.xlu0 %3360
      %3362 = vrot.lane.b32.xlu0 %v3299, 32
      %v3363 = vpop.permute.xlu0 %3362
      %3364 = vrot.lane.b32.xlu0 %v3301, 32
      %v3365 = vpop.permute.xlu0 %3364
      %3366 = vrot.lane.b32.xlu0 %v3325, 32
      %v3367 = vpop.permute.xlu0 %3366
      %3368 = vrot.lane.b32.xlu0 %v3327, 32
      %v3369 = vpop.permute.xlu0 %3368
      %v3391 = vrot.slane %v2978, 2
      %v3392 = vrot.slane %v2979, 2
      %v3393 = vsel %vm952, %v3391, %v3392
      %v3394 = vrot.slane %v2980, 2
      %v3395 = vsel %vm952, %v3392, %v3394
      %v3396 = vrot.slane %v2981, 2
      %v3397 = vsel %vm952, %v3394, %v3396
      %v3398 = vrot.slane %v2982, 2
      %v3399 = vsel %vm952, %v3396, %v3398
      %v3400 = vrot.slane %v2983, 2
      %v3401 = vsel %vm952, %v3398, %v3400
      %v3402 = vrot.slane %v2984, 2
      %v3403 = vsel %vm952, %v3400, %v3402
      %v3404 = vrot.slane %v2985, 2
      %v3405 = vsel %vm952, %v3402, %v3404
      %v3406 = vrot.slane %v2986, 2
      %v3407 = vsel %vm952, %v3404, %v3406
      %v3408 = vrot.slane %v2987, 2
      %v3409 = vsel %vm952, %v3406, %v3408
      %v3410 = vrot.slane %v2988, 2
      %v3411 = vsel %vm952, %v3408, %v3410
      %v3412 = vrot.slane %v2989, 2
      %v3413 = vsel %vm952, %v3410, %v3412
      %v3414 = vrot.slane %v2990, 2
      %v3415 = vsel %vm952, %v3412, %v3414
      %v3416 = vrot.slane %v2991, 2
      %v3417 = vsel %vm952, %v3414, %v3416
      %v3418 = vrot.slane %v2992, 2
      %v3419 = vsel %vm952, %v3416, %v3418
      %v3420 = vrot.slane %v2993, 2
      %v3421 = vsel %vm952, %v3418, %v3420
      %v3422 = vrot.slane %v2994, 2
      %v3423 = vsel %vm952, %v3420, %v3422
      %v3424 = vrot.slane %v2995, 2
      %v3425 = vsel %vm952, %v3422, %v3424
      %v3426 = vrot.slane %v2996, 2
      %v3427 = vsel %vm952, %v3424, %v3426
      %v3428 = vrot.slane %v2997, 2
      %v3429 = vsel %vm952, %v3426, %v3428
      %v3430 = vrot.slane %v2998, 2
      %v3431 = vsel %vm952, %v3428, %v3430
      %v3432 = vrot.slane %v2999, 2
      %v3433 = vsel %vm952, %v3430, %v3432
      %3434 = vrot.lane.b32.xlu0 %v3393, 64
      %v3435 = vpop.permute.xlu0 %3434
      %3436 = vrot.lane.b32.xlu0 %v3395, 64
      %v3437 = vpop.permute.xlu0 %3436
      %3438 = vrot.lane.b32.xlu0 %v3397, 64
      %v3439 = vpop.permute.xlu0 %3438
      %3440 = vrot.lane.b32.xlu0 %v3399, 64
      %v3441 = vpop.permute.xlu0 %3440
      %3442 = vrot.lane.b32.xlu0 %v3401, 64
      %v3443 = vpop.permute.xlu0 %3442
      %3444 = vrot.lane.b32.xlu0 %v3403, 64
      %v3445 = vpop.permute.xlu0 %3444
      %3446 = vrot.lane.b32.xlu0 %v3405, 64
      %v3447 = vpop.permute.xlu0 %3446
      %3448 = vrot.lane.b32.xlu0 %v3407, 64
      %v3449 = vpop.permute.xlu0 %3448
      %3450 = vrot.lane.b32.xlu0 %v3409, 64
      %v3451 = vpop.permute.xlu0 %3450
      %3452 = vrot.lane.b32.xlu0 %v3411, 64
      %v3453 = vpop.permute.xlu0 %3452
      %3454 = vrot.lane.b32.xlu0 %v3413, 64
      %v3455 = vpop.permute.xlu0 %3454
      %3456 = vrot.lane.b32.xlu0 %v3415, 64
      %v3457 = vpop.permute.xlu0 %3456
      %3458 = vrot.lane.b32.xlu0 %v3417, 64
      %v3459 = vpop.permute.xlu0 %3458
      %3460 = vrot.lane.b32.xlu0 %v3419, 64
      %v3461 = vpop.permute.xlu0 %3460
      %3462 = vrot.lane.b32.xlu0 %v3421, 64
      %v3463 = vpop.permute.xlu0 %3462
      %3464 = vrot.lane.b32.xlu0 %v3423, 64
      %v3465 = vpop.permute.xlu0 %3464
      %3466 = vrot.lane.b32.xlu0 %v3425, 64
      %v3467 = vpop.permute.xlu0 %3466
      %3468 = vrot.lane.b32.xlu0 %v3427, 64
      %v3469 = vpop.permute.xlu0 %3468
      %3470 = vrot.lane.b32.xlu0 %v3429, 64
      %v3471 = vpop.permute.xlu0 %3470
      %3472 = vrot.lane.b32.xlu0 %v3431, 64
      %v3473 = vpop.permute.xlu0 %3472
      %3474 = vrot.lane.b32.xlu0 %v3433, 64
      %v3475 = vpop.permute.xlu0 %3474
      %v3497 = vrot.slane %v3000, 2
      %v3498 = vsel %vm952, %v3432, %v3497
      %v3499 = vrot.slane %v3001, 2
      %v3500 = vsel %vm952, %v3497, %v3499
      %3501 = vrot.lane.b32.xlu0 %v3397, 96
      %v3502 = vpop.permute.xlu0 %3501
      %3503 = vrot.lane.b32.xlu0 %v3399, 96
      %v3504 = vpop.permute.xlu0 %3503
      %3505 = vrot.lane.b32.xlu0 %v3401, 96
      %v3506 = vpop.permute.xlu0 %3505
      %3507 = vrot.lane.b32.xlu0 %v3403, 96
      %v3508 = vpop.permute.xlu0 %3507
      %3509 = vrot.lane.b32.xlu0 %v3405, 96
      %v3510 = vpop.permute.xlu0 %3509
      %3511 = vrot.lane.b32.xlu0 %v3407, 96
      %v3512 = vpop.permute.xlu0 %3511
      %3513 = vrot.lane.b32.xlu0 %v3409, 96
      %v3514 = vpop.permute.xlu0 %3513
      %3515 = vrot.lane.b32.xlu0 %v3411, 96
      %v3516 = vpop.permute.xlu0 %3515
      %3517 = vrot.lane.b32.xlu0 %v3413, 96
      %v3518 = vpop.permute.xlu0 %3517
      %3519 = vrot.lane.b32.xlu0 %v3415, 96
      %v3520 = vpop.permute.xlu0 %3519
      %3521 = vrot.lane.b32.xlu0 %v3417, 96
      %v3522 = vpop.permute.xlu0 %3521
      %3523 = vrot.lane.b32.xlu0 %v3419, 96
      %v3524 = vpop.permute.xlu0 %3523
      %3525 = vrot.lane.b32.xlu0 %v3421, 96
      %v3526 = vpop.permute.xlu0 %3525
      %3527 = vrot.lane.b32.xlu0 %v3423, 96
      %v3528 = vpop.permute.xlu0 %3527
      %3529 = vrot.lane.b32.xlu0 %v3425, 96
      %v3530 = vpop.permute.xlu0 %3529
      %3531 = vrot.lane.b32.xlu0 %v3427, 96
      %v3532 = vpop.permute.xlu0 %3531
      %3533 = vrot.lane.b32.xlu0 %v3429, 96
      %v3534 = vpop.permute.xlu0 %3533
      %3535 = vrot.lane.b32.xlu0 %v3431, 96
      %v3536 = vpop.permute.xlu0 %3535
      %3537 = vrot.lane.b32.xlu0 %v3433, 96
      %v3538 = vpop.permute.xlu0 %3537
      %3539 = vrot.lane.b32.xlu0 %v3498, 96
      %v3540 = vpop.permute.xlu0 %3539
      %3541 = vrot.lane.b32.xlu0 %v3500, 96
      %v3542 = vpop.permute.xlu0 %3541
      %v3564 = vrot.slane %v3002, 2
      %v3565 = vsel %vm952, %v3499, %v3564
      %v3566 = vrot.slane %v3003, 2
      %v3567 = vsel %vm952, %v3564, %v3566
      %v3568 = vsel %vm1399, %v2978, %v3063
      %v3569 = vsel %vm1399, %v2979, %v3065
      %v3570 = vsel %vm1399, %v2980, %v3067
      %v3571 = vsel %vm1399, %v2981, %v3069
      %v3572 = vsel %vm1399, %v2982, %v3071
      %v3573 = vsel %vm1399, %v2983, %v3073
      %v3574 = vsel %vm1399, %v2984, %v3075
      %v3575 = vsel %vm1399, %v2985, %v3077
      %v3576 = vsel %vm1399, %v2986, %v3079
      %v3577 = vsel %vm1399, %v2987, %v3081
      %v3578 = vsel %vm1399, %v2988, %v3083
      %v3579 = vsel %vm1399, %v2989, %v3085
      %v3580 = vsel %vm1399, %v2990, %v3087
      %v3581 = vsel %vm1399, %v2991, %v3089
      %v3582 = vsel %vm1399, %v2992, %v3091
      %v3583 = vsel %vm1399, %v2993, %v3093
      %v3584 = vsel %vm1399, %v2994, %v3095
      %v3585 = vsel %vm1399, %v2995, %v3097
      %v3586 = vsel %vm1399, %v2996, %v3099
      %v3587 = vsel %vm1399, %v2997, %v3101
      %v3588 = vsel %vm1399, %v2998, %v3103
      %v3589 = vsel %vm1527, %v3568, %v3128
      %v3590 = vsel %vm1527, %v3569, %v3130
      %v3591 = vsel %vm1527, %v3570, %v3132
      %v3592 = vsel %vm1527, %v3571, %v3134
      %v3593 = vsel %vm1527, %v3572, %v3136
      %v3594 = vsel %vm1527, %v3573, %v3138
      %v3595 = vsel %vm1527, %v3574, %v3140
      %v3596 = vsel %vm1527, %v3575, %v3142
      %v3597 = vsel %vm1527, %v3576, %v3144
      %v3598 = vsel %vm1527, %v3577, %v3146
      %v3599 = vsel %vm1527, %v3578, %v3148
      %v3600 = vsel %vm1527, %v3579, %v3150
      %v3601 = vsel %vm1527, %v3580, %v3152
      %v3602 = vsel %vm1527, %v3581, %v3154
      %v3603 = vsel %vm1527, %v3582, %v3156
      %v3604 = vsel %vm1527, %v3583, %v3158
      %v3605 = vsel %vm1527, %v3584, %v3160
      %v3606 = vsel %vm1527, %v3585, %v3162
      %v3607 = vsel %vm1527, %v3586, %v3164
      %v3608 = vsel %vm1527, %v3587, %v3166
      %v3609 = vsel %vm1527, %v3588, %v3168
      %v3610 = vsel %vm2533, %v3589, %v3236
      %v3611 = vsel %vm2533, %v3590, %v3238
      %v3612 = vsel %vm2533, %v3591, %v3240
      %v3613 = vsel %vm2533, %v3592, %v3242
      %v3614 = vsel %vm2533, %v3593, %v3244
      %v3615 = vsel %vm2533, %v3594, %v3246
      %v3616 = vsel %vm2533, %v3595, %v3248
      %v3617 = vsel %vm2533, %v3596, %v3250
      %v3618 = vsel %vm2533, %v3597, %v3252
      %v3619 = vsel %vm2533, %v3598, %v3254
      %v3620 = vsel %vm2533, %v3599, %v3256
      %v3621 = vsel %vm2533, %v3600, %v3258
      %v3622 = vsel %vm2533, %v3601, %v3260
      %v3623 = vsel %vm2533, %v3602, %v3262
      %v3624 = vsel %vm2533, %v3603, %v3264
      %v3625 = vsel %vm2533, %v3604, %v3266
      %v3626 = vsel %vm2533, %v3605, %v3268
      %v3627 = vsel %vm2533, %v3606, %v3270
      %v3628 = vsel %vm2533, %v3607, %v3272
      %v3629 = vsel %vm2533, %v3608, %v3274
      %v3630 = vsel %vm2533, %v3609, %v3276
      %v3631 = vsel %vm1399, %v3198, %v3329
      %v3632 = vsel %vm1399, %v3200, %v3331
      %v3633 = vsel %vm1399, %v3202, %v3333
      %v3634 = vsel %vm1399, %v3204, %v3335
      %v3635 = vsel %vm1399, %v3206, %v3337
      %v3636 = vsel %vm1399, %v3208, %v3339
      %v3637 = vsel %vm1399, %v3210, %v3341
      %v3638 = vsel %vm1399, %v3212, %v3343
      %v3639 = vsel %vm1399, %v3214, %v3345
      %v3640 = vsel %vm1399, %v3216, %v3347
      %v3641 = vsel %vm1399, %v3218, %v3349
      %v3642 = vsel %vm1399, %v3220, %v3351
      %v3643 = vsel %vm1399, %v3222, %v3353
      %v3644 = vsel %vm1399, %v3224, %v3355
      %v3645 = vsel %vm1399, %v3226, %v3357
      %v3646 = vsel %vm1399, %v3228, %v3359
      %v3647 = vsel %vm1399, %v3230, %v3361
      %v3648 = vsel %vm1399, %v3232, %v3363
      %v3649 = vsel %vm1399, %v3234, %v3365
      %v3650 = vsel %vm1399, %v3299, %v3367
      %v3651 = vsel %vm1399, %v3301, %v3369
      %v3652 = vsel %vm1527, %v3631, %v3435
      %v3653 = vsel %vm1527, %v3632, %v3437
      %v3654 = vsel %vm1527, %v3633, %v3439
      %v3655 = vsel %vm1527, %v3634, %v3441
      %v3656 = vsel %vm1527, %v3635, %v3443
      %v3657 = vsel %vm1527, %v3636, %v3445
      %v3658 = vsel %vm1527, %v3637, %v3447
      %v3659 = vsel %vm1527, %v3638, %v3449
      %v3660 = vsel %vm1527, %v3639, %v3451
      %v3661 = vsel %vm1527, %v3640, %v3453
      %v3662 = vsel %vm1527, %v3641, %v3455
      %v3663 = vsel %vm1527, %v3642, %v3457
      %v3664 = vsel %vm1527, %v3643, %v3459
      %v3665 = vsel %vm1527, %v3644, %v3461
      %v3666 = vsel %vm1527, %v3645, %v3463
      %v3667 = vsel %vm1527, %v3646, %v3465
      %v3668 = vsel %vm1527, %v3647, %v3467
      %v3669 = vsel %vm1527, %v3648, %v3469
      %v3670 = vsel %vm1527, %v3649, %v3471
      %v3671 = vsel %vm1527, %v3650, %v3473
      %v3672 = vsel %vm1527, %v3651, %v3475
      %v3673 = vsel %vm2533, %v3652, %v3502
      %v3674 = vsel %vm2533, %v3653, %v3504
      %v3675 = vsel %vm2533, %v3654, %v3506
      %v3676 = vsel %vm2533, %v3655, %v3508
      %v3677 = vsel %vm2533, %v3656, %v3510
      %v3678 = vsel %vm2533, %v3657, %v3512
      %v3679 = vsel %vm2533, %v3658, %v3514
      %v3680 = vsel %vm2533, %v3659, %v3516
      %v3681 = vsel %vm2533, %v3660, %v3518
      %v3682 = vsel %vm2533, %v3661, %v3520
      %v3683 = vsel %vm2533, %v3662, %v3522
      %v3684 = vsel %vm2533, %v3663, %v3524
      %v3685 = vsel %vm2533, %v3664, %v3526
      %v3686 = vsel %vm2533, %v3665, %v3528
      %v3687 = vsel %vm2533, %v3666, %v3530
      %v3688 = vsel %vm2533, %v3667, %v3532
      %v3689 = vsel %vm2533, %v3668, %v3534
      %v3690 = vsel %vm2533, %v3669, %v3536
      %v3691 = vsel %vm2533, %v3670, %v3538
      %v3692 = vsel %vm2533, %v3671, %v3540
      %v3693 = vsel %vm2533, %v3672, %v3542
      %v3695 = vperm.slane %v3040, 0
      %v3697 = vsel %vm1399, %v3401, 0
      %v3699 = vsel %vm1399, %v3403, 0
      %v3701 = vsel %vm1399, %v3405, 0
      %v3703 = vsel %vm1399, %v3407, 0
      %v3705 = vsel %vm1399, %v3409, 0
      %v3707 = vsel %vm1399, %v3411, 0
      %v3709 = vsel %vm1399, %v3413, 0
      %v3711 = vsel %vm1399, %v3415, 0
      %v3713 = vsel %vm1399, %v3417, 0
      %v3715 = vsel %vm1399, %v3419, 0
      %v3717 = vsel %vm1399, %v3421, 0
      %v3719 = vsel %vm1399, %v3423, 0
      %v3721 = vsel %vm1399, %v3425, 0
      %v3723 = vsel %vm1399, %v3427, 0
      %v3725 = vsel %vm1399, %v3429, 0
      %v3727 = vsel %vm1399, %v3431, 0
      %v3729 = vsel %vm1399, %v3433, 0
      %v3731 = vsel %vm1399, %v3498, 0
      %v3733 = vsel %vm1399, %v3500, 0
      %v3735 = vsel %vm1399, %v3565, 0
      %v3737 = vsel %vm1399, %v3567, 0
      %3739 = vmatpush.msra.mxu0 %v3019
      %3740 = vmatpush.msra.mxu0 %v3018
      %3741 = vmatpush.msra.mxu0 %v3017
      %3742 = vmatpush.msra.mxu0 %v3016
      %3743 = vmatpush.msra.mxu0 %v3015
      %3744 = vmatpush.msra.mxu0 %v3014
      %3745 = vmatpush.msra.mxu0 %v3013
      %3746 = vmatpush.msra.mxu0 %v3012
      %3747 = vmatpush.msra.mxu0 %v3011
      %3748 = vmatpush.msra.mxu0 %v3010
      %3749 = vmatpush.msra.mxu0 %v3009
      %3750 = vmatpush.msra.mxu0 %v3008
      %3751 = vmatpush.msra.mxu0 %v3007
      %3752 = vmatpush.msra.mxu0 %v3006
      %3753 = vmatpush.msra.mxu0 %v3005
      %3754 = vmatpush.msra.mxu0 %v3004
      %3755 = vmatmul.f32.gmra.mxu0 %v3610
      %v3756 = vpop.f32.mrf.mxu0
      %v3757 = vadd.f32 %v3695, %v3756
      %3758 = vmatmul.f32.gmra.mxu0 %v3611
      %v3759 = vpop.f32.mrf.mxu0
      %v3760 = vadd.f32 %v3695, %v3759
      %3761 = vmatmul.f32.gmra.mxu0 %v3612
      %v3762 = vpop.f32.mrf.mxu0
      %v3763 = vadd.f32 %v3695, %v3762
      %3764 = vmatmul.f32.gmra.mxu0 %v3613
      %v3765 = vpop.f32.mrf.mxu0
      %v3766 = vadd.f32 %v3695, %v3765
      %3767 = vmatmul.f32.gmra.mxu0 %v3614
      %v3768 = vpop.f32.mrf.mxu0
      %v3769 = vadd.f32 %v3695, %v3768
      %3770 = vmatmul.f32.gmra.mxu0 %v3615
      %v3771 = vpop.f32.mrf.mxu0
      %v3772 = vadd.f32 %v3695, %v3771
      %3773 = vmatmul.f32.gmra.mxu0 %v3616
      %v3774 = vpop.f32.mrf.mxu0
      %v3775 = vadd.f32 %v3695, %v3774
      %3776 = vmatmul.f32.gmra.mxu0 %v3617
      %v3777 = vpop.f32.mrf.mxu0
      %v3778 = vadd.f32 %v3695, %v3777
      %3779 = vmatmul.f32.gmra.mxu0 %v3618
      %v3780 = vpop.f32.mrf.mxu0
      %v3781 = vadd.f32 %v3695, %v3780
      %3782 = vmatmul.f32.gmra.mxu0 %v3619
      %v3783 = vpop.f32.mrf.mxu0
      %v3784 = vadd.f32 %v3695, %v3783
      %3785 = vmatmul.f32.gmra.mxu0 %v3620
      %v3786 = vpop.f32.mrf.mxu0
      %v3787 = vadd.f32 %v3695, %v3786
      %3788 = vmatmul.f32.gmra.mxu0 %v3621
      %v3789 = vpop.f32.mrf.mxu0
      %v3790 = vadd.f32 %v3695, %v3789
      %3791 = vmatmul.f32.gmra.mxu0 %v3622
      %v3792 = vpop.f32.mrf.mxu0
      %v3793 = vadd.f32 %v3695, %v3792
      %3794 = vmatmul.f32.gmra.mxu0 %v3623
      %v3795 = vpop.f32.mrf.mxu0
      %v3796 = vadd.f32 %v3695, %v3795
      %3797 = vmatmul.f32.gmra.mxu0 %v3624
      %v3798 = vpop.f32.mrf.mxu0
      %v3799 = vadd.f32 %v3695, %v3798
      %3800 = vmatmul.f32.gmra.mxu0 %v3625
      %v3801 = vpop.f32.mrf.mxu0
      %v3802 = vadd.f32 %v3695, %v3801
      %3803 = vmatmul.f32.gmra.mxu0 %v3626
      %v3804 = vpop.f32.mrf.mxu0
      %v3805 = vadd.f32 %v3695, %v3804
      %3806 = vmatmul.f32.gmra.mxu0 %v3627
      %v3807 = vpop.f32.mrf.mxu0
      %v3808 = vadd.f32 %v3695, %v3807
      %3809 = vmatmul.f32.gmra.mxu0 %v3628
      %v3810 = vpop.f32.mrf.mxu0
      %v3811 = vadd.f32 %v3695, %v3810
      %3812 = vmatmul.f32.gmra.mxu0 %v3629
      %v3813 = vpop.f32.mrf.mxu0
      %v3814 = vadd.f32 %v3695, %v3813
      %3815 = vmatmul.f32.gmra.mxu0 %v3630
      %v3816 = vpop.f32.mrf.mxu0
      %v3817 = vadd.f32 %v3695, %v3816
      %3818 = vdwg.mxu0
      %3819 = vmatpush.msra.mxu0 %v3035
      %3820 = vmatpush.msra.mxu0 %v3034
      %3821 = vmatpush.msra.mxu0 %v3033
      %3822 = vmatpush.msra.mxu0 %v3032
      %3823 = vmatpush.msra.mxu0 %v3031
      %3824 = vmatpush.msra.mxu0 %v3030
      %3825 = vmatpush.msra.mxu0 %v3029
      %3826 = vmatpush.msra.mxu0 %v3028
      %3827 = vmatpush.msra.mxu0 %v3027
      %3828 = vmatpush.msra.mxu0 %v3026
      %3829 = vmatpush.msra.mxu0 %v3025
      %3830 = vmatpush.msra.mxu0 %v3024
      %3831 = vmatpush.msra.mxu0 %v3023
      %3832 = vmatpush.msra.mxu0 %v3022
      %3833 = vmatpush.msra.mxu0 %v3021
      %3834 = vmatpush.msra.mxu0 %v3020
      %3835 = vmatmul.f32.gmra.mxu0 %v3673
      %v3836 = vpop.f32.mrf.mxu0
      %v3837 = vadd.f32 %v3757, %v3836
      %3838 = vmatmul.f32.gmra.mxu0 %v3674
      %v3839 = vpop.f32.mrf.mxu0
      %v3840 = vadd.f32 %v3760, %v3839
      %3841 = vmatmul.f32.gmra.mxu0 %v3675
      %v3842 = vpop.f32.mrf.mxu0
      %v3843 = vadd.f32 %v3763, %v3842
      %3844 = vmatmul.f32.gmra.mxu0 %v3676
      %v3845 = vpop.f32.mrf.mxu0
      %v3846 = vadd.f32 %v3766, %v3845
      %3847 = vmatmul.f32.gmra.mxu0 %v3677
      %v3848 = vpop.f32.mrf.mxu0
      %v3849 = vadd.f32 %v3769, %v3848
      %3850 = vmatmul.f32.gmra.mxu0 %v3678
      %v3851 = vpop.f32.mrf.mxu0
      %v3852 = vadd.f32 %v3772, %v3851
      %3853 = vmatmul.f32.gmra.mxu0 %v3679
      %v3854 = vpop.f32.mrf.mxu0
      %v3855 = vadd.f32 %v3775, %v3854
      %3856 = vmatmul.f32.gmra.mxu0 %v3680
      %v3857 = vpop.f32.mrf.mxu0
      %v3858 = vadd.f32 %v3778, %v3857
      %3859 = vmatmul.f32.gmra.mxu0 %v3681
      %v3860 = vpop.f32.mrf.mxu0
      %v3861 = vadd.f32 %v3781, %v3860
      %3862 = vmatmul.f32.gmra.mxu0 %v3682
      %v3863 = vpop.f32.mrf.mxu0
      %v3864 = vadd.f32 %v3784, %v3863
      %3865 = vmatmul.f32.gmra.mxu0 %v3683
      %v3866 = vpop.f32.mrf.mxu0
      %v3867 = vadd.f32 %v3787, %v3866
      %3868 = vmatmul.f32.gmra.mxu0 %v3684
      %v3869 = vpop.f32.mrf.mxu0
      %v3870 = vadd.f32 %v3790, %v3869
      %3871 = vmatmul.f32.gmra.mxu0 %v3685
      %v3872 = vpop.f32.mrf.mxu0
      %v3873 = vadd.f32 %v3793, %v3872
      %3874 = vmatmul.f32.gmra.mxu0 %v3686
      %v3875 = vpop.f32.mrf.mxu0
      %v3876 = vadd.f32 %v3796, %v3875
      %3877 = vmatmul.f32.gmra.mxu0 %v3687
      %v3878 = vpop.f32.mrf.mxu0
      %v3879 = vadd.f32 %v3799, %v3878
      %3880 = vmatmul.f32.gmra.mxu0 %v3688
      %v3881 = vpop.f32.mrf.mxu0
      %v3882 = vadd.f32 %v3802, %v3881
      %3883 = vmatmul.f32.gmra.mxu0 %v3689
      %v3884 = vpop.f32.mrf.mxu0
      %v3885 = vadd.f32 %v3805, %v3884
      %3886 = vmatmul.f32.gmra.mxu0 %v3690
      %v3887 = vpop.f32.mrf.mxu0
      %v3888 = vadd.f32 %v3808, %v3887
      %3889 = vmatmul.f32.gmra.mxu0 %v3691
      %v3890 = vpop.f32.mrf.mxu0
      %v3891 = vadd.f32 %v3811, %v3890
      %3892 = vmatmul.f32.gmra.mxu0 %v3692
      %v3893 = vpop.f32.mrf.mxu0
      %v3894 = vadd.f32 %v3814, %v3893
      %3895 = vmatmul.f32.gmra.mxu0 %v3693
      %v3896 = vpop.f32.mrf.mxu0
      %v3897 = vadd.f32 %v3817, %v3896
      %3898 = vdwg.mxu0
      %3899 = vmatpush.msra.mxu0 0.0
      %3900 = vmatpush.msra.mxu0 0.0
      %3901 = vmatpush.msra.mxu0 0.0
      %3902 = vmatpush.msra.mxu0 0.0
      %3903 = vmatpush.msra.mxu0 0.0
      %3904 = vmatpush.msra.mxu0 0.0
      %3905 = vmatpush.msra.mxu0 0.0
      %3906 = vmatpush.msra.mxu0 0.0
      %3907 = vmatpush.msra.mxu0 0.0
      %3908 = vmatpush.msra.mxu0 0.0
      %3909 = vmatpush.msra.mxu0 0.0
      %3910 = vmatpush.msra.mxu0 0.0
      %3911 = vmatpush.msra.mxu0 %v3039
      %3912 = vmatpush.msra.mxu0 %v3038
      %3913 = vmatpush.msra.mxu0 %v3037
      %3914 = vmatpush.msra.mxu0 %v3036
      %3915 = vmatmul.f32.gmra.mxu0 %v3697
      %v3916 = vpop.f32.mrf.mxu0
      %v3917 = vadd.f32 %v3837, %v3916
      %3918 = vmatmul.f32.gmra.mxu0 %v3699
      %v3919 = vpop.f32.mrf.mxu0
      %v3920 = vadd.f32 %v3840, %v3919
      %3921 = vmatmul.f32.gmra.mxu0 %v3701
      %v3922 = vpop.f32.mrf.mxu0
      %v3923 = vadd.f32 %v3843, %v3922
      %3924 = vmatmul.f32.gmra.mxu0 %v3703
      %v3925 = vpop.f32.mrf.mxu0
      %v3926 = vadd.f32 %v3846, %v3925
      %3927 = vmatmul.f32.gmra.mxu0 %v3705
      %v3928 = vpop.f32.mrf.mxu0
      %v3929 = vadd.f32 %v3849, %v3928
      %3930 = vmatmul.f32.gmra.mxu0 %v3707
      %v3931 = vpop.f32.mrf.mxu0
      %v3932 = vadd.f32 %v3852, %v3931
      %3933 = vmatmul.f32.gmra.mxu0 %v3709
      %v3934 = vpop.f32.mrf.mxu0
      %v3935 = vadd.f32 %v3855, %v3934
      %3936 = vmatmul.f32.gmra.mxu0 %v3711
      %v3937 = vpop.f32.mrf.mxu0
      %v3938 = vadd.f32 %v3858, %v3937
      %3939 = vmatmul.f32.gmra.mxu0 %v3713
      %v3940 = vpop.f32.mrf.mxu0
      %v3941 = vadd.f32 %v3861, %v3940
      %3942 = vmatmul.f32.gmra.mxu0 %v3715
      %v3943 = vpop.f32.mrf.mxu0
      %v3944 = vadd.f32 %v3864, %v3943
      %3945 = vmatmul.f32.gmra.mxu0 %v3717
      %v3946 = vpop.f32.mrf.mxu0
      %v3947 = vadd.f32 %v3867, %v3946
      %3948 = vmatmul.f32.gmra.mxu0 %v3719
      %v3949 = vpop.f32.mrf.mxu0
      %v3950 = vadd.f32 %v3870, %v3949
      %3951 = vmatmul.f32.gmra.mxu0 %v3721
      %v3952 = vpop.f32.mrf.mxu0
      %v3953 = vadd.f32 %v3873, %v3952
      %3954 = vmatmul.f32.gmra.mxu0 %v3723
      %v3955 = vpop.f32.mrf.mxu0
      %v3956 = vadd.f32 %v3876, %v3955
      %3957 = vmatmul.f32.gmra.mxu0 %v3725
      %v3958 = vpop.f32.mrf.mxu0
      %v3959 = vadd.f32 %v3879, %v3958
      %3960 = vmatmul.f32.gmra.mxu0 %v3727
      %v3961 = vpop.f32.mrf.mxu0
      %v3962 = vadd.f32 %v3882, %v3961
      %3963 = vmatmul.f32.gmra.mxu0 %v3729
      %v3964 = vpop.f32.mrf.mxu0
      %v3965 = vadd.f32 %v3885, %v3964
      %3966 = vmatmul.f32.gmra.mxu0 %v3731
      %v3967 = vpop.f32.mrf.mxu0
      %v3968 = vadd.f32 %v3888, %v3967
      %3969 = vmatmul.f32.gmra.mxu0 %v3733
      %v3970 = vpop.f32.mrf.mxu0
      %v3971 = vadd.f32 %v3891, %v3970
      %3972 = vmatmul.f32.gmra.mxu0 %v3735
      %v3973 = vpop.f32.mrf.mxu0
      %v3974 = vadd.f32 %v3894, %v3973
      %3975 = vmatmul.f32.gmra.mxu0 %v3737
      %v3976 = vpop.f32.mrf.mxu0
      %v3977 = vadd.f32 %v3897, %v3976
      %3978 = vdwg.mxu0
      %v3979 = vmax.f32 %v3917, 0.0
      %v3980 = vmax.f32 %v3920, 0.0
      %v3981 = vmax.f32 %v3923, 0.0
      %v3982 = vmax.f32 %v3926, 0.0
      %v3983 = vmax.f32 %v3929, 0.0
      %v3984 = vmax.f32 %v3932, 0.0
      %v3985 = vmax.f32 %v3935, 0.0
      %v3986 = vmax.f32 %v3938, 0.0
      %v3987 = vmax.f32 %v3941, 0.0
      %v3988 = vmax.f32 %v3944, 0.0
      %v3989 = vmax.f32 %v3947, 0.0
      %v3990 = vmax.f32 %v3950, 0.0
      %v3991 = vmax.f32 %v3953, 0.0
      %v3992 = vmax.f32 %v3956, 0.0
      %v3993 = vmax.f32 %v3959, 0.0
      %v3994 = vmax.f32 %v3962, 0.0
      %v3995 = vmax.f32 %v3965, 0.0
      %v3996 = vmax.f32 %v3968, 0.0
      %v3997 = vmax.f32 %v3971, 0.0
      %v3998 = vmax.f32 %v3974, 0.0
      %v3999 = vmax.f32 %v3977, 0.0
      %v4000 = vld [vmem:[%s7] sm:$0xff]
      %v4001 = vld [vmem:[%s7 + $0x8] sm:$0xff]
      %v4002 = vld [vmem:[%s7 + $0x10] sm:$0xff]
      %v4003 = vld [vmem:[%s7 + $0x18] sm:$0xff]
      %v4004 = vld [vmem:[%s7 + $0x20] sm:$0xff]
      %v4005 = vld [vmem:[%s7 + $0x28] sm:$0xff]
      %v4006 = vld [vmem:[%s7 + $0x30] sm:$0xff]
      %v4007 = vld [vmem:[%s7 + $0x38] sm:$0xff]
      %v4008 = vld [vmem:[%s7 + $0x40] sm:$0xff]
      %v4009 = vld [vmem:[%s7 + $0x48] sm:$0xff]
      %v4010 = vld [vmem:[%s7 + $0x50] sm:$0xff]
      %v4011 = vld [vmem:[%s7 + $0x58] sm:$0xff]
      %v4012 = vld [vmem:[%s7 + $0x60] sm:$0xff]
      %v4013 = vld [vmem:[%s7 + $0x68] sm:$0xff]
      %v4014 = vld [vmem:[%s7 + $0x70] sm:$0xff]
      %v4015 = vld [vmem:[%s7 + $0x78] sm:$0xff]
      %v4016 = vld [vmem:[%s7 + $0x80] sm:$0xff]
      %v4017 = vld [vmem:[%s7 + $0x88] sm:$0xff]
      %v4018 = vld [vmem:[%s7 + $0x90] sm:$0xff]
      %v4019 = vld [vmem:[%s7 + $0x98] sm:$0xff]
      %v4020 = vld [vmem:[%s7 + $0xa0] sm:$0xff]
      %v4021 = vld [vmem:[%s7 + $0xa8] sm:$0xff]
      %v4022 = vld [vmem:[%s7 + $0xb0] sm:$0xff]
      %v4023 = vld [vmem:[%s7 + $0xb8] sm:$0xff]
      %v4024 = vld [vmem:[%s7 + $0xc0] sm:$0xff]
      %v4025 = vld [vmem:[%s7 + $0xc8] sm:$0xff]
      %v4026 = vld [vmem:[%s7 + $0xd0] sm:$0xff]
      %v4027 = vld [vmem:[%s7 + $0xd8] sm:$0xff]
      %v4028 = vld [vmem:[%s7 + $0xe0] sm:$0xff]
      %v4029 = vld [vmem:[%s7 + $0xe8] sm:$0xff]
      %v4030 = vld [vmem:[%s7 + $0xf0] sm:$0xff]
      %v4031 = vld [vmem:[%s7 + $0xf8] sm:$0xff]
      %v4032 = vld [vmem:[%s7 + $0x100] sm:$0xff]
      %v4033 = vld [vmem:[%s7 + $0x108] sm:$0xff]
      %v4034 = vld [vmem:[%s7 + $0x110] sm:$0xff]
      %v4035 = vld [vmem:[%s7 + $0x118] sm:$0xff]
      %v4036 = vld [vmem:[%s7 + $0x120] sm:$0xff]
      %v4037 = vld [vmem:[%s7 + $0x128] sm:$0xff]
      %v4038 = vld [vmem:[%s7 + $0x130] sm:$0xff]
      %v4039 = vld [vmem:[%s7 + $0x138] sm:$0xff]
      %v4040 = vld [vmem:[%s7 + $0x140] sm:$0xff]
      %v4041 = vld [vmem:[%s7 + $0x148] sm:$0xff]
      %v4042 = vld [vmem:[%s7 + $0x150] sm:$0xff]
      %v4043 = vld [vmem:[%s7 + $0x158] sm:$0xff]
      %v4044 = vld [vmem:[%s7 + $0x160] sm:$0xff]
      %v4045 = vld [vmem:[%s7 + $0x168] sm:$0xff]
      %v4046 = vld [vmem:[%s7 + $0x170] sm:$0xff]
      %v4047 = vld [vmem:[%s7 + $0x178] sm:$0xff]
      %v4048 = vld [vmem:[%s7 + $0x180] sm:$0xff]
      %v4049 = vld [vmem:[%s7 + $0x188] sm:$0xff]
      %v4050 = vld [vmem:[%s7 + $0x190] sm:$0xff]
      %v4051 = vld [vmem:[%s7 + $0x198] sm:$0xff]
      %v4052 = vld [vmem:[%s7 + $0x1a0] sm:$0xff]
      %v4053 = vld [vmem:[%s7 + $0x1a8] sm:$0xff]
      %v4054 = vld [vmem:[%s7 + $0x1b0] sm:$0xff]
      %v4055 = vld [vmem:[%s7 + $0x1b8] sm:$0xff]
      %v4056 = vld [vmem:[%s7 + $0x1c0] sm:$0xff]
      %v4057 = vld [vmem:[%s7 + $0x1c8] sm:$0xff]
      %v4058 = vld [vmem:[%s7 + $0x1d0] sm:$0xff]
      %v4059 = vld [vmem:[%s7 + $0x1d8] sm:$0xff]
      %v4060 = vld [vmem:[%s7 + $0x1e0] sm:$0xff]
      %v4061 = vld [vmem:[%s7 + $0x1e8] sm:$0xff]
      %v4062 = vld [vmem:[%s7 + $0x1f0] sm:$0xff]
      %v4063 = vld [vmem:[%s7 + $0x1f8] sm:$0xff]
      %v4064 = vld [vmem:[%s7 + $0x200] sm:$0xff]
      %v4065 = vld [vmem:[%s7 + $0x208] sm:$0xff]
      %v4066 = vld [vmem:[%s7 + $0x210] sm:$0xff]
      %v4067 = vld [vmem:[%s7 + $0x218] sm:$0xff]
      %v4068 = vld [vmem:[%s7 + $0x220] sm:$0xff]
      %v4069 = vld [vmem:[%s7 + $0x228] sm:$0xff]
      %v4070 = vld [vmem:[%s7 + $0x230] sm:$0xff]
      %v4071 = vld [vmem:[%s7 + $0x238] sm:$0xff]
      %v4072 = vld [vmem:[%s8] sm:$0x1]
      %4089 = vrot.lane.b32.xlu0 %v3981, 64
      %v4090 = vpop.permute.xlu0 %4089
      %4091 = vrot.lane.b32.xlu0 %v3982, 64
      %v4092 = vpop.permute.xlu0 %4091
      %4093 = vrot.lane.b32.xlu0 %v3983, 64
      %v4094 = vpop.permute.xlu0 %4093
      %4095 = vrot.lane.b32.xlu0 %v3984, 64
      %v4096 = vpop.permute.xlu0 %4095
      %4097 = vrot.lane.b32.xlu0 %v3985, 64
      %v4098 = vpop.permute.xlu0 %4097
      %4099 = vrot.lane.b32.xlu0 %v3986, 64
      %v4100 = vpop.permute.xlu0 %4099
      %4101 = vrot.lane.b32.xlu0 %v3987, 64
      %v4102 = vpop.permute.xlu0 %4101
      %4103 = vrot.lane.b32.xlu0 %v3988, 64
      %v4104 = vpop.permute.xlu0 %4103
      %4105 = vrot.lane.b32.xlu0 %v3989, 64
      %v4106 = vpop.permute.xlu0 %4105
      %4107 = vrot.lane.b32.xlu0 %v3990, 64
      %v4108 = vpop.permute.xlu0 %4107
      %4109 = vrot.lane.b32.xlu0 %v3991, 64
      %v4110 = vpop.permute.xlu0 %4109
      %4111 = vrot.lane.b32.xlu0 %v3992, 64
      %v4112 = vpop.permute.xlu0 %4111
      %4113 = vrot.lane.b32.xlu0 %v3993, 64
      %v4114 = vpop.permute.xlu0 %4113
      %4115 = vrot.lane.b32.xlu0 %v3994, 64
      %v4116 = vpop.permute.xlu0 %4115
      %4117 = vrot.lane.b32.xlu0 %v3995, 64
      %v4118 = vpop.permute.xlu0 %4117
      %4119 = vrot.lane.b32.xlu0 %v3996, 64
      %v4120 = vpop.permute.xlu0 %4119
      %v4139 = vrot.slane %v3979, 1
      %v4140 = vrot.slane %v3980, 1
      %v4141 = vsel %vm600, %v4139, %v4140
      %v4142 = vrot.slane %v3981, 1
      %v4143 = vsel %vm600, %v4140, %v4142
      %v4144 = vrot.slane %v3982, 1
      %v4145 = vsel %vm600, %v4142, %v4144
      %v4146 = vrot.slane %v3983, 1
      %v4147 = vsel %vm600, %v4144, %v4146
      %v4148 = vrot.slane %v3984, 1
      %v4149 = vsel %vm600, %v4146, %v4148
      %v4150 = vrot.slane %v3985, 1
      %v4151 = vsel %vm600, %v4148, %v4150
      %v4152 = vrot.slane %v3986, 1
      %v4153 = vsel %vm600, %v4150, %v4152
      %v4154 = vrot.slane %v3987, 1
      %v4155 = vsel %vm600, %v4152, %v4154
      %v4156 = vrot.slane %v3988, 1
      %v4157 = vsel %vm600, %v4154, %v4156
      %v4158 = vrot.slane %v3989, 1
      %v4159 = vsel %vm600, %v4156, %v4158
      %v4160 = vrot.slane %v3990, 1
      %v4161 = vsel %vm600, %v4158, %v4160
      %v4162 = vrot.slane %v3991, 1
      %v4163 = vsel %vm600, %v4160, %v4162
      %v4164 = vrot.slane %v3992, 1
      %v4165 = vsel %vm600, %v4162, %v4164
      %v4166 = vrot.slane %v3993, 1
      %v4167 = vsel %vm600, %v4164, %v4166
      %v4168 = vrot.slane %v3994, 1
      %v4169 = vsel %vm600, %v4166, %v4168
      %v4170 = vrot.slane %v3995, 1
      %v4171 = vsel %vm600, %v4168, %v4170
      %4172 = vrot.lane.b32.xlu0 %v4141, 64
      %v4173 = vpop.permute.xlu0 %4172
      %4174 = vrot.lane.b32.xlu0 %v4143, 64
      %v4175 = vpop.permute.xlu0 %4174
      %4176 = vrot.lane.b32.xlu0 %v4145, 64
      %v4177 = vpop.permute.xlu0 %4176
      %4178 = vrot.lane.b32.xlu0 %v4147, 64
      %v4179 = vpop.permute.xlu0 %4178
      %4180 = vrot.lane.b32.xlu0 %v4149, 64
      %v4181 = vpop.permute.xlu0 %4180
      %4182 = vrot.lane.b32.xlu0 %v4151, 64
      %v4183 = vpop.permute.xlu0 %4182
      %4184 = vrot.lane.b32.xlu0 %v4153, 64
      %v4185 = vpop.permute.xlu0 %4184
      %4186 = vrot.lane.b32.xlu0 %v4155, 64
      %v4187 = vpop.permute.xlu0 %4186
      %4188 = vrot.lane.b32.xlu0 %v4157, 64
      %v4189 = vpop.permute.xlu0 %4188
      %4190 = vrot.lane.b32.xlu0 %v4159, 64
      %v4191 = vpop.permute.xlu0 %4190
      %4192 = vrot.lane.b32.xlu0 %v4161, 64
      %v4193 = vpop.permute.xlu0 %4192
      %4194 = vrot.lane.b32.xlu0 %v4163, 64
      %v4195 = vpop.permute.xlu0 %4194
      %4196 = vrot.lane.b32.xlu0 %v4165, 64
      %v4197 = vpop.permute.xlu0 %4196
      %4198 = vrot.lane.b32.xlu0 %v4167, 64
      %v4199 = vpop.permute.xlu0 %4198
      %4200 = vrot.lane.b32.xlu0 %v4169, 64
      %v4201 = vpop.permute.xlu0 %4200
      %4202 = vrot.lane.b32.xlu0 %v4171, 64
      %v4203 = vpop.permute.xlu0 %4202
      %v4221 = vrot.slane %v3996, 1
      %v4222 = vsel %vm600, %v4170, %v4221
      %v4223 = vrot.slane %v3997, 1
      %v4224 = vsel %vm600, %v4221, %v4223
      %v4243 = vrot.slane %v3998, 1
      %v4244 = vsel %vm600, %v4223, %v4243
      %v4245 = vrot.slane %v3999, 1
      %v4246 = vsel %vm600, %v4243, %v4245
      %4247 = vrot.lane.b32.xlu0 %v4222, 64
      %v4248 = vpop.permute.xlu0 %4247
      %4249 = vrot.lane.b32.xlu0 %v4224, 64
      %v4250 = vpop.permute.xlu0 %4249
      %4251 = vrot.lane.b32.xlu0 %v4244, 64
      %v4252 = vpop.permute.xlu0 %4251
      %4253 = vrot.lane.b32.xlu0 %v4246, 64
      %v4254 = vpop.permute.xlu0 %4253
      %v4259 = vrot.slane %v3979, 2
      %v4260 = vrot.slane %v3980, 2
      %v4261 = vsel %vm952, %v4259, %v4260
      %v4262 = vrot.slane %v3981, 2
      %v4263 = vsel %vm952, %v4260, %v4262
      %v4264 = vrot.slane %v3982, 2
      %v4265 = vsel %vm952, %v4262, %v4264
      %v4266 = vrot.slane %v3983, 2
      %v4267 = vsel %vm952, %v4264, %v4266
      %v4268 = vrot.slane %v3984, 2
      %v4269 = vsel %vm952, %v4266, %v4268
      %v4270 = vrot.slane %v3985, 2
      %v4271 = vsel %vm952, %v4268, %v4270
      %v4272 = vrot.slane %v3986, 2
      %v4273 = vsel %vm952, %v4270, %v4272
      %v4274 = vrot.slane %v3987, 2
      %v4275 = vsel %vm952, %v4272, %v4274
      %v4276 = vrot.slane %v3988, 2
      %v4277 = vsel %vm952, %v4274, %v4276
      %v4278 = vrot.slane %v3989, 2
      %v4279 = vsel %vm952, %v4276, %v4278
      %v4280 = vrot.slane %v3990, 2
      %v4281 = vsel %vm952, %v4278, %v4280
      %v4282 = vrot.slane %v3991, 2
      %v4283 = vsel %vm952, %v4280, %v4282
      %v4284 = vrot.slane %v3992, 2
      %v4285 = vsel %vm952, %v4282, %v4284
      %v4286 = vrot.slane %v3993, 2
      %v4287 = vsel %vm952, %v4284, %v4286
      %v4288 = vrot.slane %v3994, 2
      %v4289 = vsel %vm952, %v4286, %v4288
      %v4290 = vrot.slane %v3995, 2
      %v4291 = vsel %vm952, %v4288, %v4290
      %v4308 = vrot.slane %v3996, 2
      %v4309 = vsel %vm952, %v4290, %v4308
      %v4310 = vrot.slane %v3997, 2
      %v4311 = vsel %vm952, %v4308, %v4310
      %4312 = vrot.lane.b32.xlu0 %v4265, 64
      %v4313 = vpop.permute.xlu0 %4312
      %4314 = vrot.lane.b32.xlu0 %v4267, 64
      %v4315 = vpop.permute.xlu0 %4314
      %4316 = vrot.lane.b32.xlu0 %v4269, 64
      %v4317 = vpop.permute.xlu0 %4316
      %4318 = vrot.lane.b32.xlu0 %v4271, 64
      %v4319 = vpop.permute.xlu0 %4318
      %4320 = vrot.lane.b32.xlu0 %v4273, 64
      %v4321 = vpop.permute.xlu0 %4320
      %4322 = vrot.lane.b32.xlu0 %v4275, 64
      %v4323 = vpop.permute.xlu0 %4322
      %4324 = vrot.lane.b32.xlu0 %v4277, 64
      %v4325 = vpop.permute.xlu0 %4324
      %4326 = vrot.lane.b32.xlu0 %v4279, 64
      %v4327 = vpop.permute.xlu0 %4326
      %4328 = vrot.lane.b32.xlu0 %v4281, 64
      %v4329 = vpop.permute.xlu0 %4328
      %4330 = vrot.lane.b32.xlu0 %v4283, 64
      %v4331 = vpop.permute.xlu0 %4330
      %4332 = vrot.lane.b32.xlu0 %v4285, 64
      %v4333 = vpop.permute.xlu0 %4332
      %4334 = vrot.lane.b32.xlu0 %v4287, 64
      %v4335 = vpop.permute.xlu0 %4334
      %4336 = vrot.lane.b32.xlu0 %v4289, 64
      %v4337 = vpop.permute.xlu0 %4336
      %4338 = vrot.lane.b32.xlu0 %v4291, 64
      %v4339 = vpop.permute.xlu0 %4338
      %4340 = vrot.lane.b32.xlu0 %v4309, 64
      %v4341 = vpop.permute.xlu0 %4340
      %4342 = vrot.lane.b32.xlu0 %v4311, 64
      %v4343 = vpop.permute.xlu0 %4342
      %v4360 = vrot.slane %v3998, 2
      %v4361 = vsel %vm952, %v4310, %v4360
      %v4362 = vrot.slane %v3999, 2
      %v4363 = vsel %vm952, %v4360, %v4362
      %v4364 = vsel %vm1527, %v3979, %v4090
      %v4365 = vsel %vm1527, %v3980, %v4092
      %v4366 = vsel %vm1527, %v3981, %v4094
      %v4367 = vsel %vm1527, %v3982, %v4096
      %v4368 = vsel %vm1527, %v3983, %v4098
      %v4369 = vsel %vm1527, %v3984, %v4100
      %v4370 = vsel %vm1527, %v3985, %v4102
      %v4371 = vsel %vm1527, %v3986, %v4104
      %v4372 = vsel %vm1527, %v3987, %v4106
      %v4373 = vsel %vm1527, %v3988, %v4108
      %v4374 = vsel %vm1527, %v3989, %v4110
      %v4375 = vsel %vm1527, %v3990, %v4112
      %v4376 = vsel %vm1527, %v3991, %v4114
      %v4377 = vsel %vm1527, %v3992, %v4116
      %v4378 = vsel %vm1527, %v3993, %v4118
      %v4379 = vsel %vm1527, %v3994, %v4120
      %v4380 = vsel %vm1527, %v3983, %v4173
      %v4381 = vsel %vm1527, %v3984, %v4175
      %v4382 = vsel %vm1527, %v3985, %v4177
      %v4383 = vsel %vm1527, %v3986, %v4179
      %v4384 = vsel %vm1527, %v3987, %v4181
      %v4385 = vsel %vm1527, %v3988, %v4183
      %v4386 = vsel %vm1527, %v3989, %v4185
      %v4387 = vsel %vm1527, %v3990, %v4187
      %v4388 = vsel %vm1527, %v3991, %v4189
      %v4389 = vsel %vm1527, %v3992, %v4191
      %v4390 = vsel %vm1527, %v3993, %v4193
      %v4391 = vsel %vm1527, %v3994, %v4195
      %v4392 = vsel %vm1527, %v3995, %v4197
      %v4393 = vsel %vm1527, %v3996, %v4199
      %v4394 = vsel %vm1527, %v3997, %v4201
      %v4395 = vsel %vm1527, %v3998, %v4203
      %v4396 = vsel %vm1527, %v4145, %v4181
      %v4397 = vsel %vm1527, %v4147, %v4183
      %v4398 = vsel %vm1527, %v4149, %v4185
      %v4399 = vsel %vm1527, %v4151, %v4187
      %v4400 = vsel %vm1527, %v4153, %v4189
      %v4401 = vsel %vm1527, %v4155, %v4191
      %v4402 = vsel %vm1527, %v4157, %v4193
      %v4403 = vsel %vm1527, %v4159, %v4195
      %v4404 = vsel %vm1527, %v4161, %v4197
      %v4405 = vsel %vm1527, %v4163, %v4199
      %v4406 = vsel %vm1527, %v4165, %v4201
      %v4407 = vsel %vm1527, %v4167, %v4203
      %v4408 = vsel %vm1527, %v4169, %v4248
      %v4409 = vsel %vm1527, %v4171, %v4250
      %v4410 = vsel %vm1527, %v4222, %v4252
      %v4411 = vsel %vm1527, %v4224, %v4254
      %v4412 = vsel %vm1527, %v4261, %v4313
      %v4413 = vsel %vm1527, %v4263, %v4315
      %v4414 = vsel %vm1527, %v4265, %v4317
      %v4415 = vsel %vm1527, %v4267, %v4319
      %v4416 = vsel %vm1527, %v4269, %v4321
      %v4417 = vsel %vm1527, %v4271, %v4323
      %v4418 = vsel %vm1527, %v4273, %v4325
      %v4419 = vsel %vm1527, %v4275, %v4327
      %v4420 = vsel %vm1527, %v4277, %v4329
      %v4421 = vsel %vm1527, %v4279, %v4331
      %v4422 = vsel %vm1527, %v4281, %v4333
      %v4423 = vsel %vm1527, %v4283, %v4335
      %v4424 = vsel %vm1527, %v4285, %v4337
      %v4425 = vsel %vm1527, %v4287, %v4339
      %v4426 = vsel %vm1527, %v4289, %v4341
      %v4427 = vsel %vm1527, %v4291, %v4343
      %v4429 = vperm.slane %v4072, 0
      %v4431 = vsel %vm1527, %v4269, 0
      %v4433 = vsel %vm1527, %v4271, 0
      %v4435 = vsel %vm1527, %v4273, 0
      %v4437 = vsel %vm1527, %v4275, 0
      %v4439 = vsel %vm1527, %v4277, 0
      %v4441 = vsel %vm1527, %v4279, 0
      %v4443 = vsel %vm1527, %v4281, 0
      %v4445 = vsel %vm1527, %v4283, 0
      %v4447 = vsel %vm1527, %v4285, 0
      %v4449 = vsel %vm1527, %v4287, 0
      %v4451 = vsel %vm1527, %v4289, 0
      %v4453 = vsel %vm1527, %v4291, 0
      %v4455 = vsel %vm1527, %v4309, 0
      %v4457 = vsel %vm1527, %v4311, 0
      %v4459 = vsel %vm1527, %v4361, 0
      %v4461 = vsel %vm1527, %v4363, 0
      %4463 = vmatpush.msra.mxu0 %v4015
      %4464 = vmatpush.msra.mxu0 %v4014
      %4465 = vmatpush.msra.mxu0 %v4013
      %4466 = vmatpush.msra.mxu0 %v4012
      %4467 = vmatpush.msra.mxu0 %v4011
      %4468 = vmatpush.msra.mxu0 %v4010
      %4469 = vmatpush.msra.mxu0 %v4009
      %4470 = vmatpush.msra.mxu0 %v4008
      %4471 = vmatpush.msra.mxu0 %v4007
      %4472 = vmatpush.msra.mxu0 %v4006
      %4473 = vmatpush.msra.mxu0 %v4005
      %4474 = vmatpush.msra.mxu0 %v4004
      %4475 = vmatpush.msra.mxu0 %v4003
      %4476 = vmatpush.msra.mxu0 %v4002
      %4477 = vmatpush.msra.mxu0 %v4001
      %4478 = vmatpush.msra.mxu0 %v4000
      %4479 = vmatmul.f32.gmra.mxu0 %v4364
      %v4480 = vpop.f32.mrf.mxu0
      %v4481 = vadd.f32 %v4429, %v4480
      %4482 = vmatmul.f32.gmra.mxu0 %v4365
      %v4483 = vpop.f32.mrf.mxu0
      %v4484 = vadd.f32 %v4429, %v4483
      %4485 = vmatmul.f32.gmra.mxu0 %v4366
      %v4486 = vpop.f32.mrf.mxu0
      %v4487 = vadd.f32 %v4429, %v4486
      %4488 = vmatmul.f32.gmra.mxu0 %v4367
      %v4489 = vpop.f32.mrf.mxu0
      %v4490 = vadd.f32 %v4429, %v4489
      %4491 = vmatmul.f32.gmra.mxu0 %v4368
      %v4492 = vpop.f32.mrf.mxu0
      %v4493 = vadd.f32 %v4429, %v4492
      %4494 = vmatmul.f32.gmra.mxu0 %v4369
      %v4495 = vpop.f32.mrf.mxu0
      %v4496 = vadd.f32 %v4429, %v4495
      %4497 = vmatmul.f32.gmra.mxu0 %v4370
      %v4498 = vpop.f32.mrf.mxu0
      %v4499 = vadd.f32 %v4429, %v4498
      %4500 = vmatmul.f32.gmra.mxu0 %v4371
      %v4501 = vpop.f32.mrf.mxu0
      %v4502 = vadd.f32 %v4429, %v4501
      %4503 = vmatmul.f32.gmra.mxu0 %v4372
      %v4504 = vpop.f32.mrf.mxu0
      %v4505 = vadd.f32 %v4429, %v4504
      %4506 = vmatmul.f32.gmra.mxu0 %v4373
      %v4507 = vpop.f32.mrf.mxu0
      %v4508 = vadd.f32 %v4429, %v4507
      %4509 = vmatmul.f32.gmra.mxu0 %v4374
      %v4510 = vpop.f32.mrf.mxu0
      %v4511 = vadd.f32 %v4429, %v4510
      %4512 = vmatmul.f32.gmra.mxu0 %v4375
      %v4513 = vpop.f32.mrf.mxu0
      %v4514 = vadd.f32 %v4429, %v4513
      %4515 = vmatmul.f32.gmra.mxu0 %v4376
      %v4516 = vpop.f32.mrf.mxu0
      %v4517 = vadd.f32 %v4429, %v4516
      %4518 = vmatmul.f32.gmra.mxu0 %v4377
      %v4519 = vpop.f32.mrf.mxu0
      %v4520 = vadd.f32 %v4429, %v4519
      %4521 = vmatmul.f32.gmra.mxu0 %v4378
      %v4522 = vpop.f32.mrf.mxu0
      %v4523 = vadd.f32 %v4429, %v4522
      %4524 = vmatmul.f32.gmra.mxu0 %v4379
      %v4525 = vpop.f32.mrf.mxu0
      %v4526 = vadd.f32 %v4429, %v4525
      %4527 = vdwg.mxu0
      %4528 = vmatpush.msra.mxu0 %v4031
      %4529 = vmatpush.msra.mxu0 %v4030
      %4530 = vmatpush.msra.mxu0 %v4029
      %4531 = vmatpush.msra.mxu0 %v4028
      %4532 = vmatpush.msra.mxu0 %v4027
      %4533 = vmatpush.msra.mxu0 %v4026
      %4534 = vmatpush.msra.mxu0 %v4025
      %4535 = vmatpush.msra.mxu0 %v4024
      %4536 = vmatpush.msra.mxu0 %v4023
      %4537 = vmatpush.msra.mxu0 %v4022
      %4538 = vmatpush.msra.mxu0 %v4021
      %4539 = vmatpush.msra.mxu0 %v4020
      %4540 = vmatpush.msra.mxu0 %v4019
      %4541 = vmatpush.msra.mxu0 %v4018
      %4542 = vmatpush.msra.mxu0 %v4017
      %4543 = vmatpush.msra.mxu0 %v4016
      %4544 = vmatmul.f32.gmra.mxu0 %v4380
      %v4545 = vpop.f32.mrf.mxu0
      %v4546 = vadd.f32 %v4481, %v4545
      %4547 = vmatmul.f32.gmra.mxu0 %v4381
      %v4548 = vpop.f32.mrf.mxu0
      %v4549 = vadd.f32 %v4484, %v4548
      %4550 = vmatmul.f32.gmra.mxu0 %v4382
      %v4551 = vpop.f32.mrf.mxu0
      %v4552 = vadd.f32 %v4487, %v4551
      %4553 = vmatmul.f32.gmra.mxu0 %v4383
      %v4554 = vpop.f32.mrf.mxu0
      %v4555 = vadd.f32 %v4490, %v4554
      %4556 = vmatmul.f32.gmra.mxu0 %v4384
      %v4557 = vpop.f32.mrf.mxu0
      %v4558 = vadd.f32 %v4493, %v4557
      %4559 = vmatmul.f32.gmra.mxu0 %v4385
      %v4560 = vpop.f32.mrf.mxu0
      %v4561 = vadd.f32 %v4496, %v4560
      %4562 = vmatmul.f32.gmra.mxu0 %v4386
      %v4563 = vpop.f32.mrf.mxu0
      %v4564 = vadd.f32 %v4499, %v4563
      %4565 = vmatmul.f32.gmra.mxu0 %v4387
      %v4566 = vpop.f32.mrf.mxu0
      %v4567 = vadd.f32 %v4502, %v4566
      %4568 = vmatmul.f32.gmra.mxu0 %v4388
      %v4569 = vpop.f32.mrf.mxu0
      %v4570 = vadd.f32 %v4505, %v4569
      %4571 = vmatmul.f32.gmra.mxu0 %v4389
      %v4572 = vpop.f32.mrf.mxu0
      %v4573 = vadd.f32 %v4508, %v4572
      %4574 = vmatmul.f32.gmra.mxu0 %v4390
      %v4575 = vpop.f32.mrf.mxu0
      %v4576 = vadd.f32 %v4511, %v4575
      %4577 = vmatmul.f32.gmra.mxu0 %v4391
      %v4578 = vpop.f32.mrf.mxu0
      %v4579 = vadd.f32 %v4514, %v4578
      %4580 = vmatmul.f32.gmra.mxu0 %v4392
      %v4581 = vpop.f32.mrf.mxu0
      %v4582 = vadd.f32 %v4517, %v4581
      %4583 = vmatmul.f32.gmra.mxu0 %v4393
      %v4584 = vpop.f32.mrf.mxu0
      %v4585 = vadd.f32 %v4520, %v4584
      %4586 = vmatmul.f32.gmra.mxu0 %v4394
      %v4587 = vpop.f32.mrf.mxu0
      %v4588 = vadd.f32 %v4523, %v4587
      %4589 = vmatmul.f32.gmra.mxu0 %v4395
      %v4590 = vpop.f32.mrf.mxu0
      %v4591 = vadd.f32 %v4526, %v4590
      %4592 = vdwg.mxu0
      %4593 = vmatpush.msra.mxu0 %v4047
      %4594 = vmatpush.msra.mxu0 %v4046
      %4595 = vmatpush.msra.mxu0 %v4045
      %4596 = vmatpush.msra.mxu0 %v4044
      %4597 = vmatpush.msra.mxu0 %v4043
      %4598 = vmatpush.msra.mxu0 %v4042
      %4599 = vmatpush.msra.mxu0 %v4041
      %4600 = vmatpush.msra.mxu0 %v4040
      %4601 = vmatpush.msra.mxu0 %v4039
      %4602 = vmatpush.msra.mxu0 %v4038
      %4603 = vmatpush.msra.mxu0 %v4037
      %4604 = vmatpush.msra.mxu0 %v4036
      %4605 = vmatpush.msra.mxu0 %v4035
      %4606 = vmatpush.msra.mxu0 %v4034
      %4607 = vmatpush.msra.mxu0 %v4033
      %4608 = vmatpush.msra.mxu0 %v4032
      %4609 = vmatmul.f32.gmra.mxu0 %v4396
      %v4610 = vpop.f32.mrf.mxu0
      %v4611 = vadd.f32 %v4546, %v4610
      %4612 = vmatmul.f32.gmra.mxu0 %v4397
      %v4613 = vpop.f32.mrf.mxu0
      %v4614 = vadd.f32 %v4549, %v4613
      %4615 = vmatmul.f32.gmra.mxu0 %v4398
      %v4616 = vpop.f32.mrf.mxu0
      %v4617 = vadd.f32 %v4552, %v4616
      %4618 = vmatmul.f32.gmra.mxu0 %v4399
      %v4619 = vpop.f32.mrf.mxu0
      %v4620 = vadd.f32 %v4555, %v4619
      %4621 = vmatmul.f32.gmra.mxu0 %v4400
      %v4622 = vpop.f32.mrf.mxu0
      %v4623 = vadd.f32 %v4558, %v4622
      %4624 = vmatmul.f32.gmra.mxu0 %v4401
      %v4625 = vpop.f32.mrf.mxu0
      %v4626 = vadd.f32 %v4561, %v4625
      %4627 = vmatmul.f32.gmra.mxu0 %v4402
      %v4628 = vpop.f32.mrf.mxu0
      %v4629 = vadd.f32 %v4564, %v4628
      %4630 = vmatmul.f32.gmra.mxu0 %v4403
      %v4631 = vpop.f32.mrf.mxu0
      %v4632 = vadd.f32 %v4567, %v4631
      %4633 = vmatmul.f32.gmra.mxu0 %v4404
      %v4634 = vpop.f32.mrf.mxu0
      %v4635 = vadd.f32 %v4570, %v4634
      %4636 = vmatmul.f32.gmra.mxu0 %v4405
      %v4637 = vpop.f32.mrf.mxu0
      %v4638 = vadd.f32 %v4573, %v4637
      %4639 = vmatmul.f32.gmra.mxu0 %v4406
      %v4640 = vpop.f32.mrf.mxu0
      %v4641 = vadd.f32 %v4576, %v4640
      %4642 = vmatmul.f32.gmra.mxu0 %v4407
      %v4643 = vpop.f32.mrf.mxu0
      %v4644 = vadd.f32 %v4579, %v4643
      %4645 = vmatmul.f32.gmra.mxu0 %v4408
      %v4646 = vpop.f32.mrf.mxu0
      %v4647 = vadd.f32 %v4582, %v4646
      %4648 = vmatmul.f32.gmra.mxu0 %v4409
      %v4649 = vpop.f32.mrf.mxu0
      %v4650 = vadd.f32 %v4585, %v4649
      %4651 = vmatmul.f32.gmra.mxu0 %v4410
      %v4652 = vpop.f32.mrf.mxu0
      %v4653 = vadd.f32 %v4588, %v4652
      %4654 = vmatmul.f32.gmra.mxu0 %v4411
      %v4655 = vpop.f32.mrf.mxu0
      %v4656 = vadd.f32 %v4591, %v4655
      %4657 = vdwg.mxu0
      %4658 = vmatpush.msra.mxu0 %v4063
      %4659 = vmatpush.msra.mxu0 %v4062
      %4660 = vmatpush.msra.mxu0 %v4061
      %4661 = vmatpush.msra.mxu0 %v4060
      %4662 = vmatpush.msra.mxu0 %v4059
      %4663 = vmatpush.msra.mxu0 %v4058
      %4664 = vmatpush.msra.mxu0 %v4057
      %4665 = vmatpush.msra.mxu0 %v4056
      %4666 = vmatpush.msra.mxu0 %v4055
      %4667 = vmatpush.msra.mxu0 %v4054
      %4668 = vmatpush.msra.mxu0 %v4053
      %4669 = vmatpush.msra.mxu0 %v4052
      %4670 = vmatpush.msra.mxu0 %v4051
      %4671 = vmatpush.msra.mxu0 %v4050
      %4672 = vmatpush.msra.mxu0 %v4049
      %4673 = vmatpush.msra.mxu0 %v4048
      %4674 = vmatmul.f32.gmra.mxu0 %v4412
      %v4675 = vpop.f32.mrf.mxu0
      %v4676 = vadd.f32 %v4611, %v4675
      %4677 = vmatmul.f32.gmra.mxu0 %v4413
      %v4678 = vpop.f32.mrf.mxu0
      %v4679 = vadd.f32 %v4614, %v4678
      %4680 = vmatmul.f32.gmra.mxu0 %v4414
      %v4681 = vpop.f32.mrf.mxu0
      %v4682 = vadd.f32 %v4617, %v4681
      %4683 = vmatmul.f32.gmra.mxu0 %v4415
      %v4684 = vpop.f32.mrf.mxu0
      %v4685 = vadd.f32 %v4620, %v4684
      %4686 = vmatmul.f32.gmra.mxu0 %v4416
      %v4687 = vpop.f32.mrf.mxu0
      %v4688 = vadd.f32 %v4623, %v4687
      %4689 = vmatmul.f32.gmra.mxu0 %v4417
      %v4690 = vpop.f32.mrf.mxu0
      %v4691 = vadd.f32 %v4626, %v4690
      %4692 = vmatmul.f32.gmra.mxu0 %v4418
      %v4693 = vpop.f32.mrf.mxu0
      %v4694 = vadd.f32 %v4629, %v4693
      %4695 = vmatmul.f32.gmra.mxu0 %v4419
      %v4696 = vpop.f32.mrf.mxu0
      %v4697 = vadd.f32 %v4632, %v4696
      %4698 = vmatmul.f32.gmra.mxu0 %v4420
      %v4699 = vpop.f32.mrf.mxu0
      %v4700 = vadd.f32 %v4635, %v4699
      %4701 = vmatmul.f32.gmra.mxu0 %v4421
      %v4702 = vpop.f32.mrf.mxu0
      %v4703 = vadd.f32 %v4638, %v4702
      %4704 = vmatmul.f32.gmra.mxu0 %v4422
      %v4705 = vpop.f32.mrf.mxu0
      %v4706 = vadd.f32 %v4641, %v4705
      %4707 = vmatmul.f32.gmra.mxu0 %v4423
      %v4708 = vpop.f32.mrf.mxu0
      %v4709 = vadd.f32 %v4644, %v4708
      %4710 = vmatmul.f32.gmra.mxu0 %v4424
      %v4711 = vpop.f32.mrf.mxu0
      %v4712 = vadd.f32 %v4647, %v4711
      %4713 = vmatmul.f32.gmra.mxu0 %v4425
      %v4714 = vpop.f32.mrf.mxu0
      %v4715 = vadd.f32 %v4650, %v4714
      %4716 = vmatmul.f32.gmra.mxu0 %v4426
      %v4717 = vpop.f32.mrf.mxu0
      %v4718 = vadd.f32 %v4653, %v4717
      %4719 = vmatmul.f32.gmra.mxu0 %v4427
      %v4720 = vpop.f32.mrf.mxu0
      %v4721 = vadd.f32 %v4656, %v4720
      %4722 = vdwg.mxu0
      %4723 = vmatpush.msra.mxu0 0.0
      %4724 = vmatpush.msra.mxu0 0.0
      %4725 = vmatpush.msra.mxu0 0.0
      %4726 = vmatpush.msra.mxu0 0.0
      %4727 = vmatpush.msra.mxu0 0.0
      %4728 = vmatpush.msra.mxu0 0.0
      %4729 = vmatpush.msra.mxu0 0.0
      %4730 = vmatpush.msra.mxu0 0.0
      %4731 = vmatpush.msra.mxu0 %v4071
      %4732 = vmatpush.msra.mxu0 %v4070
      %4733 = vmatpush.msra.mxu0 %v4069
      %4734 = vmatpush.msra.mxu0 %v4068
      %4735 = vmatpush.msra.mxu0 %v4067
      %4736 = vmatpush.msra.mxu0 %v4066
      %4737 = vmatpush.msra.mxu0 %v4065
      %4738 = vmatpush.msra.mxu0 %v4064
      %4739 = vmatmul.f32.gmra.mxu0 %v4431
      %v4740 = vpop.f32.mrf.mxu0
      %v4741 = vadd.f32 %v4676, %v4740
      %4742 = vmatmul.f32.gmra.mxu0 %v4433
      %v4743 = vpop.f32.mrf.mxu0
      %v4744 = vadd.f32 %v4679, %v4743
      %4745 = vmatmul.f32.gmra.mxu0 %v4435
      %v4746 = vpop.f32.mrf.mxu0
      %v4747 = vadd.f32 %v4682, %v4746
      %4748 = vmatmul.f32.gmra.mxu0 %v4437
      %v4749 = vpop.f32.mrf.mxu0
      %v4750 = vadd.f32 %v4685, %v4749
      %4751 = vmatmul.f32.gmra.mxu0 %v4439
      %v4752 = vpop.f32.mrf.mxu0
      %v4753 = vadd.f32 %v4688, %v4752
      %4754 = vmatmul.f32.gmra.mxu0 %v4441
      %v4755 = vpop.f32.mrf.mxu0
      %v4756 = vadd.f32 %v4691, %v4755
      %4757 = vmatmul.f32.gmra.mxu0 %v4443
      %v4758 = vpop.f32.mrf.mxu0
      %v4759 = vadd.f32 %v4694, %v4758
      %4760 = vmatmul.f32.gmra.mxu0 %v4445
      %v4761 = vpop.f32.mrf.mxu0
      %v4762 = vadd.f32 %v4697, %v4761
      %4763 = vmatmul.f32.gmra.mxu0 %v4447
      %v4764 = vpop.f32.mrf.mxu0
      %v4765 = vadd.f32 %v4700, %v4764
      %4766 = vmatmul.f32.gmra.mxu0 %v4449
      %v4767 = vpop.f32.mrf.mxu0
      %v4768 = vadd.f32 %v4703, %v4767
      %4769 = vmatmul.f32.gmra.mxu0 %v4451
      %v4770 = vpop.f32.mrf.mxu0
      %v4771 = vadd.f32 %v4706, %v4770
      %4772 = vmatmul.f32.gmra.mxu0 %v4453
      %v4773 = vpop.f32.mrf.mxu0
      %v4774 = vadd.f32 %v4709, %v4773
      %4775 = vmatmul.f32.gmra.mxu0 %v4455
      %v4776 = vpop.f32.mrf.mxu0
      %v4777 = vadd.f32 %v4712, %v4776
      %4778 = vmatmul.f32.gmra.mxu0 %v4457
      %v4779 = vpop.f32.mrf.mxu0
      %v4780 = vadd.f32 %v4715, %v4779
      %4781 = vmatmul.f32.gmra.mxu0 %v4459
      %v4782 = vpop.f32.mrf.mxu0
      %v4783 = vadd.f32 %v4718, %v4782
      %4784 = vmatmul.f32.gmra.mxu0 %v4461
      %v4785 = vpop.f32.mrf.mxu0
      %v4786 = vadd.f32 %v4721, %v4785
      %4787 = vdwg.mxu0
      %v4788 = vmax.f32 %v4741, 0.0
      %v4789 = vmax.f32 %v4744, 0.0
      %v4790 = vmax.f32 %v4747, 0.0
      %v4791 = vmax.f32 %v4750, 0.0
      %v4792 = vmax.f32 %v4753, 0.0
      %v4793 = vmax.f32 %v4756, 0.0
      %v4794 = vmax.f32 %v4759, 0.0
      %v4795 = vmax.f32 %v4762, 0.0
      %v4796 = vmax.f32 %v4765, 0.0
      %v4797 = vmax.f32 %v4768, 0.0
      %v4798 = vmax.f32 %v4771, 0.0
      %v4799 = vmax.f32 %v4774, 0.0
      %v4800 = vmax.f32 %v4777, 0.0
      %v4801 = vmax.f32 %v4780, 0.0
      %v4802 = vmax.f32 %v4783, 0.0
      %v4803 = vmax.f32 %v4786, 0.0
      %4804 = vst [vmem:[%s332] sm:$0xff] %v4788
      %4805 = vst [vmem:[%s332 + $0x8] sm:$0xff] %v4789
      %4806 = vst [vmem:[%s332 + $0x10] sm:$0xff] %v4790
      %4807 = vst [vmem:[%s332 + $0x18] sm:$0xff] %v4791
      %4808 = vst [vmem:[%s332 + $0x20] sm:$0xff] %v4792
      %4809 = vst [vmem:[%s332 + $0x28] sm:$0xff] %v4793
      %4810 = vst [vmem:[%s332 + $0x30] sm:$0xff] %v4794
      %4811 = vst [vmem:[%s332 + $0x38] sm:$0xff] %v4795
      %4812 = vst [vmem:[%s332 + $0x40] sm:$0xff] %v4796
      %4813 = vst [vmem:[%s332 + $0x48] sm:$0xff] %v4797
      %4814 = vst [vmem:[%s332 + $0x50] sm:$0xff] %v4798
      %4815 = vst [vmem:[%s332 + $0x58] sm:$0xff] %v4799
      %4816 = vst [vmem:[%s332 + $0x60] sm:$0xff] %v4800
      %4817 = vst [vmem:[%s332 + $0x68] sm:$0xff] %v4801
      %4818 = vst [vmem:[%s332 + $0x70] sm:$0xff] %v4802
      %4819 = vst [vmem:[%s332 + $0x78] sm:$0xff] %v4803
      %p4820 = scmp.lt.s32.totalorder %s20, 1
      %s4821 = scalar_select %p4820, %s20, 1
      %s4822 = smul.addr %s4821, 16
      %s4823 = smul.addr %s4822, 8
      %s4824 = scalar_lea.vmem %s9, %s4823
      // Predicated region
      $region57: #{encoder_forward.1} parent=55 // pred_check
        %p4825 = pneg %p232
      $region58: #{encoder_forward.1} parent=55 // pred_check_branch
        %4827 = sbr.rel (%p4825) target = $region60
      $region59: #{encoder_forward.1} parent=55 // pred_region
        _
      $region60: #{encoder_forward.1} parent=55 // pred_fallthru
        _
    $region56: #{encoder_forward.1} parent=5 // pred_fallthru
      _
    %p4828 = scmp.le.s32.totalorder 2, %s15
    // Predicated region
    $region61: #{encoder_forward.1} parent=5 // pred_check
      %p4829 = pneg %p4828
    $region62: #{encoder_forward.1} parent=5 // pred_check_branch
      %4831 = sbr.rel (%p4829) target = $region64
    $region63: #{encoder_forward.1} parent=5 // pred_region
      %s4832 = ssub.s32 %s15, 2
      // Predicated region
      $region65: #{encoder_forward.1} parent=63 // pred_check
        %p4833 = pneg %p238
      $region66: #{encoder_forward.1} parent=63 // pred_check_branch
        %4835 = sbr.rel (%p4833) target = $region68
      $region67: #{encoder_forward.1} parent=63 // pred_region
        %p4836 = scmp.lt.s32.totalorder %s21, 1
        %s4837 = scalar_select %p4836, %s21, 1
        %s4838 = smul.addr %s4837, 16
        %s4839 = smul.addr %s4838, 8
        %s4840 = scalar_lea.vmem %s9, %s4839
      $region68: #{encoder_forward.1} parent=63 // pred_fallthru
        _
    $region64: #{encoder_forward.1} parent=5 // pred_fallthru
      _
  $region6: #{encoder_forward.1} parent=0 // loop_footer
    %s19 = sadd.s32 1, %s15
  $region7: #{encoder_forward.1} parent=0 // loop_footer_branch
    %14 = sbr.rel target = $region3
  $region8: #{encoder_forward.1} parent=0 // loop_exit
    _

</llo_original>
